<compile_context>
chip_gen: v5e
topology: v5e:2x2
jax: 0.10.0
libtpu: 0.0.40
codegen_flags: <defaults>
</compile_context>

<pallas_src>
import numpy as np
import jax
import jax.numpy as jnp
from jax.experimental import pallas as pl
from jax.experimental.pallas import tpu as pltpu

IN_W = 8        # HBM input lane width (6 real features, zero-padded)
HID_SLOT = 128  # per-head slot width in the fused head hidden layer
OUT_W = 128     # fused output lane width: [0:G]=mu, [G:2G]=logsig, [2G:3G]=logalpha


def _leaky_relu(x, slope=0.1):
    # Matches torch.nn.LeakyReLU(0.1)
    return jnp.where(x > 0, x, slope * x)


def _round_up(x, m):
    return ((x + m - 1) // m) * m


def _pick_bm(n):
    """Largest batch tile in {1024,512,256,128} that still yields >= 2 grid
    steps (keeps both v7x TensorCores busy); falls back to 128 for tiny N."""
    for bm in (1024, 512, 256, 128):
        if -(-n // bm) >= 2:
            return bm
    return 128


def make_photoz_kernel(n_trunk, num_gauss):
    """Kernel: n_trunk Linear+LeakyReLU layers (per-layer padded widths, bf16
    MXU / f32 accumulation) followed by the three heads fused into two
    lane-dense matmuls, masked clamp and masked log-softmax, one (bm, 128)
    lane-dense output store."""
    G = num_gauss

    def kernel(x_ref, *refs):
        out_ref = refs[-1]
        hw1_ref, hb1_ref, hw2_ref, hb2_ref = refs[2 * n_trunk: 2 * n_trunk + 4]

        x = x_ref[...].astype(jnp.bfloat16)

        # ---- trunk: input layer + hidden layers, all LeakyReLU(0.1) ----
        for l in range(n_trunk):
            w = refs[2 * l][...]           # bf16 (in_pad, out_pad)
            b = refs[2 * l + 1][...]       # f32  (1, out_pad)
            y = jnp.dot(x, w, preferred_element_type=jnp.float32) + b
            x = _leaky_relu(y).astype(jnp.bfloat16)

        # ---- fused heads ----
        h = _leaky_relu(
            jnp.dot(x, hw1_ref[...], preferred_element_type=jnp.float32)
            + hb1_ref[...]).astype(jnp.bfloat16)
        out = (jnp.dot(h, hw2_ref[...], preferred_element_type=jnp.float32)
               + hb2_ref[...])                               # (bm, 128) f32

        lane = jax.lax.broadcasted_iota(jnp.int32, out.shape, 1)
        is_sig = (lane >= G) & (lane < 2 * G)
        is_alpha = (lane >= 2 * G) & (lane < 3 * G)

        # clamp only the logsig lanes
        out = jnp.where(is_sig, jnp.clip(out, -5.0, 5.0), out)

        # log-softmax over the logalpha lanes only
        la = jnp.where(is_alpha, out, -1e30)
        m = jnp.max(la, axis=-1, keepdims=True)
        lse = m + jnp.log(jnp.sum(jnp.exp(la - m), axis=-1, keepdims=True))
        out = jnp.where(is_alpha, out - lse, out)

        out_ref[...] = out                                   # single lane-dense store

    return kernel


def init_photoz_params(key, nhidden, num_gauss):
    """Deterministic init mirroring the PyTorch module's layer shapes.
    Weights stored (in, out); biases stored (1, out)."""
    dims = [int(d) for d in np.linspace(20, 200, nhidden)]

    def linear(key, fan_in, fan_out):
        kw, kb = jax.random.split(key)
        bound = 1.0 / np.sqrt(fan_in)
        W = jax.random.uniform(kw, (fan_in, fan_out), jnp.float32, -bound, bound)
        b = jax.random.uniform(kb, (1, fan_out), jnp.float32, -bound, bound)
        return W, b

    trunk = []
    key, sub = jax.random.split(key)
    trunk.append(linear(sub, 6, 20))                      # inputlay
    for k in range(nhidden - 1):                          # hiddenlay
        key, sub = jax.random.split(key)
        trunk.append(linear(sub, dims[k], dims[k + 1]))

    heads = []
    for _ in range(3):                                    # means/logstds/logalphas
        key, s1 = jax.random.split(key)
        key, s2 = jax.random.split(key)
        heads.append([linear(s1, 200, 100), linear(s2, 100, num_gauss)])

    return trunk, heads


def pack_photoz_params(trunk, heads, num_gauss, weight_dtype=jnp.bfloat16):
    """Host-side packing, done ONCE: zero-pad each trunk layer to its own
    lane-aligned width (input to 8, everything else to multiples of 128), fuse
    the heads' first layers into one (tw, 384) matrix and their second layers
    into one (384, 128) matrix with head h's outputs in lanes [h*G, (h+1)*G).
    Weights -> bf16, biases -> f32. Returns a flat tuple of device arrays:
    (w0, b0, ..., w_{n-1}, b_{n-1}, hw1, hb1, hw2, hb2)."""
    assert 3 * num_gauss <= OUT_W, "num_gauss too large for fused 128-lane output"
    G = num_gauss
    n_trunk = len(trunk)

    packed = []
    in_pad = IN_W
    for (W, b) in trunk:
        W = np.asarray(W, np.float32)
        b = np.asarray(b, np.float32).reshape(-1)
        out_pad = _round_up(W.shape[1], 128)
        Wp = np.zeros((in_pad, out_pad), np.float32)
        Wp[:W.shape[0], :W.shape[1]] = W
        bp = np.zeros((1, out_pad), np.float32)
        bp[0, :b.shape[0]] = b
        packed.append((Wp, bp))
        in_pad = out_pad
    tw = in_pad   # padded trunk output width (256 for the standard config)

    w1 = np.zeros((tw, 3 * HID_SLOT), np.float32)
    b1 = np.zeros((1, 3 * HID_SLOT), np.float32)
    w2 = np.zeros((3 * HID_SLOT, OUT_W), np.float32)
    b2 = np.zeros((1, OUT_W), np.float32)
    for h, ((W1, B1), (W2, B2)) in enumerate(heads):
        W1 = np.asarray(W1, np.float32); B1 = np.asarray(B1, np.float32).reshape(-1)
        W2 = np.asarray(W2, np.float32); B2 = np.asarray(B2, np.float32).reshape(-1)
        assert W1.shape[0] <= tw and W1.shape[1] <= HID_SLOT
        assert W2.shape[0] <= HID_SLOT and W2.shape[1] == G
        w1[:W1.shape[0], h * HID_SLOT:h * HID_SLOT + W1.shape[1]] = W1
        b1[0, h * HID_SLOT:h * HID_SLOT + B1.shape[0]] = B1
        w2[h * HID_SLOT:h * HID_SLOT + W2.shape[0], h * G:(h + 1) * G] = W2
        b2[0, h * G:h * G + B2.shape[0]] = B2

    dev_w = lambda a: jnp.asarray(a, weight_dtype)
    dev_b = lambda a: jnp.asarray(a, jnp.float32)
    params = []
    for Wp, bp in packed:
        params += [dev_w(Wp), dev_b(bp)]
    params += [dev_w(w1), dev_b(b1), dev_w(w2), dev_b(b2)]
    return tuple(params)


def photoz_forward(inp, params, num_gauss, bm=None):
    """Runs the Pallas kernel. `inp` is [N, 6] float32 (any N); `params` is the
    packed tuple from pack_photoz_params (pack once, reuse across calls)."""
    N, F = inp.shape
    G = num_gauss
    n_trunk = (len(params) - 4) // 2
    if bm is None:
        bm = _pick_bm(N)
    n_pad = _round_up(N, bm)

    # narrow HBM input: only 8 lanes/row
    x8 = jnp.zeros((n_pad, IN_W), jnp.float32).at[:N, :F].set(
        inp.astype(jnp.float32))

    kernel = make_photoz_kernel(n_trunk, num_gauss)

    in_specs = [pl.BlockSpec((bm, IN_W), lambda i: (i, 0))]
    for p in params:  # weights/biases resident, constant index map
        in_specs.append(pl.BlockSpec(p.shape, lambda i: (0, 0)))

    mac_per_row = 0
    for l in range(n_trunk):
        w = params[2 * l]
        mac_per_row += w.shape[0] * w.shape[1]
    hw1 = params[2 * n_trunk]
    hw2 = params[2 * n_trunk + 2]
    mac_per_row += hw1.shape[0] * hw1.shape[1] + hw2.shape[0] * hw2.shape[1]
    param_bytes = sum(int(np.prod(p.shape)) * p.dtype.itemsize for p in params)
    bytes_accessed = 4 * x8.size + 4 * n_pad * OUT_W + param_bytes

    out = pl.pallas_call(
        kernel,
        out_shape=jax.ShapeDtypeStruct((n_pad, OUT_W), jnp.float32),
        grid=(n_pad // bm,),
        in_specs=in_specs,
        out_specs=pl.BlockSpec((bm, OUT_W), lambda i: (i, 0)),
        compiler_params=pltpu.CompilerParams(
            dimension_semantics=("parallel",),
            vmem_limit_bytes=32 * 1024 * 1024),
        cost_estimate=pl.CostEstimate(
            flops=2 * n_pad * mac_per_row,
            transcendentals=n_pad * (OUT_W + 1),
            bytes_accessed=bytes_accessed),
    )(x8, *params)

    mu = out[:N, 0:G]
    logsig = out[:N, G:2 * G]
    logalpha = out[:N, 2 * G:3 * G]
    return logalpha, mu, logsig


def make_photoz_forward(params, num_gauss):
    """Jit a forward closure over the cached packed weights (pack once,
    no host-side repacking or retracing per call)."""
    return jax.jit(lambda x: photoz_forward(x, params, num_gauss))


def photoz_forward_ref(inp, trunk, heads):
    """Pure-JAX f32 reference for verification."""
    x = inp
    for W, b in trunk:
        x = _leaky_relu(x @ W + b)
    outs = []
    for (W1, b1), (W2, b2) in heads:
        h = _leaky_relu(x @ W1 + b1)
        outs.append(h @ W2 + b2)
    mu, logsig, logalpha = outs
    logsig = jnp.clip(logsig, -5.0, 5.0)
    logalpha = logalpha - jax.scipy.special.logsumexp(
        logalpha, axis=1, keepdims=True)
    return logalpha, mu, logsig


if __name__ == "__main__":
    nhidden = 5     # trunk dims: 20, 65, 110, 155, 200
    num_gauss = 8
    batch = 500     # not a multiple of the tile -> exercises the pad/slice path

    key = jax.random.PRNGKey(0)
    key, kparams, kinp = jax.random.split(key, 3)
    trunk, heads = init_photoz_params(kparams, nhidden, num_gauss)
    inp = jax.random.normal(kinp, (batch, 6), jnp.float32)

    # pack once (host-side), cache padded bf16 device weights, jit the wrapper
    params = pack_photoz_params(trunk, heads, num_gauss)
    fwd = make_photoz_forward(params, num_gauss)

    logalpha, mu, logsig = fwd(inp)
    jax.block_until_ready((logalpha, mu, logsig))

    # verify against pure-JAX f32 reference (bf16 MXU operands -> relaxed tol)
    la_ref, mu_ref, ls_ref = photoz_forward_ref(inp, trunk, heads)
    np.testing.assert_allclose(np.asarray(mu), np.asarray(mu_ref),
                               rtol=5e-2, atol=5e-2)
    np.testing.assert_allclose(np.asarray(logsig), np.asarray(ls_ref),
                               rtol=5e-2, atol=5e-2)
    np.testing.assert_allclose(np.asarray(logalpha), np.asarray(la_ref),
                               rtol=5e-2, atol=5e-2)
    # mixture weights must sum to 1 (log-softmax done in f32 in-kernel)
    np.testing.assert_allclose(np.exp(np.asarray(logalpha)).sum(axis=1),
                               np.ones(batch), rtol=1e-3, atol=1e-3)

    print("KERNEL_OK")
</pallas_src>

<mosaic_0001>
module attributes {stable_mosaic.version = 11 : i64} {
  func.func @kernel(%arg0: i32, %arg1: memref<256x8xf32, #tpu.memory_space<vmem>>, %arg2: memref<8x128xbf16, #tpu.memory_space<vmem>>, %arg3: memref<1x128xf32, #tpu.memory_space<vmem>>, %arg4: memref<128x128xbf16, #tpu.memory_space<vmem>>, %arg5: memref<1x128xf32, #tpu.memory_space<vmem>>, %arg6: memref<128x128xbf16, #tpu.memory_space<vmem>>, %arg7: memref<1x128xf32, #tpu.memory_space<vmem>>, %arg8: memref<128x256xbf16, #tpu.memory_space<vmem>>, %arg9: memref<1x256xf32, #tpu.memory_space<vmem>>, %arg10: memref<256x256xbf16, #tpu.memory_space<vmem>>, %arg11: memref<1x256xf32, #tpu.memory_space<vmem>>, %arg12: memref<256x384xbf16, #tpu.memory_space<vmem>>, %arg13: memref<1x384xf32, #tpu.memory_space<vmem>>, %arg14: memref<384x128xbf16, #tpu.memory_space<vmem>>, %arg15: memref<1x128xf32, #tpu.memory_space<vmem>>, %arg16: memref<256x128xf32, #tpu.memory_space<vmem>>) attributes {dimension_semantics = [#tpu.dimension_semantics<parallel>], iteration_bounds = array<i64: 2>, scalar_prefetch = 0 : i64, scratch_operands = 0 : i64, tpu.core_type = #tpu.core_type<tc>, window_params = [{transform_indices = @transform_0, window_bounds = array<i64: 256, 8>}, {pipeline_mode = #tpu.pipeline_mode<synchronous>, transform_indices = @transform_1, window_bounds = array<i64: 8, 128>}, {pipeline_mode = #tpu.pipeline_mode<synchronous>, transform_indices = @transform_2, window_bounds = array<i64: 1, 128>}, {pipeline_mode = #tpu.pipeline_mode<synchronous>, transform_indices = @transform_3, window_bounds = array<i64: 128, 128>}, {pipeline_mode = #tpu.pipeline_mode<synchronous>, transform_indices = @transform_4, window_bounds = array<i64: 1, 128>}, {pipeline_mode = #tpu.pipeline_mode<synchronous>, transform_indices = @transform_5, window_bounds = array<i64: 128, 128>}, {pipeline_mode = #tpu.pipeline_mode<synchronous>, transform_indices = @transform_6, window_bounds = array<i64: 1, 128>}, {pipeline_mode = #tpu.pipeline_mode<synchronous>, transform_indices = @transform_7, window_bounds = array<i64: 128, 256>}, {pipeline_mode = #tpu.pipeline_mode<synchronous>, transform_indices = @transform_8, window_bounds = array<i64: 1, 256>}, {pipeline_mode = #tpu.pipeline_mode<synchronous>, transform_indices = @transform_9, window_bounds = array<i64: 256, 256>}, {pipeline_mode = #tpu.pipeline_mode<synchronous>, transform_indices = @transform_10, window_bounds = array<i64: 1, 256>}, {pipeline_mode = #tpu.pipeline_mode<synchronous>, transform_indices = @transform_11, window_bounds = array<i64: 256, 384>}, {pipeline_mode = #tpu.pipeline_mode<synchronous>, transform_indices = @transform_12, window_bounds = array<i64: 1, 384>}, {pipeline_mode = #tpu.pipeline_mode<synchronous>, transform_indices = @transform_13, window_bounds = array<i64: 384, 128>}, {pipeline_mode = #tpu.pipeline_mode<synchronous>, transform_indices = @transform_14, window_bounds = array<i64: 1, 128>}, {transform_indices = @transform_15, window_bounds = array<i64: 256, 128>}]} {
    %c0 = arith.constant 0 : index
    %c0_0 = arith.constant 0 : index
    %0 = vector.load %arg1[%c0, %c0_0] : memref<256x8xf32, #tpu.memory_space<vmem>>, vector<256x8xf32>
    %1 = arith.truncf %0 : vector<256x8xf32> to vector<256x8xbf16>
    %c0_1 = arith.constant 0 : index
    %c0_2 = arith.constant 0 : index
    %2 = vector.load %arg2[%c0_1, %c0_2] : memref<8x128xbf16, #tpu.memory_space<vmem>>, vector<8x128xbf16>
    %c0_3 = arith.constant 0 : index
    %c0_4 = arith.constant 0 : index
    %3 = vector.load %arg3[%c0_3, %c0_4] : memref<1x128xf32, #tpu.memory_space<vmem>>, vector<1x128xf32>
    %cst = arith.constant dense<0.000000e+00> : vector<256x128xf32>
    %4 = tpu.matmul %1, %2, %cst {dimension_numbers = #tpu.dot_dimension_numbers<[1], [0], [0], [1], [0, 0, 1, 1], [], []>} : vector<256x8xbf16>, vector<8x128xbf16>, vector<256x128xf32> -> vector<256x128xf32>
    %5 = vector.broadcast %3 : vector<1x128xf32> to vector<256x128xf32>
    %6 = arith.addf %4, %5 : vector<256x128xf32>
    %cst_5 = arith.constant 0.000000e+00 : f32
    %7 = vector.broadcast %cst_5 : f32 to vector<256x128xf32>
    %8 = arith.cmpf ogt, %6, %7 : vector<256x128xf32>
    %cst_6 = arith.constant 1.000000e-01 : f32
    %9 = vector.broadcast %cst_6 : f32 to vector<256x128xf32>
    %10 = arith.mulf %9, %6 : vector<256x128xf32>
    %11 = arith.select %8, %6, %10 : vector<256x128xi1>, vector<256x128xf32>
    %12 = arith.truncf %11 : vector<256x128xf32> to vector<256x128xbf16>
    %c0_7 = arith.constant 0 : index
    %c0_8 = arith.constant 0 : index
    %13 = vector.load %arg4[%c0_7, %c0_8] : memref<128x128xbf16, #tpu.memory_space<vmem>>, vector<128x128xbf16>
    %c0_9 = arith.constant 0 : index
    %c0_10 = arith.constant 0 : index
    %14 = vector.load %arg5[%c0_9, %c0_10] : memref<1x128xf32, #tpu.memory_space<vmem>>, vector<1x128xf32>
    %cst_11 = arith.constant dense<0.000000e+00> : vector<256x128xf32>
    %15 = tpu.matmul %12, %13, %cst_11 {dimension_numbers = #tpu.dot_dimension_numbers<[1], [0], [0], [1], [0, 0, 1, 1], [], []>} : vector<256x128xbf16>, vector<128x128xbf16>, vector<256x128xf32> -> vector<256x128xf32>
    %16 = vector.broadcast %14 : vector<1x128xf32> to vector<256x128xf32>
    %17 = arith.addf %15, %16 : vector<256x128xf32>
    %cst_12 = arith.constant 0.000000e+00 : f32
    %18 = vector.broadcast %cst_12 : f32 to vector<256x128xf32>
    %19 = arith.cmpf ogt, %17, %18 : vector<256x128xf32>
    %cst_13 = arith.constant 1.000000e-01 : f32
    %20 = vector.broadcast %cst_13 : f32 to vector<256x128xf32>
    %21 = arith.mulf %20, %17 : vector<256x128xf32>
    %22 = arith.select %19, %17, %21 : vector<256x128xi1>, vector<256x128xf32>
    %23 = arith.truncf %22 : vector<256x128xf32> to vector<256x128xbf16>
    %c0_14 = arith.constant 0 : index
    %c0_15 = arith.constant 0 : index
    %24 = vector.load %arg6[%c0_14, %c0_15] : memref<128x128xbf16, #tpu.memory_space<vmem>>, vector<128x128xbf16>
    %c0_16 = arith.constant 0 : index
    %c0_17 = arith.constant 0 : index
    %25 = vector.load %arg7[%c0_16, %c0_17] : memref<1x128xf32, #tpu.memory_space<vmem>>, vector<1x128xf32>
    %cst_18 = arith.constant dense<0.000000e+00> : vector<256x128xf32>
    %26 = tpu.matmul %23, %24, %cst_18 {dimension_numbers = #tpu.dot_dimension_numbers<[1], [0], [0], [1], [0, 0, 1, 1], [], []>} : vector<256x128xbf16>, vector<128x128xbf16>, vector<256x128xf32> -> vector<256x128xf32>
    %27 = vector.broadcast %25 : vector<1x128xf32> to vector<256x128xf32>
    %28 = arith.addf %26, %27 : vector<256x128xf32>
    %cst_19 = arith.constant 0.000000e+00 : f32
    %29 = vector.broadcast %cst_19 : f32 to vector<256x128xf32>
    %30 = arith.cmpf ogt, %28, %29 : vector<256x128xf32>
    %cst_20 = arith.constant 1.000000e-01 : f32
    %31 = vector.broadcast %cst_20 : f32 to vector<256x128xf32>
    %32 = arith.mulf %31, %28 : vector<256x128xf32>
    %33 = arith.select %30, %28, %32 : vector<256x128xi1>, vector<256x128xf32>
    %34 = arith.truncf %33 : vector<256x128xf32> to vector<256x128xbf16>
    %c0_21 = arith.constant 0 : index
    %c0_22 = arith.constant 0 : index
    %35 = vector.load %arg8[%c0_21, %c0_22] : memref<128x256xbf16, #tpu.memory_space<vmem>>, vector<128x256xbf16>
    %c0_23 = arith.constant 0 : index
    %c0_24 = arith.constant 0 : index
    %36 = vector.load %arg9[%c0_23, %c0_24] : memref<1x256xf32, #tpu.memory_space<vmem>>, vector<1x256xf32>
    %cst_25 = arith.constant dense<0.000000e+00> : vector<256x256xf32>
    %37 = tpu.matmul %34, %35, %cst_25 {dimension_numbers = #tpu.dot_dimension_numbers<[1], [0], [0], [1], [0, 0, 1, 1], [], []>} : vector<256x128xbf16>, vector<128x256xbf16>, vector<256x256xf32> -> vector<256x256xf32>
    %38 = vector.broadcast %36 : vector<1x256xf32> to vector<256x256xf32>
    %39 = arith.addf %37, %38 : vector<256x256xf32>
    %cst_26 = arith.constant 0.000000e+00 : f32
    %40 = vector.broadcast %cst_26 : f32 to vector<256x256xf32>
    %41 = arith.cmpf ogt, %39, %40 : vector<256x256xf32>
    %cst_27 = arith.constant 1.000000e-01 : f32
    %42 = vector.broadcast %cst_27 : f32 to vector<256x256xf32>
    %43 = arith.mulf %42, %39 : vector<256x256xf32>
    %44 = arith.select %41, %39, %43 : vector<256x256xi1>, vector<256x256xf32>
    %45 = arith.truncf %44 : vector<256x256xf32> to vector<256x256xbf16>
    %c0_28 = arith.constant 0 : index
    %c0_29 = arith.constant 0 : index
    %46 = vector.load %arg10[%c0_28, %c0_29] : memref<256x256xbf16, #tpu.memory_space<vmem>>, vector<256x256xbf16>
    %c0_30 = arith.constant 0 : index
    %c0_31 = arith.constant 0 : index
    %47 = vector.load %arg11[%c0_30, %c0_31] : memref<1x256xf32, #tpu.memory_space<vmem>>, vector<1x256xf32>
    %cst_32 = arith.constant dense<0.000000e+00> : vector<256x256xf32>
    %48 = tpu.matmul %45, %46, %cst_32 {dimension_numbers = #tpu.dot_dimension_numbers<[1], [0], [0], [1], [0, 0, 1, 1], [], []>} : vector<256x256xbf16>, vector<256x256xbf16>, vector<256x256xf32> -> vector<256x256xf32>
    %49 = vector.broadcast %47 : vector<1x256xf32> to vector<256x256xf32>
    %50 = arith.addf %48, %49 : vector<256x256xf32>
    %cst_33 = arith.constant 0.000000e+00 : f32
    %51 = vector.broadcast %cst_33 : f32 to vector<256x256xf32>
    %52 = arith.cmpf ogt, %50, %51 : vector<256x256xf32>
    %cst_34 = arith.constant 1.000000e-01 : f32
    %53 = vector.broadcast %cst_34 : f32 to vector<256x256xf32>
    %54 = arith.mulf %53, %50 : vector<256x256xf32>
    %55 = arith.select %52, %50, %54 : vector<256x256xi1>, vector<256x256xf32>
    %56 = arith.truncf %55 : vector<256x256xf32> to vector<256x256xbf16>
    %c0_35 = arith.constant 0 : index
    %c0_36 = arith.constant 0 : index
    %57 = vector.load %arg12[%c0_35, %c0_36] : memref<256x384xbf16, #tpu.memory_space<vmem>>, vector<256x384xbf16>
    %cst_37 = arith.constant dense<0.000000e+00> : vector<256x384xf32>
    %58 = tpu.matmul %56, %57, %cst_37 {dimension_numbers = #tpu.dot_dimension_numbers<[1], [0], [0], [1], [0, 0, 1, 1], [], []>} : vector<256x256xbf16>, vector<256x384xbf16>, vector<256x384xf32> -> vector<256x384xf32>
    %c0_38 = arith.constant 0 : index
    %c0_39 = arith.constant 0 : index
    %59 = vector.load %arg13[%c0_38, %c0_39] : memref<1x384xf32, #tpu.memory_space<vmem>>, vector<1x384xf32>
    %60 = vector.broadcast %59 : vector<1x384xf32> to vector<256x384xf32>
    %61 = arith.addf %58, %60 : vector<256x384xf32>
    %cst_40 = arith.constant 0.000000e+00 : f32
    %62 = vector.broadcast %cst_40 : f32 to vector<256x384xf32>
    %63 = arith.cmpf ogt, %61, %62 : vector<256x384xf32>
    %cst_41 = arith.constant 1.000000e-01 : f32
    %64 = vector.broadcast %cst_41 : f32 to vector<256x384xf32>
    %65 = arith.mulf %64, %61 : vector<256x384xf32>
    %66 = arith.select %63, %61, %65 : vector<256x384xi1>, vector<256x384xf32>
    %67 = arith.truncf %66 : vector<256x384xf32> to vector<256x384xbf16>
    %c0_42 = arith.constant 0 : index
    %c0_43 = arith.constant 0 : index
    %68 = vector.load %arg14[%c0_42, %c0_43] : memref<384x128xbf16, #tpu.memory_space<vmem>>, vector<384x128xbf16>
    %cst_44 = arith.constant dense<0.000000e+00> : vector<256x128xf32>
    %69 = tpu.matmul %67, %68, %cst_44 {dimension_numbers = #tpu.dot_dimension_numbers<[1], [0], [0], [1], [0, 0, 1, 1], [], []>} : vector<256x384xbf16>, vector<384x128xbf16>, vector<256x128xf32> -> vector<256x128xf32>
    %c0_45 = arith.constant 0 : index
    %c0_46 = arith.constant 0 : index
    %70 = vector.load %arg15[%c0_45, %c0_46] : memref<1x128xf32, #tpu.memory_space<vmem>>, vector<1x128xf32>
    %71 = vector.broadcast %70 : vector<1x128xf32> to vector<256x128xf32>
    %72 = arith.addf %69, %71 : vector<256x128xf32>
    %73 = tpu.iota {dimensions = array<i32: 1>} : vector<256x128xi32>
    %c8_i32 = arith.constant 8 : i32
    %74 = vector.broadcast %c8_i32 : i32 to vector<256x128xi32>
    %75 = arith.cmpi sge, %73, %74 : vector<256x128xi32>
    %c16_i32 = arith.constant 16 : i32
    %76 = vector.broadcast %c16_i32 : i32 to vector<256x128xi32>
    %77 = arith.cmpi slt, %73, %76 : vector<256x128xi32>
    %78 = arith.andi %75, %77 : vector<256x128xi1>
    %c16_i32_47 = arith.constant 16 : i32
    %79 = vector.broadcast %c16_i32_47 : i32 to vector<256x128xi32>
    %80 = arith.cmpi sge, %73, %79 : vector<256x128xi32>
    %c24_i32 = arith.constant 24 : i32
    %81 = vector.broadcast %c24_i32 : i32 to vector<256x128xi32>
    %82 = arith.cmpi slt, %73, %81 : vector<256x128xi32>
    %83 = arith.andi %80, %82 : vector<256x128xi1>
    %cst_48 = arith.constant -5.000000e+00 : f32
    %cst_49 = arith.constant 5.000000e+00 : f32
    %84 = vector.broadcast %cst_48 : f32 to vector<256x128xf32>
    %85 = arith.maximumf %84, %72 : vector<256x128xf32>
    %86 = vector.broadcast %cst_49 : f32 to vector<256x128xf32>
    %87 = arith.minimumf %86, %85 : vector<256x128xf32>
    %88 = arith.select %78, %87, %72 : vector<256x128xi1>, vector<256x128xf32>
    %cst_50 = arith.constant -1.000000e+30 : f32
    %89 = vector.broadcast %cst_50 : f32 to vector<256x128xf32>
    %90 = arith.select %83, %88, %89 : vector<256x128xi1>, vector<256x128xf32>
    %cst_51 = arith.constant dense<0xFF800000> : vector<256xf32>
    %91 = vector.multi_reduction <maximumf>, %90, %cst_51 [1] : vector<256x128xf32> to vector<256xf32>
    %92 = vector.shape_cast %91 : vector<256xf32> to vector<256x1xf32>
    %93 = vector.broadcast %92 : vector<256x1xf32> to vector<256x128xf32>
    %94 = arith.subf %90, %93 : vector<256x128xf32>
    %95 = math.exp %94 : vector<256x128xf32>
    %cst_52 = arith.constant dense<0.000000e+00> : vector<256xf32>
    %96 = vector.multi_reduction <add>, %95, %cst_52 [1] : vector<256x128xf32> to vector<256xf32>
    %97 = vector.shape_cast %96 : vector<256xf32> to vector<256x1xf32>
    %98 = math.log %97 : vector<256x1xf32>
    %99 = arith.addf %92, %98 : vector<256x1xf32>
    %100 = vector.broadcast %99 : vector<256x1xf32> to vector<256x128xf32>
    %101 = arith.subf %88, %100 : vector<256x128xf32>
    %102 = arith.select %83, %101, %88 : vector<256x128xi1>, vector<256x128xf32>
    %c0_53 = arith.constant 0 : index
    %c0_54 = arith.constant 0 : index
    %103 = vector.load %arg16[%c0_53, %c0_54] : memref<256x128xf32, #tpu.memory_space<vmem>>, vector<256x128xf32>
    tpu.vector_store %arg16[%c0_53, %c0_54], %102 {strides = array<i32>} : memref<256x128xf32, #tpu.memory_space<vmem>>, vector<256x128xf32>,
    return
  }
  func.func @transform_0(%arg0: i32) -> (i32, i32) {
    %c0_i32 = arith.constant 0 : i32
    %c0_i32_0 = arith.constant 0 : i32
    return %arg0, %c0_i32 : i32, i32
  }
  func.func @transform_1(%arg0: i32) -> (i32, i32) {
    %c0_i32 = arith.constant 0 : i32
    %c0_i32_0 = arith.constant 0 : i32
    %c0_i32_1 = arith.constant 0 : i32
    return %c0_i32, %c0_i32_0 : i32, i32
  }
  func.func @transform_2(%arg0: i32) -> (i32, i32) {
    %c0_i32 = arith.constant 0 : i32
    %c0_i32_0 = arith.constant 0 : i32
    %c0_i32_1 = arith.constant 0 : i32
    return %c0_i32, %c0_i32_0 : i32, i32
  }
  func.func @transform_3(%arg0: i32) -> (i32, i32) {
    %c0_i32 = arith.constant 0 : i32
    %c0_i32_0 = arith.constant 0 : i32
    %c0_i32_1 = arith.constant 0 : i32
    return %c0_i32, %c0_i32_0 : i32, i32
  }
  func.func @transform_4(%arg0: i32) -> (i32, i32) {
    %c0_i32 = arith.constant 0 : i32
    %c0_i32_0 = arith.constant 0 : i32
    %c0_i32_1 = arith.constant 0 : i32
    return %c0_i32, %c0_i32_0 : i32, i32
  }
  func.func @transform_5(%arg0: i32) -> (i32, i32) {
    %c0_i32 = arith.constant 0 : i32
    %c0_i32_0 = arith.constant 0 : i32
    %c0_i32_1 = arith.constant 0 : i32
    return %c0_i32, %c0_i32_0 : i32, i32
  }
  func.func @transform_6(%arg0: i32) -> (i32, i32) {
    %c0_i32 = arith.constant 0 : i32
    %c0_i32_0 = arith.constant 0 : i32
    %c0_i32_1 = arith.constant 0 : i32
    return %c0_i32, %c0_i32_0 : i32, i32
  }
  func.func @transform_7(%arg0: i32) -> (i32, i32) {
    %c0_i32 = arith.constant 0 : i32
    %c0_i32_0 = arith.constant 0 : i32
    %c0_i32_1 = arith.constant 0 : i32
    return %c0_i32, %c0_i32_0 : i32, i32
  }
  func.func @transform_8(%arg0: i32) -> (i32, i32) {
    %c0_i32 = arith.constant 0 : i32
    %c0_i32_0 = arith.constant 0 : i32
    %c0_i32_1 = arith.constant 0 : i32
    return %c0_i32, %c0_i32_0 : i32, i32
  }
  func.func @transform_9(%arg0: i32) -> (i32, i32) {
    %c0_i32 = arith.constant 0 : i32
    %c0_i32_0 = arith.constant 0 : i32
    %c0_i32_1 = arith.constant 0 : i32
    return %c0_i32, %c0_i32_0 : i32, i32
  }
  func.func @transform_10(%arg0: i32) -> (i32, i32) {
    %c0_i32 = arith.constant 0 : i32
    %c0_i32_0 = arith.constant 0 : i32
    %c0_i32_1 = arith.constant 0 : i32
    return %c0_i32, %c0_i32_0 : i32, i32
  }
  func.func @transform_11(%arg0: i32) -> (i32, i32) {
    %c0_i32 = arith.constant 0 : i32
    %c0_i32_0 = arith.constant 0 : i32
    %c0_i32_1 = arith.constant 0 : i32
    return %c0_i32, %c0_i32_0 : i32, i32
  }
  func.func @transform_12(%arg0: i32) -> (i32, i32) {
    %c0_i32 = arith.constant 0 : i32
    %c0_i32_0 = arith.constant 0 : i32
    %c0_i32_1 = arith.constant 0 : i32
    return %c0_i32, %c0_i32_0 : i32, i32
  }
  func.func @transform_13(%arg0: i32) -> (i32, i32) {
    %c0_i32 = arith.constant 0 : i32
    %c0_i32_0 = arith.constant 0 : i32
    %c0_i32_1 = arith.constant 0 : i32
    return %c0_i32, %c0_i32_0 : i32, i32
  }
  func.func @transform_14(%arg0: i32) -> (i32, i32) {
    %c0_i32 = arith.constant 0 : i32
    %c0_i32_0 = arith.constant 0 : i32
    %c0_i32_1 = arith.constant 0 : i32
    return %c0_i32, %c0_i32_0 : i32, i32
  }
  func.func @transform_15(%arg0: i32) -> (i32, i32) {
    %c0_i32 = arith.constant 0 : i32
    %c0_i32_0 = arith.constant 0 : i32
    return %arg0, %c0_i32 : i32, i32
  }
}

</mosaic_0001>

<llo_original>
// kernel: _lambda_.1
$region0: #{_lambda_.1}
  #allocation0 [shape = 'u32[]', space=smem, size = 0x4, offset = 0x4, fixed_abs, tag = 'smem constant byte address 0x4 - core index']
  #allocation1 [shape = 'u32[72,128]{1,0:T(1,128)}', space=vmem, size = 0x9000, scoped, tag = 'internal scratch']
  %s0 = inlined_call_operand.vmem [shape: f32[512,8], index: 0, kind: input, shape index: {}]
  %s1 = inlined_call_operand.vmem [shape: bf16[8,128], index: 1, kind: input, shape index: {}]
  %s2 = inlined_call_operand.vmem [shape: f32[1,128], index: 2, kind: input, shape index: {}]
  %s3 = inlined_call_operand.vmem [shape: bf16[128,128], index: 3, kind: input, shape index: {}]
  %s4 = inlined_call_operand.vmem [shape: f32[1,128], index: 4, kind: input, shape index: {}]
  %s5 = inlined_call_operand.vmem [shape: bf16[128,128], index: 5, kind: input, shape index: {}]
  %s6 = inlined_call_operand.vmem [shape: f32[1,128], index: 6, kind: input, shape index: {}]
  %s7 = inlined_call_operand.vmem [shape: bf16[128,256], index: 7, kind: input, shape index: {}]
  %s8 = inlined_call_operand.vmem [shape: f32[1,256], index: 8, kind: input, shape index: {}]
  %s9 = inlined_call_operand.vmem [shape: bf16[256,256], index: 9, kind: input, shape index: {}]
  %s10 = inlined_call_operand.vmem [shape: f32[1,256], index: 10, kind: input, shape index: {}]
  %s11 = inlined_call_operand.vmem [shape: bf16[256,384], index: 11, kind: input, shape index: {}]
  %s12 = inlined_call_operand.vmem [shape: f32[1,384], index: 12, kind: input, shape index: {}]
  %s13 = inlined_call_operand.vmem [shape: bf16[384,128], index: 13, kind: input, shape index: {}]
  %s14 = inlined_call_operand.vmem [shape: f32[1,128], index: 14, kind: input, shape index: {}]
  %s15 = inlined_call_operand.vmem [shape: f32[512,128], index: 15, kind: output, shape index: {}]
  %s16 = sld [smem:[#allocation0]]
  $region93: #{_lambda_.1} parent=0
    _
  %s18 = ssub.s32 1, %s16
  %s19 = scalar_select 0, %s18, %s16
  loop: start=0, step=1, limit=4
  $region2: #{_lambda_.1} parent=0 // loop_pre_header
    _
  $region3: #{_lambda_.1} parent=0 // loop_header
    %s21 = sphi 0, %s25
    %p22 = scmp.ge.s32.totalorder %s21, 4
    %s31 = sphi 0, %s33
    %s34 = sphi 0, %s31
    %s35 = sphi 0, %s34
    %s51 = sphi 0, %s35
    %s55 = sphi 0, %s55
    %s57 = sphi 0, %s55
    %s58 = sphi 0, %s57
    %s72 = sphi 0, %s58
    %s76 = sphi 0, %s76
    %s78 = sphi 0, %s76
    %s79 = sphi 0, %s78
    %s93 = sphi 0, %s79
    %s97 = sphi 0, %s97
    %s99 = sphi 0, %s97
    %s100 = sphi 0, %s99
    %s114 = sphi 0, %s100
    %s118 = sphi 0, %s118
    %s120 = sphi 0, %s118
    %s121 = sphi 0, %s120
    %s135 = sphi 0, %s121
    %s139 = sphi 0, %s139
    %s141 = sphi 0, %s139
    %s142 = sphi 0, %s141
    %s156 = sphi 0, %s142
    %s160 = sphi 0, %s160
    %s162 = sphi 0, %s160
    %s163 = sphi 0, %s162
    %s177 = sphi 0, %s163
    %s181 = sphi 0, %s181
    %s183 = sphi 0, %s181
    %s184 = sphi 0, %s183
    %s198 = sphi 0, %s184
    %s202 = sphi 0, %s202
    %s204 = sphi 0, %s202
    %s205 = sphi 0, %s204
    %s219 = sphi 0, %s205
    %s223 = sphi 0, %s223
    %s225 = sphi 0, %s223
    %s226 = sphi 0, %s225
    %s240 = sphi 0, %s226
    %s244 = sphi 0, %s244
    %s246 = sphi 0, %s244
    %s247 = sphi 0, %s246
    %s261 = sphi 0, %s247
    %s265 = sphi 0, %s265
    %s267 = sphi 0, %s265
    %s268 = sphi 0, %s267
    %s282 = sphi 0, %s268
    %s286 = sphi 0, %s286
    %s288 = sphi 0, %s286
    %s289 = sphi 0, %s288
    %s303 = sphi 0, %s289
    %s307 = sphi 0, %s307
    %s309 = sphi 0, %s307
    %s310 = sphi 0, %s309
    %s324 = sphi 0, %s310
    %s328 = sphi 0, %s328
    %s330 = sphi 0, %s328
    %s331 = sphi 0, %s330
    %s345 = sphi 0, %s331
    %s351 = sphi 0, %s353
    %s354 = sphi 0, %s351
    %s355 = sphi 0, %s354
    %s371 = sphi 0, %s355
  $region4: #{_lambda_.1} parent=0 // loop_header_branch
    %24 = sbr.rel (%p22) target = $region8
  $region5: #{_lambda_.1} parent=0 // loop_body
    %s26 = ssub.s32 %s21, 1
    %s27 = ssub.s32 %s21, 2
    %s28 = sadd.s32 %s21, 1
    %s29 = ssub.s32 %s21, %s28
    %p30 = scmp.eq.s32.totalorder %s29, 0
    %s32 = sadd.s32 %s31, 1
    %s33 = scalar_select %p30, %s31, %s32
    %p36 = pneg %p30
    %p37 = scmp.eq.s32.totalorder %s21, 1
    %p38 = por %p36, %p37
    %p39 = scmp.ne.s32.totalorder %s31, %s34
    %p40 = scmp.eq.s32.totalorder %s21, 0
    %p41 = por %p39, %p40
    %p42 = scmp.ne.s32.totalorder %s31, %s34
    %p43 = scmp.eq.s32.totalorder %s26, 1
    %p44 = por %p42, %p43
    %p45 = scmp.ne.s32.totalorder %s34, %s35
    %p46 = scmp.eq.s32.totalorder %s26, 0
    %p47 = por %p45, %p46
    %p48 = scmp.ne.s32.totalorder %s34, %s35
    %p49 = scmp.eq.s32.totalorder %s27, 1
    %p50 = por %p48, %p49
    %p52 = scmp.ne.s32.totalorder %s35, %s51
    %p53 = scmp.eq.s32.totalorder %s27, 0
    %p54 = por %p52, %p53
    %s56 = sadd.s32 %s55, 1
    %p59 = scmp.eq.s32.totalorder %s21, 1
    %p60 = scmp.ne.s32.totalorder %s55, %s57
    %p61 = scmp.eq.s32.totalorder %s21, 0
    %p62 = por %p60, %p61
    %p63 = scmp.ne.s32.totalorder %s55, %s57
    %p64 = scmp.eq.s32.totalorder %s26, 1
    %p65 = por %p63, %p64
    %p66 = scmp.ne.s32.totalorder %s57, %s58
    %p67 = scmp.eq.s32.totalorder %s26, 0
    %p68 = por %p66, %p67
    %p69 = scmp.ne.s32.totalorder %s57, %s58
    %p70 = scmp.eq.s32.totalorder %s27, 1
    %p71 = por %p69, %p70
    %p73 = scmp.ne.s32.totalorder %s58, %s72
    %p74 = scmp.eq.s32.totalorder %s27, 0
    %p75 = por %p73, %p74
    %s77 = sadd.s32 %s76, 1
    %p80 = scmp.eq.s32.totalorder %s21, 1
    %p81 = scmp.ne.s32.totalorder %s76, %s78
    %p82 = scmp.eq.s32.totalorder %s21, 0
    %p83 = por %p81, %p82
    %p84 = scmp.ne.s32.totalorder %s76, %s78
    %p85 = scmp.eq.s32.totalorder %s26, 1
    %p86 = por %p84, %p85
    %p87 = scmp.ne.s32.totalorder %s78, %s79
    %p88 = scmp.eq.s32.totalorder %s26, 0
    %p89 = por %p87, %p88
    %p90 = scmp.ne.s32.totalorder %s78, %s79
    %p91 = scmp.eq.s32.totalorder %s27, 1
    %p92 = por %p90, %p91
    %p94 = scmp.ne.s32.totalorder %s79, %s93
    %p95 = scmp.eq.s32.totalorder %s27, 0
    %p96 = por %p94, %p95
    %s98 = sadd.s32 %s97, 1
    %p101 = scmp.eq.s32.totalorder %s21, 1
    %p102 = scmp.ne.s32.totalorder %s97, %s99
    %p103 = scmp.eq.s32.totalorder %s21, 0
    %p104 = por %p102, %p103
    %p105 = scmp.ne.s32.totalorder %s97, %s99
    %p106 = scmp.eq.s32.totalorder %s26, 1
    %p107 = por %p105, %p106
    %p108 = scmp.ne.s32.totalorder %s99, %s100
    %p109 = scmp.eq.s32.totalorder %s26, 0
    %p110 = por %p108, %p109
    %p111 = scmp.ne.s32.totalorder %s99, %s100
    %p112 = scmp.eq.s32.totalorder %s27, 1
    %p113 = por %p111, %p112
    %p115 = scmp.ne.s32.totalorder %s100, %s114
    %p116 = scmp.eq.s32.totalorder %s27, 0
    %p117 = por %p115, %p116
    %s119 = sadd.s32 %s118, 1
    %p122 = scmp.eq.s32.totalorder %s21, 1
    %p123 = scmp.ne.s32.totalorder %s118, %s120
    %p124 = scmp.eq.s32.totalorder %s21, 0
    %p125 = por %p123, %p124
    %p126 = scmp.ne.s32.totalorder %s118, %s120
    %p127 = scmp.eq.s32.totalorder %s26, 1
    %p128 = por %p126, %p127
    %p129 = scmp.ne.s32.totalorder %s120, %s121
    %p130 = scmp.eq.s32.totalorder %s26, 0
    %p131 = por %p129, %p130
    %p132 = scmp.ne.s32.totalorder %s120, %s121
    %p133 = scmp.eq.s32.totalorder %s27, 1
    %p134 = por %p132, %p133
    %p136 = scmp.ne.s32.totalorder %s121, %s135
    %p137 = scmp.eq.s32.totalorder %s27, 0
    %p138 = por %p136, %p137
    %s140 = sadd.s32 %s139, 1
    %p143 = scmp.eq.s32.totalorder %s21, 1
    %p144 = scmp.ne.s32.totalorder %s139, %s141
    %p145 = scmp.eq.s32.totalorder %s21, 0
    %p146 = por %p144, %p145
    %p147 = scmp.ne.s32.totalorder %s139, %s141
    %p148 = scmp.eq.s32.totalorder %s26, 1
    %p149 = por %p147, %p148
    %p150 = scmp.ne.s32.totalorder %s141, %s142
    %p151 = scmp.eq.s32.totalorder %s26, 0
    %p152 = por %p150, %p151
    %p153 = scmp.ne.s32.totalorder %s141, %s142
    %p154 = scmp.eq.s32.totalorder %s27, 1
    %p155 = por %p153, %p154
    %p157 = scmp.ne.s32.totalorder %s142, %s156
    %p158 = scmp.eq.s32.totalorder %s27, 0
    %p159 = por %p157, %p158
    %s161 = sadd.s32 %s160, 1
    %p164 = scmp.eq.s32.totalorder %s21, 1
    %p165 = scmp.ne.s32.totalorder %s160, %s162
    %p166 = scmp.eq.s32.totalorder %s21, 0
    %p167 = por %p165, %p166
    %p168 = scmp.ne.s32.totalorder %s160, %s162
    %p169 = scmp.eq.s32.totalorder %s26, 1
    %p170 = por %p168, %p169
    %p171 = scmp.ne.s32.totalorder %s162, %s163
    %p172 = scmp.eq.s32.totalorder %s26, 0
    %p173 = por %p171, %p172
    %p174 = scmp.ne.s32.totalorder %s162, %s163
    %p175 = scmp.eq.s32.totalorder %s27, 1
    %p176 = por %p174, %p175
    %p178 = scmp.ne.s32.totalorder %s163, %s177
    %p179 = scmp.eq.s32.totalorder %s27, 0
    %p180 = por %p178, %p179
    %s182 = sadd.s32 %s181, 1
    %p185 = scmp.eq.s32.totalorder %s21, 1
    %p186 = scmp.ne.s32.totalorder %s181, %s183
    %p187 = scmp.eq.s32.totalorder %s21, 0
    %p188 = por %p186, %p187
    %p189 = scmp.ne.s32.totalorder %s181, %s183
    %p190 = scmp.eq.s32.totalorder %s26, 1
    %p191 = por %p189, %p190
    %p192 = scmp.ne.s32.totalorder %s183, %s184
    %p193 = scmp.eq.s32.totalorder %s26, 0
    %p194 = por %p192, %p193
    %p195 = scmp.ne.s32.totalorder %s183, %s184
    %p196 = scmp.eq.s32.totalorder %s27, 1
    %p197 = por %p195, %p196
    %p199 = scmp.ne.s32.totalorder %s184, %s198
    %p200 = scmp.eq.s32.totalorder %s27, 0
    %p201 = por %p199, %p200
    %s203 = sadd.s32 %s202, 1
    %p206 = scmp.eq.s32.totalorder %s21, 1
    %p207 = scmp.ne.s32.totalorder %s202, %s204
    %p208 = scmp.eq.s32.totalorder %s21, 0
    %p209 = por %p207, %p208
    %p210 = scmp.ne.s32.totalorder %s202, %s204
    %p211 = scmp.eq.s32.totalorder %s26, 1
    %p212 = por %p210, %p211
    %p213 = scmp.ne.s32.totalorder %s204, %s205
    %p214 = scmp.eq.s32.totalorder %s26, 0
    %p215 = por %p213, %p214
    %p216 = scmp.ne.s32.totalorder %s204, %s205
    %p217 = scmp.eq.s32.totalorder %s27, 1
    %p218 = por %p216, %p217
    %p220 = scmp.ne.s32.totalorder %s205, %s219
    %p221 = scmp.eq.s32.totalorder %s27, 0
    %p222 = por %p220, %p221
    %s224 = sadd.s32 %s223, 1
    %p227 = scmp.eq.s32.totalorder %s21, 1
    %p228 = scmp.ne.s32.totalorder %s223, %s225
    %p229 = scmp.eq.s32.totalorder %s21, 0
    %p230 = por %p228, %p229
    %p231 = scmp.ne.s32.totalorder %s223, %s225
    %p232 = scmp.eq.s32.totalorder %s26, 1
    %p233 = por %p231, %p232
    %p234 = scmp.ne.s32.totalorder %s225, %s226
    %p235 = scmp.eq.s32.totalorder %s26, 0
    %p236 = por %p234, %p235
    %p237 = scmp.ne.s32.totalorder %s225, %s226
    %p238 = scmp.eq.s32.totalorder %s27, 1
    %p239 = por %p237, %p238
    %p241 = scmp.ne.s32.totalorder %s226, %s240
    %p242 = scmp.eq.s32.totalorder %s27, 0
    %p243 = por %p241, %p242
    %s245 = sadd.s32 %s244, 1
    %p248 = scmp.eq.s32.totalorder %s21, 1
    %p249 = scmp.ne.s32.totalorder %s244, %s246
    %p250 = scmp.eq.s32.totalorder %s21, 0
    %p251 = por %p249, %p250
    %p252 = scmp.ne.s32.totalorder %s244, %s246
    %p253 = scmp.eq.s32.totalorder %s26, 1
    %p254 = por %p252, %p253
    %p255 = scmp.ne.s32.totalorder %s246, %s247
    %p256 = scmp.eq.s32.totalorder %s26, 0
    %p257 = por %p255, %p256
    %p258 = scmp.ne.s32.totalorder %s246, %s247
    %p259 = scmp.eq.s32.totalorder %s27, 1
    %p260 = por %p258, %p259
    %p262 = scmp.ne.s32.totalorder %s247, %s261
    %p263 = scmp.eq.s32.totalorder %s27, 0
    %p264 = por %p262, %p263
    %s266 = sadd.s32 %s265, 1
    %p269 = scmp.eq.s32.totalorder %s21, 1
    %p270 = scmp.ne.s32.totalorder %s265, %s267
    %p271 = scmp.eq.s32.totalorder %s21, 0
    %p272 = por %p270, %p271
    %p273 = scmp.ne.s32.totalorder %s265, %s267
    %p274 = scmp.eq.s32.totalorder %s26, 1
    %p275 = por %p273, %p274
    %p276 = scmp.ne.s32.totalorder %s267, %s268
    %p277 = scmp.eq.s32.totalorder %s26, 0
    %p278 = por %p276, %p277
    %p279 = scmp.ne.s32.totalorder %s267, %s268
    %p280 = scmp.eq.s32.totalorder %s27, 1
    %p281 = por %p279, %p280
    %p283 = scmp.ne.s32.totalorder %s268, %s282
    %p284 = scmp.eq.s32.totalorder %s27, 0
    %p285 = por %p283, %p284
    %s287 = sadd.s32 %s286, 1
    %p290 = scmp.eq.s32.totalorder %s21, 1
    %p291 = scmp.ne.s32.totalorder %s286, %s288
    %p292 = scmp.eq.s32.totalorder %s21, 0
    %p293 = por %p291, %p292
    %p294 = scmp.ne.s32.totalorder %s286, %s288
    %p295 = scmp.eq.s32.totalorder %s26, 1
    %p296 = por %p294, %p295
    %p297 = scmp.ne.s32.totalorder %s288, %s289
    %p298 = scmp.eq.s32.totalorder %s26, 0
    %p299 = por %p297, %p298
    %p300 = scmp.ne.s32.totalorder %s288, %s289
    %p301 = scmp.eq.s32.totalorder %s27, 1
    %p302 = por %p300, %p301
    %p304 = scmp.ne.s32.totalorder %s289, %s303
    %p305 = scmp.eq.s32.totalorder %s27, 0
    %p306 = por %p304, %p305
    %s308 = sadd.s32 %s307, 1
    %p311 = scmp.eq.s32.totalorder %s21, 1
    %p312 = scmp.ne.s32.totalorder %s307, %s309
    %p313 = scmp.eq.s32.totalorder %s21, 0
    %p314 = por %p312, %p313
    %p315 = scmp.ne.s32.totalorder %s307, %s309
    %p316 = scmp.eq.s32.totalorder %s26, 1
    %p317 = por %p315, %p316
    %p318 = scmp.ne.s32.totalorder %s309, %s310
    %p319 = scmp.eq.s32.totalorder %s26, 0
    %p320 = por %p318, %p319
    %p321 = scmp.ne.s32.totalorder %s309, %s310
    %p322 = scmp.eq.s32.totalorder %s27, 1
    %p323 = por %p321, %p322
    %p325 = scmp.ne.s32.totalorder %s310, %s324
    %p326 = scmp.eq.s32.totalorder %s27, 0
    %p327 = por %p325, %p326
    %s329 = sadd.s32 %s328, 1
    %p332 = scmp.eq.s32.totalorder %s21, 1
    %p333 = scmp.ne.s32.totalorder %s328, %s330
    %p334 = scmp.eq.s32.totalorder %s21, 0
    %p335 = por %p333, %p334
    %p336 = scmp.ne.s32.totalorder %s328, %s330
    %p337 = scmp.eq.s32.totalorder %s26, 1
    %p338 = por %p336, %p337
    %p339 = scmp.ne.s32.totalorder %s330, %s331
    %p340 = scmp.eq.s32.totalorder %s26, 0
    %p341 = por %p339, %p340
    %p342 = scmp.ne.s32.totalorder %s330, %s331
    %p343 = scmp.eq.s32.totalorder %s27, 1
    %p344 = por %p342, %p343
    %p346 = scmp.ne.s32.totalorder %s331, %s345
    %p347 = scmp.eq.s32.totalorder %s27, 0
    %p348 = por %p346, %p347
    %s349 = ssub.s32 %s21, %s28
    %p350 = scmp.eq.s32.totalorder %s349, 0
    %s352 = sadd.s32 %s351, 1
    %s353 = scalar_select %p350, %s351, %s352
    %p356 = pneg %p350
    %p357 = scmp.eq.s32.totalorder %s21, 1
    %p358 = por %p356, %p357
    %p359 = scmp.ne.s32.totalorder %s351, %s354
    %p360 = scmp.eq.s32.totalorder %s21, 0
    %p361 = por %p359, %p360
    %p362 = scmp.ne.s32.totalorder %s351, %s354
    %p363 = scmp.eq.s32.totalorder %s26, 1
    %p364 = por %p362, %p363
    %p365 = scmp.ne.s32.totalorder %s354, %s355
    %p366 = scmp.eq.s32.totalorder %s26, 0
    %p367 = por %p365, %p366
    %p368 = scmp.ne.s32.totalorder %s354, %s355
    %p369 = scmp.eq.s32.totalorder %s27, 1
    %p370 = por %p368, %p369
    %p372 = scmp.ne.s32.totalorder %s355, %s371
    %p373 = scmp.eq.s32.totalorder %s27, 0
    %p374 = por %p372, %p373
    %p375 = scmp.le.s32.totalorder 1, %s21
    %p376 = scmp.lt.s32.totalorder %s21, 3
    %p377 = pnand %p375, %p376
    %p378 = pneg %p377
    // Predicated region
    $region9: #{_lambda_.1} parent=5 // pred_check
      _
    $region10: #{_lambda_.1} parent=5 // pred_check_branch
      %380 = sbr.rel (%p377) target = $region12
    $region11: #{_lambda_.1} parent=5 // pred_region
      %s381 = ssub.s32 %s21, 1
      // Predicated region
      $region13: #{_lambda_.1} parent=11 // pred_check
        %p382 = pneg %p68
      $region14: #{_lambda_.1} parent=11 // pred_check_branch
        %384 = sbr.rel (%p382) target = $region16
      $region15: #{_lambda_.1} parent=11 // pred_region
        _
      $region16: #{_lambda_.1} parent=11 // pred_fallthru
        _
      // Predicated region
      $region17: #{_lambda_.1} parent=11 // pred_check
        %p385 = pneg %p89
      $region18: #{_lambda_.1} parent=11 // pred_check_branch
        %387 = sbr.rel (%p385) target = $region20
      $region19: #{_lambda_.1} parent=11 // pred_region
        _
      $region20: #{_lambda_.1} parent=11 // pred_fallthru
        _
      // Predicated region
      $region21: #{_lambda_.1} parent=11 // pred_check
        %p388 = pneg %p110
      $region22: #{_lambda_.1} parent=11 // pred_check_branch
        %390 = sbr.rel (%p388) target = $region24
      $region23: #{_lambda_.1} parent=11 // pred_region
        _
      $region24: #{_lambda_.1} parent=11 // pred_fallthru
        _
      // Predicated region
      $region25: #{_lambda_.1} parent=11 // pred_check
        %p391 = pneg %p131
      $region26: #{_lambda_.1} parent=11 // pred_check_branch
        %393 = sbr.rel (%p391) target = $region28
      $region27: #{_lambda_.1} parent=11 // pred_region
        _
      $region28: #{_lambda_.1} parent=11 // pred_fallthru
        _
      // Predicated region
      $region29: #{_lambda_.1} parent=11 // pred_check
        %p394 = pneg %p152
      $region30: #{_lambda_.1} parent=11 // pred_check_branch
        %396 = sbr.rel (%p394) target = $region32
      $region31: #{_lambda_.1} parent=11 // pred_region
        _
      $region32: #{_lambda_.1} parent=11 // pred_fallthru
        _
      // Predicated region
      $region33: #{_lambda_.1} parent=11 // pred_check
        %p397 = pneg %p173
      $region34: #{_lambda_.1} parent=11 // pred_check_branch
        %399 = sbr.rel (%p397) target = $region36
      $region35: #{_lambda_.1} parent=11 // pred_region
        _
      $region36: #{_lambda_.1} parent=11 // pred_fallthru
        _
      // Predicated region
      $region37: #{_lambda_.1} parent=11 // pred_check
        %p400 = pneg %p194
      $region38: #{_lambda_.1} parent=11 // pred_check_branch
        %402 = sbr.rel (%p400) target = $region40
      $region39: #{_lambda_.1} parent=11 // pred_region
        _
      $region40: #{_lambda_.1} parent=11 // pred_fallthru
        _
      // Predicated region
      $region41: #{_lambda_.1} parent=11 // pred_check
        %p403 = pneg %p215
      $region42: #{_lambda_.1} parent=11 // pred_check_branch
        %405 = sbr.rel (%p403) target = $region44
      $region43: #{_lambda_.1} parent=11 // pred_region
        _
      $region44: #{_lambda_.1} parent=11 // pred_fallthru
        _
      // Predicated region
      $region45: #{_lambda_.1} parent=11 // pred_check
        %p406 = pneg %p236
      $region46: #{_lambda_.1} parent=11 // pred_check_branch
        %408 = sbr.rel (%p406) target = $region48
      $region47: #{_lambda_.1} parent=11 // pred_region
        _
      $region48: #{_lambda_.1} parent=11 // pred_fallthru
        _
      // Predicated region
      $region49: #{_lambda_.1} parent=11 // pred_check
        %p409 = pneg %p257
      $region50: #{_lambda_.1} parent=11 // pred_check_branch
        %411 = sbr.rel (%p409) target = $region52
      $region51: #{_lambda_.1} parent=11 // pred_region
        _
      $region52: #{_lambda_.1} parent=11 // pred_fallthru
        _
      // Predicated region
      $region53: #{_lambda_.1} parent=11 // pred_check
        %p412 = pneg %p278
      $region54: #{_lambda_.1} parent=11 // pred_check_branch
        %414 = sbr.rel (%p412) target = $region56
      $region55: #{_lambda_.1} parent=11 // pred_region
        _
      $region56: #{_lambda_.1} parent=11 // pred_fallthru
        _
      // Predicated region
      $region57: #{_lambda_.1} parent=11 // pred_check
        %p415 = pneg %p299
      $region58: #{_lambda_.1} parent=11 // pred_check_branch
        %417 = sbr.rel (%p415) target = $region60
      $region59: #{_lambda_.1} parent=11 // pred_region
        _
      $region60: #{_lambda_.1} parent=11 // pred_fallthru
        _
      // Predicated region
      $region61: #{_lambda_.1} parent=11 // pred_check
        %p418 = pneg %p320
      $region62: #{_lambda_.1} parent=11 // pred_check_branch
        %420 = sbr.rel (%p418) target = $region64
      $region63: #{_lambda_.1} parent=11 // pred_region
        _
      $region64: #{_lambda_.1} parent=11 // pred_fallthru
        _
      // Predicated region
      $region65: #{_lambda_.1} parent=11 // pred_check
        %p421 = pneg %p341
      $region66: #{_lambda_.1} parent=11 // pred_check_branch
        %423 = sbr.rel (%p421) target = $region68
      $region67: #{_lambda_.1} parent=11 // pred_region
        _
      $region68: #{_lambda_.1} parent=11 // pred_fallthru
        _
    $region12: #{_lambda_.1} parent=5 // pred_fallthru
      _
    %p424 = scmp.lt.s32.totalorder %s21, 2
    // Predicated region
    $region69: #{_lambda_.1} parent=5 // pred_check
      %p425 = pneg %p424
    $region70: #{_lambda_.1} parent=5 // pred_check_branch
      %427 = sbr.rel (%p425) target = $region72
    $region71: #{_lambda_.1} parent=5 // pred_region
      // Predicated region
      $region73: #{_lambda_.1} parent=71 // pred_check
        %p428 = pneg %p41
      $region74: #{_lambda_.1} parent=71 // pred_check_branch
        %430 = sbr.rel (%p428) target = $region76
      $region75: #{_lambda_.1} parent=71 // pred_region
        %s431 = smul.u32 32, %s21
        %p432 = scmp.lt.s32.totalorder %s431, 63
        %s433 = scalar_select %p432, %s431, 63
        %s434 = smul.addr %s433, 8
        %s435 = scalar_lea.vmem %s0, %s434
        %s436 = smul.u32 32, %s21
      $region76: #{_lambda_.1} parent=71 // pred_fallthru
        _
    $region72: #{_lambda_.1} parent=5 // pred_fallthru
      _
    %p437 = scmp.le.s32.totalorder 1, %s21
    %p438 = scmp.lt.s32.totalorder %s21, 3
    %p439 = pnand %p437, %p438
    %p440 = pneg %p439
    // Predicated region
    $region77: #{_lambda_.1} parent=5 // pred_check
      _
    $region78: #{_lambda_.1} parent=5 // pred_check_branch
      %442 = sbr.rel (%p439) target = $region80
    $region79: #{_lambda_.1} parent=5 // pred_region
      %s443 = ssub.s32 %s21, 1
      %s444 = smul.u32 32, %s26
      %p445 = scmp.lt.s32.totalorder %s444, 63
      %s446 = scalar_select %p445, %s444, 63
      %s447 = smul.addr %s446, 8
      %s448 = scalar_lea.vmem %s0, %s447
      %p449 = pneg %p47
      %p450 = pneg %p44
      %p451 = pneg %p68
      %p452 = pneg %p65
      %p453 = pneg %p89
      %p454 = pneg %p86
      %p455 = pneg %p110
      %p456 = pneg %p107
      %p457 = pneg %p131
      %p458 = pneg %p128
      %p459 = pneg %p152
      %p460 = pneg %p149
      %p461 = pneg %p173
      %p462 = pneg %p170
      %p463 = pneg %p194
      %p464 = pneg %p191
      %p465 = pneg %p215
      %p466 = pneg %p212
      %p467 = pneg %p236
      %p468 = pneg %p233
      %p469 = pneg %p257
      %p470 = pneg %p254
      %p471 = pneg %p278
      %p472 = pneg %p275
      %p473 = pneg %p299
      %p474 = pneg %p296
      %p475 = pneg %p320
      %p476 = pneg %p317
      %p477 = pneg %p341
      %p478 = pneg %p338
      %p479 = pneg %p367
      %p480 = pneg %p364
      %s481 = smul.u32 32, %s26
      %p482 = scmp.lt.s32.totalorder %s481, 63
      %s483 = scalar_select %p482, %s481, 63
      %s484 = smul.addr %s483, 8
      %s485 = scalar_lea.vmem %s15, %s484
      %s486 = smul.u32 32, %s26
      %p487 = scmp.lt.s32.totalorder %s486, 63
      %s488 = scalar_select %p487, %s486, 63
      %s489 = smul.addr %s488, 8
      %s490 = scalar_lea.vmem %s0, %s489
      %s491 = smul.u32 32, %s26
      %s492 = smul.u32 32, %s26
      %p493 = scmp.lt.s32.totalorder %s492, 63
      %s494 = scalar_select %p493, %s492, 63
      %s495 = smul.addr %s494, 8
      %s496 = scalar_lea.vmem %s15, %s495
      %s497 = smul.u32 32, %s26
      %v499 = vld [vmem:[%s490] sm:$0xff]
      %v500 = vld [vmem:[%s490 + $0x8] sm:$0xff]
      %v501 = vld [vmem:[%s490 + $0x10] sm:$0xff]
      %v502 = vld [vmem:[%s490 + $0x18] sm:$0xff]
      %v503 = vld [vmem:[%s490 + $0x20] sm:$0xff]
      %v504 = vld [vmem:[%s490 + $0x28] sm:$0xff]
      %v505 = vld [vmem:[%s490 + $0x30] sm:$0xff]
      %v506 = vld [vmem:[%s490 + $0x38] sm:$0xff]
      %v507 = vld [vmem:[%s490 + $0x40] sm:$0xff]
      %v508 = vld [vmem:[%s490 + $0x48] sm:$0xff]
      %v509 = vld [vmem:[%s490 + $0x50] sm:$0xff]
      %v510 = vld [vmem:[%s490 + $0x58] sm:$0xff]
      %v511 = vld [vmem:[%s490 + $0x60] sm:$0xff]
      %v512 = vld [vmem:[%s490 + $0x68] sm:$0xff]
      %v513 = vld [vmem:[%s490 + $0x70] sm:$0xff]
      %v514 = vld [vmem:[%s490 + $0x78] sm:$0xff]
      %v515 = vld [vmem:[%s490 + $0x80] sm:$0xff]
      %v516 = vld [vmem:[%s490 + $0x88] sm:$0xff]
      %v517 = vld [vmem:[%s490 + $0x90] sm:$0xff]
      %v518 = vld [vmem:[%s490 + $0x98] sm:$0xff]
      %v519 = vld [vmem:[%s490 + $0xa0] sm:$0xff]
      %v520 = vld [vmem:[%s490 + $0xa8] sm:$0xff]
      %v521 = vld [vmem:[%s490 + $0xb0] sm:$0xff]
      %v522 = vld [vmem:[%s490 + $0xb8] sm:$0xff]
      %v523 = vld [vmem:[%s490 + $0xc0] sm:$0xff]
      %v524 = vld [vmem:[%s490 + $0xc8] sm:$0xff]
      %v525 = vld [vmem:[%s490 + $0xd0] sm:$0xff]
      %v526 = vld [vmem:[%s490 + $0xd8] sm:$0xff]
      %v527 = vld [vmem:[%s490 + $0xe0] sm:$0xff]
      %v528 = vld [vmem:[%s490 + $0xe8] sm:$0xff]
      %v529 = vld [vmem:[%s490 + $0xf0] sm:$0xff]
      %v530 = vld [vmem:[%s490 + $0xf8] sm:$0xff]
      %v531 = vpack.c.bf16 %v500, %v499
      %v532 = vpack.c.bf16 %v502, %v501
      %v533 = vpack.c.bf16 %v504, %v503
      %v534 = vpack.c.bf16 %v506, %v505
      %v535 = vpack.c.bf16 %v508, %v507
      %v536 = vpack.c.bf16 %v510, %v509
      %v537 = vpack.c.bf16 %v512, %v511
      %v538 = vpack.c.bf16 %v514, %v513
      %v539 = vpack.c.bf16 %v516, %v515
      %v540 = vpack.c.bf16 %v518, %v517
      %v541 = vpack.c.bf16 %v520, %v519
      %v542 = vpack.c.bf16 %v522, %v521
      %v543 = vpack.c.bf16 %v524, %v523
      %v544 = vpack.c.bf16 %v526, %v525
      %v545 = vpack.c.bf16 %v528, %v527
      %v546 = vpack.c.bf16 %v530, %v529
      %v547 = vld [vmem:[%s1] sm:$0xf]
      %v548 = vld [vmem:[%s2] sm:$0x1]
      %v550 = vperm.slane %v548, 0
      %vm552 = vcmask 64512
      %v554 = vsel %vm552, %v531, 0
      %v557 = vsel %vm552, %v532, 0
      %v560 = vsel %vm552, %v533, 0
      %v563 = vsel %vm552, %v534, 0
      %v566 = vsel %vm552, %v535, 0
      %v569 = vsel %vm552, %v536, 0
      %v572 = vsel %vm552, %v537, 0
      %v575 = vsel %vm552, %v538, 0
      %v578 = vsel %vm552, %v539, 0
      %v581 = vsel %vm552, %v540, 0
      %v584 = vsel %vm552, %v541, 0
      %v587 = vsel %vm552, %v542, 0
      %v590 = vsel %vm552, %v543, 0
      %v593 = vsel %vm552, %v544, 0
      %v596 = vsel %vm552, %v545, 0
      %v599 = vsel %vm552, %v546, 0
      %vm601 = vcmask 1043456
      %v603 = vsel %vm601, %v547, 0
      %605 = vmatpush.bf16.msra.mxu0 0
      %606 = vmatpush.bf16.msra.mxu0 0
      %607 = vmatpush.bf16.msra.mxu0 0
      %608 = vmatpush.bf16.msra.mxu0 0
      %609 = vmatpush.bf16.msra.mxu0 0
      %610 = vmatpush.bf16.msra.mxu0 0
      %611 = vmatpush.bf16.msra.mxu0 0
      %612 = vmatpush.bf16.msra.mxu0 %v603
      %613 = vmatmul.bf16.gmra.mxu0 %v554
      %v614 = vpop.f32.mrf.mxu0
      %v615 = vadd.f32 %v550, %v614
      %v616 = vpop.f32.mrf.mxu0
      %v617 = vadd.f32 %v550, %v616
      %618 = vmatmul.bf16.gmra.mxu0 %v557
      %v619 = vpop.f32.mrf.mxu0
      %v620 = vadd.f32 %v550, %v619
      %v621 = vpop.f32.mrf.mxu0
      %v622 = vadd.f32 %v550, %v621
      %623 = vmatmul.bf16.gmra.mxu0 %v560
      %v624 = vpop.f32.mrf.mxu0
      %v625 = vadd.f32 %v550, %v624
      %v626 = vpop.f32.mrf.mxu0
      %v627 = vadd.f32 %v550, %v626
      %628 = vmatmul.bf16.gmra.mxu0 %v563
      %v629 = vpop.f32.mrf.mxu0
      %v630 = vadd.f32 %v550, %v629
      %v631 = vpop.f32.mrf.mxu0
      %v632 = vadd.f32 %v550, %v631
      %633 = vmatmul.bf16.gmra.mxu0 %v566
      %v634 = vpop.f32.mrf.mxu0
      %v635 = vadd.f32 %v550, %v634
      %v636 = vpop.f32.mrf.mxu0
      %v637 = vadd.f32 %v550, %v636
      %638 = vmatmul.bf16.gmra.mxu0 %v569
      %v639 = vpop.f32.mrf.mxu0
      %v640 = vadd.f32 %v550, %v639
      %v641 = vpop.f32.mrf.mxu0
      %v642 = vadd.f32 %v550, %v641
      %643 = vmatmul.bf16.gmra.mxu0 %v572
      %v644 = vpop.f32.mrf.mxu0
      %v645 = vadd.f32 %v550, %v644
      %v646 = vpop.f32.mrf.mxu0
      %v647 = vadd.f32 %v550, %v646
      %648 = vmatmul.bf16.gmra.mxu0 %v575
      %v649 = vpop.f32.mrf.mxu0
      %v650 = vadd.f32 %v550, %v649
      %v651 = vpop.f32.mrf.mxu0
      %v652 = vadd.f32 %v550, %v651
      %653 = vmatmul.bf16.gmra.mxu0 %v578
      %v654 = vpop.f32.mrf.mxu0
      %v655 = vadd.f32 %v550, %v654
      %v656 = vpop.f32.mrf.mxu0
      %v657 = vadd.f32 %v550, %v656
      %658 = vmatmul.bf16.gmra.mxu0 %v581
      %v659 = vpop.f32.mrf.mxu0
      %v660 = vadd.f32 %v550, %v659
      %v661 = vpop.f32.mrf.mxu0
      %v662 = vadd.f32 %v550, %v661
      %663 = vmatmul.bf16.gmra.mxu0 %v584
      %v664 = vpop.f32.mrf.mxu0
      %v665 = vadd.f32 %v550, %v664
      %v666 = vpop.f32.mrf.mxu0
      %v667 = vadd.f32 %v550, %v666
      %668 = vmatmul.bf16.gmra.mxu0 %v587
      %v669 = vpop.f32.mrf.mxu0
      %v670 = vadd.f32 %v550, %v669
      %v671 = vpop.f32.mrf.mxu0
      %v672 = vadd.f32 %v550, %v671
      %673 = vmatmul.bf16.gmra.mxu0 %v590
      %v674 = vpop.f32.mrf.mxu0
      %v675 = vadd.f32 %v550, %v674
      %v676 = vpop.f32.mrf.mxu0
      %v677 = vadd.f32 %v550, %v676
      %678 = vmatmul.bf16.gmra.mxu0 %v593
      %v679 = vpop.f32.mrf.mxu0
      %v680 = vadd.f32 %v550, %v679
      %v681 = vpop.f32.mrf.mxu0
      %v682 = vadd.f32 %v550, %v681
      %683 = vmatmul.bf16.gmra.mxu0 %v596
      %v684 = vpop.f32.mrf.mxu0
      %v685 = vadd.f32 %v550, %v684
      %v686 = vpop.f32.mrf.mxu0
      %v687 = vadd.f32 %v550, %v686
      %688 = vmatmul.bf16.gmra.mxu0 %v599
      %v689 = vpop.f32.mrf.mxu0
      %v690 = vadd.f32 %v550, %v689
      %v691 = vpop.f32.mrf.mxu0
      %v692 = vadd.f32 %v550, %v691
      %693 = vdwg.mxu0
      %vm694 = vcmp.gt.f32.partialorder %v615, 0.0
      %vm695 = vcmp.gt.f32.partialorder %v617, 0.0
      %vm696 = vcmp.gt.f32.partialorder %v620, 0.0
      %vm697 = vcmp.gt.f32.partialorder %v622, 0.0
      %vm698 = vcmp.gt.f32.partialorder %v625, 0.0
      %vm699 = vcmp.gt.f32.partialorder %v627, 0.0
      %vm700 = vcmp.gt.f32.partialorder %v630, 0.0
      %vm701 = vcmp.gt.f32.partialorder %v632, 0.0
      %vm702 = vcmp.gt.f32.partialorder %v635, 0.0
      %vm703 = vcmp.gt.f32.partialorder %v637, 0.0
      %vm704 = vcmp.gt.f32.partialorder %v640, 0.0
      %vm705 = vcmp.gt.f32.partialorder %v642, 0.0
      %vm706 = vcmp.gt.f32.partialorder %v645, 0.0
      %vm707 = vcmp.gt.f32.partialorder %v647, 0.0
      %vm708 = vcmp.gt.f32.partialorder %v650, 0.0
      %vm709 = vcmp.gt.f32.partialorder %v652, 0.0
      %vm710 = vcmp.gt.f32.partialorder %v655, 0.0
      %vm711 = vcmp.gt.f32.partialorder %v657, 0.0
      %vm712 = vcmp.gt.f32.partialorder %v660, 0.0
      %vm713 = vcmp.gt.f32.partialorder %v662, 0.0
      %vm714 = vcmp.gt.f32.partialorder %v665, 0.0
      %vm715 = vcmp.gt.f32.partialorder %v667, 0.0
      %vm716 = vcmp.gt.f32.partialorder %v670, 0.0
      %vm717 = vcmp.gt.f32.partialorder %v672, 0.0
      %vm718 = vcmp.gt.f32.partialorder %v675, 0.0
      %vm719 = vcmp.gt.f32.partialorder %v677, 0.0
      %vm720 = vcmp.gt.f32.partialorder %v680, 0.0
      %vm721 = vcmp.gt.f32.partialorder %v682, 0.0
      %vm722 = vcmp.gt.f32.partialorder %v685, 0.0
      %vm723 = vcmp.gt.f32.partialorder %v687, 0.0
      %vm724 = vcmp.gt.f32.partialorder %v690, 0.0
      %vm725 = vcmp.gt.f32.partialorder %v692, 0.0
      %v726 = vmul.f32 %v615, 0.1
      %v727 = vmul.f32 %v617, 0.1
      %v728 = vmul.f32 %v620, 0.1
      %v729 = vmul.f32 %v622, 0.1
      %v730 = vmul.f32 %v625, 0.1
      %v731 = vmul.f32 %v627, 0.1
      %v732 = vmul.f32 %v630, 0.1
      %v733 = vmul.f32 %v632, 0.1
      %v734 = vmul.f32 %v635, 0.1
      %v735 = vmul.f32 %v637, 0.1
      %v736 = vmul.f32 %v640, 0.1
      %v737 = vmul.f32 %v642, 0.1
      %v738 = vmul.f32 %v645, 0.1
      %v739 = vmul.f32 %v647, 0.1
      %v740 = vmul.f32 %v650, 0.1
      %v741 = vmul.f32 %v652, 0.1
      %v742 = vmul.f32 %v655, 0.1
      %v743 = vmul.f32 %v657, 0.1
      %v744 = vmul.f32 %v660, 0.1
      %v745 = vmul.f32 %v662, 0.1
      %v746 = vmul.f32 %v665, 0.1
      %v747 = vmul.f32 %v667, 0.1
      %v748 = vmul.f32 %v670, 0.1
      %v749 = vmul.f32 %v672, 0.1
      %v750 = vmul.f32 %v675, 0.1
      %v751 = vmul.f32 %v677, 0.1
      %v752 = vmul.f32 %v680, 0.1
      %v753 = vmul.f32 %v682, 0.1
      %v754 = vmul.f32 %v685, 0.1
      %v755 = vmul.f32 %v687, 0.1
      %v756 = vmul.f32 %v690, 0.1
      %v757 = vmul.f32 %v692, 0.1
      %v758 = vsel %vm694, %v615, %v726
      %v759 = vsel %vm695, %v617, %v727
      %v760 = vsel %vm696, %v620, %v728
      %v761 = vsel %vm697, %v622, %v729
      %v762 = vsel %vm698, %v625, %v730
      %v763 = vsel %vm699, %v627, %v731
      %v764 = vsel %vm700, %v630, %v732
      %v765 = vsel %vm701, %v632, %v733
      %v766 = vsel %vm702, %v635, %v734
      %v767 = vsel %vm703, %v637, %v735
      %v768 = vsel %vm704, %v640, %v736
      %v769 = vsel %vm705, %v642, %v737
      %v770 = vsel %vm706, %v645, %v738
      %v771 = vsel %vm707, %v647, %v739
      %v772 = vsel %vm708, %v650, %v740
      %v773 = vsel %vm709, %v652, %v741
      %v774 = vsel %vm710, %v655, %v742
      %v775 = vsel %vm711, %v657, %v743
      %v776 = vsel %vm712, %v660, %v744
      %v777 = vsel %vm713, %v662, %v745
      %v778 = vsel %vm714, %v665, %v746
      %v779 = vsel %vm715, %v667, %v747
      %v780 = vsel %vm716, %v670, %v748
      %v781 = vsel %vm717, %v672, %v749
      %v782 = vsel %vm718, %v675, %v750
      %v783 = vsel %vm719, %v677, %v751
      %v784 = vsel %vm720, %v680, %v752
      %v785 = vsel %vm721, %v682, %v753
      %v786 = vsel %vm722, %v685, %v754
      %v787 = vsel %vm723, %v687, %v755
      %v788 = vsel %vm724, %v690, %v756
      %v789 = vsel %vm725, %v692, %v757
      %v790 = vpack.c.bf16 %v759, %v758
      %v791 = vpack.c.bf16 %v761, %v760
      %v792 = vpack.c.bf16 %v763, %v762
      %v793 = vpack.c.bf16 %v765, %v764
      %v794 = vpack.c.bf16 %v767, %v766
      %v795 = vpack.c.bf16 %v769, %v768
      %v796 = vpack.c.bf16 %v771, %v770
      %v797 = vpack.c.bf16 %v773, %v772
      %v798 = vpack.c.bf16 %v775, %v774
      %v799 = vpack.c.bf16 %v777, %v776
      %v800 = vpack.c.bf16 %v779, %v778
      %v801 = vpack.c.bf16 %v781, %v780
      %v802 = vpack.c.bf16 %v783, %v782
      %v803 = vpack.c.bf16 %v785, %v784
      %v804 = vpack.c.bf16 %v787, %v786
      %v805 = vpack.c.bf16 %v789, %v788
      %v806 = vld [vmem:[%s3] sm:$0xf]
      %v807 = vld [vmem:[%s3 + $0x4] sm:$0xf]
      %v808 = vld [vmem:[%s3 + $0x8] sm:$0xf]
      %v809 = vld [vmem:[%s3 + $0xc] sm:$0xf]
      %v810 = vld [vmem:[%s3 + $0x10] sm:$0xf]
      %v811 = vld [vmem:[%s3 + $0x14] sm:$0xf]
      %v812 = vld [vmem:[%s3 + $0x18] sm:$0xf]
      %v813 = vld [vmem:[%s3 + $0x1c] sm:$0xf]
      %v814 = vld [vmem:[%s3 + $0x20] sm:$0xf]
      %v815 = vld [vmem:[%s3 + $0x24] sm:$0xf]
      %v816 = vld [vmem:[%s3 + $0x28] sm:$0xf]
      %v817 = vld [vmem:[%s3 + $0x2c] sm:$0xf]
      %v818 = vld [vmem:[%s3 + $0x30] sm:$0xf]
      %v819 = vld [vmem:[%s3 + $0x34] sm:$0xf]
      %v820 = vld [vmem:[%s3 + $0x38] sm:$0xf]
      %v821 = vld [vmem:[%s3 + $0x3c] sm:$0xf]
      %v822 = vld [vmem:[%s4] sm:$0x1]
      %v824 = vperm.slane %v822, 0
      %v842 = vunpack.c.l.b16 %v806
      %v843 = vunpack.c.l.b16 %v807
      %v844 = vunpack.c.l.b16 %v808
      %v845 = vunpack.c.l.b16 %v809
      %v846 = vunpack.c.l.b16 %v810
      %v847 = vunpack.c.l.b16 %v811
      %v848 = vunpack.c.l.b16 %v812
      %v849 = vunpack.c.l.b16 %v813
      %v850 = vunpack.c.l.b16 %v814
      %v851 = vunpack.c.l.b16 %v815
      %v852 = vunpack.c.l.b16 %v816
      %v853 = vunpack.c.l.b16 %v817
      %v854 = vunpack.c.l.b16 %v818
      %v855 = vunpack.c.l.b16 %v819
      %v856 = vunpack.c.l.b16 %v820
      %v857 = vunpack.c.l.b16 %v821
      %v858 = vpack.c.b16 %v843, %v842
      %v859 = vpack.c.b16 %v845, %v844
      %v860 = vpack.c.b16 %v847, %v846
      %v861 = vpack.c.b16 %v849, %v848
      %v862 = vpack.c.b16 %v851, %v850
      %v863 = vpack.c.b16 %v853, %v852
      %v864 = vpack.c.b16 %v855, %v854
      %v865 = vpack.c.b16 %v857, %v856
      %874 = vmatpush.bf16.msra.mxu0 %v865
      %875 = vmatpush.bf16.msra.mxu0 %v864
      %876 = vmatpush.bf16.msra.mxu0 %v863
      %877 = vmatpush.bf16.msra.mxu0 %v862
      %878 = vmatpush.bf16.msra.mxu0 %v861
      %879 = vmatpush.bf16.msra.mxu0 %v860
      %880 = vmatpush.bf16.msra.mxu0 %v859
      %881 = vmatpush.bf16.msra.mxu0 %v858
      %882 = vmatmul.bf16.gmra.mxu0 %v790
      %v883 = vpop.f32.mrf.mxu0
      %v884 = vadd.f32 %v824, %v883
      %v885 = vpop.f32.mrf.mxu0
      %v886 = vadd.f32 %v824, %v885
      %887 = vmatmul.bf16.gmra.mxu0 %v791
      %v888 = vpop.f32.mrf.mxu0
      %v889 = vadd.f32 %v824, %v888
      %v890 = vpop.f32.mrf.mxu0
      %v891 = vadd.f32 %v824, %v890
      %892 = vmatmul.bf16.gmra.mxu0 %v792
      %v893 = vpop.f32.mrf.mxu0
      %v894 = vadd.f32 %v824, %v893
      %v895 = vpop.f32.mrf.mxu0
      %v896 = vadd.f32 %v824, %v895
      %897 = vmatmul.bf16.gmra.mxu0 %v793
      %v898 = vpop.f32.mrf.mxu0
      %v899 = vadd.f32 %v824, %v898
      %v900 = vpop.f32.mrf.mxu0
      %v901 = vadd.f32 %v824, %v900
      %902 = vmatmul.bf16.gmra.mxu0 %v794
      %v903 = vpop.f32.mrf.mxu0
      %v904 = vadd.f32 %v824, %v903
      %v905 = vpop.f32.mrf.mxu0
      %v906 = vadd.f32 %v824, %v905
      %907 = vmatmul.bf16.gmra.mxu0 %v795
      %v908 = vpop.f32.mrf.mxu0
      %v909 = vadd.f32 %v824, %v908
      %v910 = vpop.f32.mrf.mxu0
      %v911 = vadd.f32 %v824, %v910
      %912 = vmatmul.bf16.gmra.mxu0 %v796
      %v913 = vpop.f32.mrf.mxu0
      %v914 = vadd.f32 %v824, %v913
      %v915 = vpop.f32.mrf.mxu0
      %v916 = vadd.f32 %v824, %v915
      %917 = vmatmul.bf16.gmra.mxu0 %v797
      %v918 = vpop.f32.mrf.mxu0
      %v919 = vadd.f32 %v824, %v918
      %v920 = vpop.f32.mrf.mxu0
      %v921 = vadd.f32 %v824, %v920
      %922 = vmatmul.bf16.gmra.mxu0 %v798
      %v923 = vpop.f32.mrf.mxu0
      %v924 = vadd.f32 %v824, %v923
      %v925 = vpop.f32.mrf.mxu0
      %v926 = vadd.f32 %v824, %v925
      %927 = vmatmul.bf16.gmra.mxu0 %v799
      %v928 = vpop.f32.mrf.mxu0
      %v929 = vadd.f32 %v824, %v928
      %v930 = vpop.f32.mrf.mxu0
      %v931 = vadd.f32 %v824, %v930
      %932 = vmatmul.bf16.gmra.mxu0 %v800
      %v933 = vpop.f32.mrf.mxu0
      %v934 = vadd.f32 %v824, %v933
      %v935 = vpop.f32.mrf.mxu0
      %v936 = vadd.f32 %v824, %v935
      %937 = vmatmul.bf16.gmra.mxu0 %v801
      %v938 = vpop.f32.mrf.mxu0
      %v939 = vadd.f32 %v824, %v938
      %v940 = vpop.f32.mrf.mxu0
      %v941 = vadd.f32 %v824, %v940
      %942 = vmatmul.bf16.gmra.mxu0 %v802
      %v943 = vpop.f32.mrf.mxu0
      %v944 = vadd.f32 %v824, %v943
      %v945 = vpop.f32.mrf.mxu0
      %v946 = vadd.f32 %v824, %v945
      %947 = vmatmul.bf16.gmra.mxu0 %v803
      %v948 = vpop.f32.mrf.mxu0
      %v949 = vadd.f32 %v824, %v948
      %v950 = vpop.f32.mrf.mxu0
      %v951 = vadd.f32 %v824, %v950
      %952 = vmatmul.bf16.gmra.mxu0 %v804
      %v953 = vpop.f32.mrf.mxu0
      %v954 = vadd.f32 %v824, %v953
      %v955 = vpop.f32.mrf.mxu0
      %v956 = vadd.f32 %v824, %v955
      %957 = vmatmul.bf16.gmra.mxu0 %v805
      %v958 = vpop.f32.mrf.mxu0
      %v959 = vadd.f32 %v824, %v958
      %v960 = vpop.f32.mrf.mxu0
      %v961 = vadd.f32 %v824, %v960
      %962 = vdwg.mxu0
      %vm963 = vcmp.gt.f32.partialorder %v884, 0.0
      %vm964 = vcmp.gt.f32.partialorder %v886, 0.0
      %vm965 = vcmp.gt.f32.partialorder %v889, 0.0
      %vm966 = vcmp.gt.f32.partialorder %v891, 0.0
      %vm967 = vcmp.gt.f32.partialorder %v894, 0.0
      %vm968 = vcmp.gt.f32.partialorder %v896, 0.0
      %vm969 = vcmp.gt.f32.partialorder %v899, 0.0
      %vm970 = vcmp.gt.f32.partialorder %v901, 0.0
      %vm971 = vcmp.gt.f32.partialorder %v904, 0.0
      %vm972 = vcmp.gt.f32.partialorder %v906, 0.0
      %vm973 = vcmp.gt.f32.partialorder %v909, 0.0
      %vm974 = vcmp.gt.f32.partialorder %v911, 0.0
      %vm975 = vcmp.gt.f32.partialorder %v914, 0.0
      %vm976 = vcmp.gt.f32.partialorder %v916, 0.0
      %vm977 = vcmp.gt.f32.partialorder %v919, 0.0
      %vm978 = vcmp.gt.f32.partialorder %v921, 0.0
      %vm979 = vcmp.gt.f32.partialorder %v924, 0.0
      %vm980 = vcmp.gt.f32.partialorder %v926, 0.0
      %vm981 = vcmp.gt.f32.partialorder %v929, 0.0
      %vm982 = vcmp.gt.f32.partialorder %v931, 0.0
      %vm983 = vcmp.gt.f32.partialorder %v934, 0.0
      %vm984 = vcmp.gt.f32.partialorder %v936, 0.0
      %vm985 = vcmp.gt.f32.partialorder %v939, 0.0
      %vm986 = vcmp.gt.f32.partialorder %v941, 0.0
      %vm987 = vcmp.gt.f32.partialorder %v944, 0.0
      %vm988 = vcmp.gt.f32.partialorder %v946, 0.0
      %vm989 = vcmp.gt.f32.partialorder %v949, 0.0
      %vm990 = vcmp.gt.f32.partialorder %v951, 0.0
      %vm991 = vcmp.gt.f32.partialorder %v954, 0.0
      %vm992 = vcmp.gt.f32.partialorder %v956, 0.0
      %vm993 = vcmp.gt.f32.partialorder %v959, 0.0
      %vm994 = vcmp.gt.f32.partialorder %v961, 0.0
      %v995 = vmul.f32 %v884, 0.1
      %v996 = vmul.f32 %v886, 0.1
      %v997 = vmul.f32 %v889, 0.1
      %v998 = vmul.f32 %v891, 0.1
      %v999 = vmul.f32 %v894, 0.1
      %v1000 = vmul.f32 %v896, 0.1
      %v1001 = vmul.f32 %v899, 0.1
      %v1002 = vmul.f32 %v901, 0.1
      %v1003 = vmul.f32 %v904, 0.1
      %v1004 = vmul.f32 %v906, 0.1
      %v1005 = vmul.f32 %v909, 0.1
      %v1006 = vmul.f32 %v911, 0.1
      %v1007 = vmul.f32 %v914, 0.1
      %v1008 = vmul.f32 %v916, 0.1
      %v1009 = vmul.f32 %v919, 0.1
      %v1010 = vmul.f32 %v921, 0.1
      %v1011 = vmul.f32 %v924, 0.1
      %v1012 = vmul.f32 %v926, 0.1
      %v1013 = vmul.f32 %v929, 0.1
      %v1014 = vmul.f32 %v931, 0.1
      %v1015 = vmul.f32 %v934, 0.1
      %v1016 = vmul.f32 %v936, 0.1
      %v1017 = vmul.f32 %v939, 0.1
      %v1018 = vmul.f32 %v941, 0.1
      %v1019 = vmul.f32 %v944, 0.1
      %v1020 = vmul.f32 %v946, 0.1
      %v1021 = vmul.f32 %v949, 0.1
      %v1022 = vmul.f32 %v951, 0.1
      %v1023 = vmul.f32 %v954, 0.1
      %v1024 = vmul.f32 %v956, 0.1
      %v1025 = vmul.f32 %v959, 0.1
      %v1026 = vmul.f32 %v961, 0.1
      %v1027 = vsel %vm963, %v884, %v995
      %v1028 = vsel %vm964, %v886, %v996
      %v1029 = vsel %vm965, %v889, %v997
      %v1030 = vsel %vm966, %v891, %v998
      %v1031 = vsel %vm967, %v894, %v999
      %v1032 = vsel %vm968, %v896, %v1000
      %v1033 = vsel %vm969, %v899, %v1001
      %v1034 = vsel %vm970, %v901, %v1002
      %v1035 = vsel %vm971, %v904, %v1003
      %v1036 = vsel %vm972, %v906, %v1004
      %v1037 = vsel %vm973, %v909, %v1005
      %v1038 = vsel %vm974, %v911, %v1006
      %v1039 = vsel %vm975, %v914, %v1007
      %v1040 = vsel %vm976, %v916, %v1008
      %v1041 = vsel %vm977, %v919, %v1009
      %v1042 = vsel %vm978, %v921, %v1010
      %v1043 = vsel %vm979, %v924, %v1011
      %v1044 = vsel %vm980, %v926, %v1012
      %v1045 = vsel %vm981, %v929, %v1013
      %v1046 = vsel %vm982, %v931, %v1014
      %v1047 = vsel %vm983, %v934, %v1015
      %v1048 = vsel %vm984, %v936, %v1016
      %v1049 = vsel %vm985, %v939, %v1017
      %v1050 = vsel %vm986, %v941, %v1018
      %v1051 = vsel %vm987, %v944, %v1019
      %v1052 = vsel %vm988, %v946, %v1020
      %v1053 = vsel %vm989, %v949, %v1021
      %v1054 = vsel %vm990, %v951, %v1022
      %v1055 = vsel %vm991, %v954, %v1023
      %v1056 = vsel %vm992, %v956, %v1024
      %v1057 = vsel %vm993, %v959, %v1025
      %v1058 = vsel %vm994, %v961, %v1026
      %v1059 = vpack.c.bf16 %v1028, %v1027
      %v1060 = vpack.c.bf16 %v1030, %v1029
      %v1061 = vpack.c.bf16 %v1032, %v1031
      %v1062 = vpack.c.bf16 %v1034, %v1033
      %v1063 = vpack.c.bf16 %v1036, %v1035
      %v1064 = vpack.c.bf16 %v1038, %v1037
      %v1065 = vpack.c.bf16 %v1040, %v1039
      %v1066 = vpack.c.bf16 %v1042, %v1041
      %v1067 = vpack.c.bf16 %v1044, %v1043
      %v1068 = vpack.c.bf16 %v1046, %v1045
      %v1069 = vpack.c.bf16 %v1048, %v1047
      %v1070 = vpack.c.bf16 %v1050, %v1049
      %v1071 = vpack.c.bf16 %v1052, %v1051
      %v1072 = vpack.c.bf16 %v1054, %v1053
      %v1073 = vpack.c.bf16 %v1056, %v1055
      %v1074 = vpack.c.bf16 %v1058, %v1057
      %v1075 = vld [vmem:[%s5] sm:$0xf]
      %v1076 = vld [vmem:[%s5 + $0x4] sm:$0xf]
      %v1077 = vld [vmem:[%s5 + $0x8] sm:$0xf]
      %v1078 = vld [vmem:[%s5 + $0xc] sm:$0xf]
      %v1079 = vld [vmem:[%s5 + $0x10] sm:$0xf]
      %v1080 = vld [vmem:[%s5 + $0x14] sm:$0xf]
      %v1081 = vld [vmem:[%s5 + $0x18] sm:$0xf]
      %v1082 = vld [vmem:[%s5 + $0x1c] sm:$0xf]
      %v1083 = vld [vmem:[%s5 + $0x20] sm:$0xf]
      %v1084 = vld [vmem:[%s5 + $0x24] sm:$0xf]
      %v1085 = vld [vmem:[%s5 + $0x28] sm:$0xf]
      %v1086 = vld [vmem:[%s5 + $0x2c] sm:$0xf]
      %v1087 = vld [vmem:[%s5 + $0x30] sm:$0xf]
      %v1088 = vld [vmem:[%s5 + $0x34] sm:$0xf]
      %v1089 = vld [vmem:[%s5 + $0x38] sm:$0xf]
      %v1090 = vld [vmem:[%s5 + $0x3c] sm:$0xf]
      %v1091 = vld [vmem:[%s6] sm:$0x1]
      %v1093 = vperm.slane %v1091, 0
      %v1111 = vunpack.c.l.b16 %v1075
      %v1112 = vunpack.c.l.b16 %v1076
      %v1113 = vunpack.c.l.b16 %v1077
      %v1114 = vunpack.c.l.b16 %v1078
      %v1115 = vunpack.c.l.b16 %v1079
      %v1116 = vunpack.c.l.b16 %v1080
      %v1117 = vunpack.c.l.b16 %v1081
      %v1118 = vunpack.c.l.b16 %v1082
      %v1119 = vunpack.c.l.b16 %v1083
      %v1120 = vunpack.c.l.b16 %v1084
      %v1121 = vunpack.c.l.b16 %v1085
      %v1122 = vunpack.c.l.b16 %v1086
      %v1123 = vunpack.c.l.b16 %v1087
      %v1124 = vunpack.c.l.b16 %v1088
      %v1125 = vunpack.c.l.b16 %v1089
      %v1126 = vunpack.c.l.b16 %v1090
      %v1127 = vpack.c.b16 %v1112, %v1111
      %v1128 = vpack.c.b16 %v1114, %v1113
      %v1129 = vpack.c.b16 %v1116, %v1115
      %v1130 = vpack.c.b16 %v1118, %v1117
      %v1131 = vpack.c.b16 %v1120, %v1119
      %v1132 = vpack.c.b16 %v1122, %v1121
      %v1133 = vpack.c.b16 %v1124, %v1123
      %v1134 = vpack.c.b16 %v1126, %v1125
      %1143 = vmatpush.bf16.msra.mxu0 %v1134
      %1144 = vmatpush.bf16.msra.mxu0 %v1133
      %1145 = vmatpush.bf16.msra.mxu0 %v1132
      %1146 = vmatpush.bf16.msra.mxu0 %v1131
      %1147 = vmatpush.bf16.msra.mxu0 %v1130
      %1148 = vmatpush.bf16.msra.mxu0 %v1129
      %1149 = vmatpush.bf16.msra.mxu0 %v1128
      %1150 = vmatpush.bf16.msra.mxu0 %v1127
      %1151 = vmatmul.bf16.gmra.mxu0 %v1059
      %v1152 = vpop.f32.mrf.mxu0
      %v1153 = vadd.f32 %v1093, %v1152
      %v1154 = vpop.f32.mrf.mxu0
      %v1155 = vadd.f32 %v1093, %v1154
      %1156 = vmatmul.bf16.gmra.mxu0 %v1060
      %v1157 = vpop.f32.mrf.mxu0
      %v1158 = vadd.f32 %v1093, %v1157
      %v1159 = vpop.f32.mrf.mxu0
      %v1160 = vadd.f32 %v1093, %v1159
      %1161 = vmatmul.bf16.gmra.mxu0 %v1061
      %v1162 = vpop.f32.mrf.mxu0
      %v1163 = vadd.f32 %v1093, %v1162
      %v1164 = vpop.f32.mrf.mxu0
      %v1165 = vadd.f32 %v1093, %v1164
      %1166 = vmatmul.bf16.gmra.mxu0 %v1062
      %v1167 = vpop.f32.mrf.mxu0
      %v1168 = vadd.f32 %v1093, %v1167
      %v1169 = vpop.f32.mrf.mxu0
      %v1170 = vadd.f32 %v1093, %v1169
      %1171 = vmatmul.bf16.gmra.mxu0 %v1063
      %v1172 = vpop.f32.mrf.mxu0
      %v1173 = vadd.f32 %v1093, %v1172
      %v1174 = vpop.f32.mrf.mxu0
      %v1175 = vadd.f32 %v1093, %v1174
      %1176 = vmatmul.bf16.gmra.mxu0 %v1064
      %v1177 = vpop.f32.mrf.mxu0
      %v1178 = vadd.f32 %v1093, %v1177
      %v1179 = vpop.f32.mrf.mxu0
      %v1180 = vadd.f32 %v1093, %v1179
      %1181 = vmatmul.bf16.gmra.mxu0 %v1065
      %v1182 = vpop.f32.mrf.mxu0
      %v1183 = vadd.f32 %v1093, %v1182
      %v1184 = vpop.f32.mrf.mxu0
      %v1185 = vadd.f32 %v1093, %v1184
      %1186 = vmatmul.bf16.gmra.mxu0 %v1066
      %v1187 = vpop.f32.mrf.mxu0
      %v1188 = vadd.f32 %v1093, %v1187
      %v1189 = vpop.f32.mrf.mxu0
      %v1190 = vadd.f32 %v1093, %v1189
      %1191 = vmatmul.bf16.gmra.mxu0 %v1067
      %v1192 = vpop.f32.mrf.mxu0
      %v1193 = vadd.f32 %v1093, %v1192
      %v1194 = vpop.f32.mrf.mxu0
      %v1195 = vadd.f32 %v1093, %v1194
      %1196 = vmatmul.bf16.gmra.mxu0 %v1068
      %v1197 = vpop.f32.mrf.mxu0
      %v1198 = vadd.f32 %v1093, %v1197
      %v1199 = vpop.f32.mrf.mxu0
      %v1200 = vadd.f32 %v1093, %v1199
      %1201 = vmatmul.bf16.gmra.mxu0 %v1069
      %v1202 = vpop.f32.mrf.mxu0
      %v1203 = vadd.f32 %v1093, %v1202
      %v1204 = vpop.f32.mrf.mxu0
      %v1205 = vadd.f32 %v1093, %v1204
      %1206 = vmatmul.bf16.gmra.mxu0 %v1070
      %v1207 = vpop.f32.mrf.mxu0
      %v1208 = vadd.f32 %v1093, %v1207
      %v1209 = vpop.f32.mrf.mxu0
      %v1210 = vadd.f32 %v1093, %v1209
      %1211 = vmatmul.bf16.gmra.mxu0 %v1071
      %v1212 = vpop.f32.mrf.mxu0
      %v1213 = vadd.f32 %v1093, %v1212
      %v1214 = vpop.f32.mrf.mxu0
      %v1215 = vadd.f32 %v1093, %v1214
      %1216 = vmatmul.bf16.gmra.mxu0 %v1072
      %v1217 = vpop.f32.mrf.mxu0
      %v1218 = vadd.f32 %v1093, %v1217
      %v1219 = vpop.f32.mrf.mxu0
      %v1220 = vadd.f32 %v1093, %v1219
      %1221 = vmatmul.bf16.gmra.mxu0 %v1073
      %v1222 = vpop.f32.mrf.mxu0
      %v1223 = vadd.f32 %v1093, %v1222
      %v1224 = vpop.f32.mrf.mxu0
      %v1225 = vadd.f32 %v1093, %v1224
      %1226 = vmatmul.bf16.gmra.mxu0 %v1074
      %v1227 = vpop.f32.mrf.mxu0
      %v1228 = vadd.f32 %v1093, %v1227
      %v1229 = vpop.f32.mrf.mxu0
      %v1230 = vadd.f32 %v1093, %v1229
      %1231 = vdwg.mxu0
      %vm1232 = vcmp.gt.f32.partialorder %v1153, 0.0
      %vm1233 = vcmp.gt.f32.partialorder %v1155, 0.0
      %vm1234 = vcmp.gt.f32.partialorder %v1158, 0.0
      %vm1235 = vcmp.gt.f32.partialorder %v1160, 0.0
      %vm1236 = vcmp.gt.f32.partialorder %v1163, 0.0
      %vm1237 = vcmp.gt.f32.partialorder %v1165, 0.0
      %vm1238 = vcmp.gt.f32.partialorder %v1168, 0.0
      %vm1239 = vcmp.gt.f32.partialorder %v1170, 0.0
      %vm1240 = vcmp.gt.f32.partialorder %v1173, 0.0
      %vm1241 = vcmp.gt.f32.partialorder %v1175, 0.0
      %vm1242 = vcmp.gt.f32.partialorder %v1178, 0.0
      %vm1243 = vcmp.gt.f32.partialorder %v1180, 0.0
      %vm1244 = vcmp.gt.f32.partialorder %v1183, 0.0
      %vm1245 = vcmp.gt.f32.partialorder %v1185, 0.0
      %vm1246 = vcmp.gt.f32.partialorder %v1188, 0.0
      %vm1247 = vcmp.gt.f32.partialorder %v1190, 0.0
      %vm1248 = vcmp.gt.f32.partialorder %v1193, 0.0
      %vm1249 = vcmp.gt.f32.partialorder %v1195, 0.0
      %vm1250 = vcmp.gt.f32.partialorder %v1198, 0.0
      %vm1251 = vcmp.gt.f32.partialorder %v1200, 0.0
      %vm1252 = vcmp.gt.f32.partialorder %v1203, 0.0
      %vm1253 = vcmp.gt.f32.partialorder %v1205, 0.0
      %vm1254 = vcmp.gt.f32.partialorder %v1208, 0.0
      %vm1255 = vcmp.gt.f32.partialorder %v1210, 0.0
      %vm1256 = vcmp.gt.f32.partialorder %v1213, 0.0
      %vm1257 = vcmp.gt.f32.partialorder %v1215, 0.0
      %vm1258 = vcmp.gt.f32.partialorder %v1218, 0.0
      %vm1259 = vcmp.gt.f32.partialorder %v1220, 0.0
      %vm1260 = vcmp.gt.f32.partialorder %v1223, 0.0
      %vm1261 = vcmp.gt.f32.partialorder %v1225, 0.0
      %vm1262 = vcmp.gt.f32.partialorder %v1228, 0.0
      %vm1263 = vcmp.gt.f32.partialorder %v1230, 0.0
      %v1264 = vmul.f32 %v1153, 0.1
      %v1265 = vmul.f32 %v1155, 0.1
      %v1266 = vmul.f32 %v1158, 0.1
      %v1267 = vmul.f32 %v1160, 0.1
      %v1268 = vmul.f32 %v1163, 0.1
      %v1269 = vmul.f32 %v1165, 0.1
      %v1270 = vmul.f32 %v1168, 0.1
      %v1271 = vmul.f32 %v1170, 0.1
      %v1272 = vmul.f32 %v1173, 0.1
      %v1273 = vmul.f32 %v1175, 0.1
      %v1274 = vmul.f32 %v1178, 0.1
      %v1275 = vmul.f32 %v1180, 0.1
      %v1276 = vmul.f32 %v1183, 0.1
      %v1277 = vmul.f32 %v1185, 0.1
      %v1278 = vmul.f32 %v1188, 0.1
      %v1279 = vmul.f32 %v1190, 0.1
      %v1280 = vmul.f32 %v1193, 0.1
      %v1281 = vmul.f32 %v1195, 0.1
      %v1282 = vmul.f32 %v1198, 0.1
      %v1283 = vmul.f32 %v1200, 0.1
      %v1284 = vmul.f32 %v1203, 0.1
      %v1285 = vmul.f32 %v1205, 0.1
      %v1286 = vmul.f32 %v1208, 0.1
      %v1287 = vmul.f32 %v1210, 0.1
      %v1288 = vmul.f32 %v1213, 0.1
      %v1289 = vmul.f32 %v1215, 0.1
      %v1290 = vmul.f32 %v1218, 0.1
      %v1291 = vmul.f32 %v1220, 0.1
      %v1292 = vmul.f32 %v1223, 0.1
      %v1293 = vmul.f32 %v1225, 0.1
      %v1294 = vmul.f32 %v1228, 0.1
      %v1295 = vmul.f32 %v1230, 0.1
      %v1296 = vsel %vm1232, %v1153, %v1264
      %v1297 = vsel %vm1233, %v1155, %v1265
      %v1298 = vsel %vm1234, %v1158, %v1266
      %v1299 = vsel %vm1235, %v1160, %v1267
      %v1300 = vsel %vm1236, %v1163, %v1268
      %v1301 = vsel %vm1237, %v1165, %v1269
      %v1302 = vsel %vm1238, %v1168, %v1270
      %v1303 = vsel %vm1239, %v1170, %v1271
      %v1304 = vsel %vm1240, %v1173, %v1272
      %v1305 = vsel %vm1241, %v1175, %v1273
      %v1306 = vsel %vm1242, %v1178, %v1274
      %v1307 = vsel %vm1243, %v1180, %v1275
      %v1308 = vsel %vm1244, %v1183, %v1276
      %v1309 = vsel %vm1245, %v1185, %v1277
      %v1310 = vsel %vm1246, %v1188, %v1278
      %v1311 = vsel %vm1247, %v1190, %v1279
      %v1312 = vsel %vm1248, %v1193, %v1280
      %v1313 = vsel %vm1249, %v1195, %v1281
      %v1314 = vsel %vm1250, %v1198, %v1282
      %v1315 = vsel %vm1251, %v1200, %v1283
      %v1316 = vsel %vm1252, %v1203, %v1284
      %v1317 = vsel %vm1253, %v1205, %v1285
      %v1318 = vsel %vm1254, %v1208, %v1286
      %v1319 = vsel %vm1255, %v1210, %v1287
      %v1320 = vsel %vm1256, %v1213, %v1288
      %v1321 = vsel %vm1257, %v1215, %v1289
      %v1322 = vsel %vm1258, %v1218, %v1290
      %v1323 = vsel %vm1259, %v1220, %v1291
      %v1324 = vsel %vm1260, %v1223, %v1292
      %v1325 = vsel %vm1261, %v1225, %v1293
      %v1326 = vsel %vm1262, %v1228, %v1294
      %v1327 = vsel %vm1263, %v1230, %v1295
      %v1328 = vpack.c.bf16 %v1297, %v1296
      %v1329 = vpack.c.bf16 %v1299, %v1298
      %v1330 = vpack.c.bf16 %v1301, %v1300
      %v1331 = vpack.c.bf16 %v1303, %v1302
      %v1332 = vpack.c.bf16 %v1305, %v1304
      %v1333 = vpack.c.bf16 %v1307, %v1306
      %v1334 = vpack.c.bf16 %v1309, %v1308
      %v1335 = vpack.c.bf16 %v1311, %v1310
      %v1336 = vpack.c.bf16 %v1313, %v1312
      %v1337 = vpack.c.bf16 %v1315, %v1314
      %v1338 = vpack.c.bf16 %v1317, %v1316
      %v1339 = vpack.c.bf16 %v1319, %v1318
      %v1340 = vpack.c.bf16 %v1321, %v1320
      %v1341 = vpack.c.bf16 %v1323, %v1322
      %v1342 = vpack.c.bf16 %v1325, %v1324
      %v1343 = vpack.c.bf16 %v1327, %v1326
      %v1344 = vld [vmem:[%s7] sm:$0xff]
      %v1345 = vld [vmem:[%s7 + $0x8] sm:$0xff]
      %v1346 = vld [vmem:[%s7 + $0x10] sm:$0xff]
      %v1347 = vld [vmem:[%s7 + $0x18] sm:$0xff]
      %v1348 = vld [vmem:[%s7 + $0x20] sm:$0xff]
      %v1349 = vld [vmem:[%s7 + $0x28] sm:$0xff]
      %v1350 = vld [vmem:[%s7 + $0x30] sm:$0xff]
      %v1351 = vld [vmem:[%s7 + $0x38] sm:$0xff]
      %v1352 = vld [vmem:[%s7 + $0x40] sm:$0xff]
      %v1353 = vld [vmem:[%s7 + $0x48] sm:$0xff]
      %v1354 = vld [vmem:[%s7 + $0x50] sm:$0xff]
      %v1355 = vld [vmem:[%s7 + $0x58] sm:$0xff]
      %v1356 = vld [vmem:[%s7 + $0x60] sm:$0xff]
      %v1357 = vld [vmem:[%s7 + $0x68] sm:$0xff]
      %v1358 = vld [vmem:[%s7 + $0x70] sm:$0xff]
      %v1359 = vld [vmem:[%s7 + $0x78] sm:$0xff]
      %v1360 = vld [vmem:[%s8] sm:$0x3]
      %v1362 = vperm.slane %v1360, 0
      %v1363 = vperm.slane %v1360, 1
      %v1382 = vunpack.c.l.b16 %v1344
      %v1383 = vunpack.c.h.b16 %v1344
      %v1384 = vunpack.c.l.b16 %v1345
      %v1385 = vunpack.c.h.b16 %v1345
      %v1386 = vunpack.c.l.b16 %v1346
      %v1387 = vunpack.c.h.b16 %v1346
      %v1388 = vunpack.c.l.b16 %v1347
      %v1389 = vunpack.c.h.b16 %v1347
      %v1390 = vunpack.c.l.b16 %v1348
      %v1391 = vunpack.c.h.b16 %v1348
      %v1392 = vunpack.c.l.b16 %v1349
      %v1393 = vunpack.c.h.b16 %v1349
      %v1394 = vunpack.c.l.b16 %v1350
      %v1395 = vunpack.c.h.b16 %v1350
      %v1396 = vunpack.c.l.b16 %v1351
      %v1397 = vunpack.c.h.b16 %v1351
      %v1398 = vunpack.c.l.b16 %v1352
      %v1399 = vunpack.c.h.b16 %v1352
      %v1400 = vunpack.c.l.b16 %v1353
      %v1401 = vunpack.c.h.b16 %v1353
      %v1402 = vunpack.c.l.b16 %v1354
      %v1403 = vunpack.c.h.b16 %v1354
      %v1404 = vunpack.c.l.b16 %v1355
      %v1405 = vunpack.c.h.b16 %v1355
      %v1406 = vunpack.c.l.b16 %v1356
      %v1407 = vunpack.c.h.b16 %v1356
      %v1408 = vunpack.c.l.b16 %v1357
      %v1409 = vunpack.c.h.b16 %v1357
      %v1410 = vunpack.c.l.b16 %v1358
      %v1411 = vunpack.c.h.b16 %v1358
      %v1412 = vunpack.c.l.b16 %v1359
      %v1413 = vunpack.c.h.b16 %v1359
      %v1414 = vpack.c.b16 %v1384, %v1382
      %v1415 = vpack.c.b16 %v1385, %v1383
      %v1416 = vpack.c.b16 %v1388, %v1386
      %v1417 = vpack.c.b16 %v1389, %v1387
      %v1418 = vpack.c.b16 %v1392, %v1390
      %v1419 = vpack.c.b16 %v1393, %v1391
      %v1420 = vpack.c.b16 %v1396, %v1394
      %v1421 = vpack.c.b16 %v1397, %v1395
      %v1422 = vpack.c.b16 %v1400, %v1398
      %v1423 = vpack.c.b16 %v1401, %v1399
      %v1424 = vpack.c.b16 %v1404, %v1402
      %v1425 = vpack.c.b16 %v1405, %v1403
      %v1426 = vpack.c.b16 %v1408, %v1406
      %v1427 = vpack.c.b16 %v1409, %v1407
      %v1428 = vpack.c.b16 %v1412, %v1410
      %v1429 = vpack.c.b16 %v1413, %v1411
      %1446 = vmatpush.bf16.msra.mxu0 %v1428
      %1447 = vmatpush.bf16.msra.mxu0 %v1426
      %1448 = vmatpush.bf16.msra.mxu0 %v1424
      %1449 = vmatpush.bf16.msra.mxu0 %v1422
      %1450 = vmatpush.bf16.msra.mxu0 %v1420
      %1451 = vmatpush.bf16.msra.mxu0 %v1418
      %1452 = vmatpush.bf16.msra.mxu0 %v1416
      %1453 = vmatpush.bf16.msra.mxu0 %v1414
      %1454 = vmatmul.bf16.gmra.mxu0 %v1328
      %v1455 = vpop.f32.mrf.mxu0
      %v1456 = vadd.f32 %v1362, %v1455
      %v1457 = vpop.f32.mrf.mxu0
      %v1458 = vadd.f32 %v1362, %v1457
      %1459 = vmatmul.bf16.gmra.mxu0 %v1329
      %v1460 = vpop.f32.mrf.mxu0
      %v1461 = vadd.f32 %v1362, %v1460
      %v1462 = vpop.f32.mrf.mxu0
      %v1463 = vadd.f32 %v1362, %v1462
      %1464 = vmatmul.bf16.gmra.mxu0 %v1330
      %v1465 = vpop.f32.mrf.mxu0
      %v1466 = vadd.f32 %v1362, %v1465
      %v1467 = vpop.f32.mrf.mxu0
      %v1468 = vadd.f32 %v1362, %v1467
      %1469 = vmatmul.bf16.gmra.mxu0 %v1331
      %v1470 = vpop.f32.mrf.mxu0
      %v1471 = vadd.f32 %v1362, %v1470
      %v1472 = vpop.f32.mrf.mxu0
      %v1473 = vadd.f32 %v1362, %v1472
      %1474 = vmatmul.bf16.gmra.mxu0 %v1332
      %v1475 = vpop.f32.mrf.mxu0
      %v1476 = vadd.f32 %v1362, %v1475
      %v1477 = vpop.f32.mrf.mxu0
      %v1478 = vadd.f32 %v1362, %v1477
      %1479 = vmatmul.bf16.gmra.mxu0 %v1333
      %v1480 = vpop.f32.mrf.mxu0
      %v1481 = vadd.f32 %v1362, %v1480
      %v1482 = vpop.f32.mrf.mxu0
      %v1483 = vadd.f32 %v1362, %v1482
      %1484 = vmatmul.bf16.gmra.mxu0 %v1334
      %v1485 = vpop.f32.mrf.mxu0
      %v1486 = vadd.f32 %v1362, %v1485
      %v1487 = vpop.f32.mrf.mxu0
      %v1488 = vadd.f32 %v1362, %v1487
      %1489 = vmatmul.bf16.gmra.mxu0 %v1335
      %v1490 = vpop.f32.mrf.mxu0
      %v1491 = vadd.f32 %v1362, %v1490
      %v1492 = vpop.f32.mrf.mxu0
      %v1493 = vadd.f32 %v1362, %v1492
      %1494 = vmatmul.bf16.gmra.mxu0 %v1336
      %v1495 = vpop.f32.mrf.mxu0
      %v1496 = vadd.f32 %v1362, %v1495
      %v1497 = vpop.f32.mrf.mxu0
      %v1498 = vadd.f32 %v1362, %v1497
      %1499 = vmatmul.bf16.gmra.mxu0 %v1337
      %v1500 = vpop.f32.mrf.mxu0
      %v1501 = vadd.f32 %v1362, %v1500
      %v1502 = vpop.f32.mrf.mxu0
      %v1503 = vadd.f32 %v1362, %v1502
      %1504 = vmatmul.bf16.gmra.mxu0 %v1338
      %v1505 = vpop.f32.mrf.mxu0
      %v1506 = vadd.f32 %v1362, %v1505
      %v1507 = vpop.f32.mrf.mxu0
      %v1508 = vadd.f32 %v1362, %v1507
      %1509 = vmatmul.bf16.gmra.mxu0 %v1339
      %v1510 = vpop.f32.mrf.mxu0
      %v1511 = vadd.f32 %v1362, %v1510
      %v1512 = vpop.f32.mrf.mxu0
      %v1513 = vadd.f32 %v1362, %v1512
      %1514 = vmatmul.bf16.gmra.mxu0 %v1340
      %v1515 = vpop.f32.mrf.mxu0
      %v1516 = vadd.f32 %v1362, %v1515
      %v1517 = vpop.f32.mrf.mxu0
      %v1518 = vadd.f32 %v1362, %v1517
      %1519 = vmatmul.bf16.gmra.mxu0 %v1341
      %v1520 = vpop.f32.mrf.mxu0
      %v1521 = vadd.f32 %v1362, %v1520
      %v1522 = vpop.f32.mrf.mxu0
      %v1523 = vadd.f32 %v1362, %v1522
      %1524 = vmatmul.bf16.gmra.mxu0 %v1342
      %v1525 = vpop.f32.mrf.mxu0
      %v1526 = vadd.f32 %v1362, %v1525
      %v1527 = vpop.f32.mrf.mxu0
      %v1528 = vadd.f32 %v1362, %v1527
      %1529 = vmatmul.bf16.gmra.mxu0 %v1343
      %v1530 = vpop.f32.mrf.mxu0
      %v1531 = vadd.f32 %v1362, %v1530
      %v1532 = vpop.f32.mrf.mxu0
      %v1533 = vadd.f32 %v1362, %v1532
      %1534 = vdwg.mxu0
      %1535 = vmatpush.bf16.msra.mxu0 %v1429
      %1536 = vmatpush.bf16.msra.mxu0 %v1427
      %1537 = vmatpush.bf16.msra.mxu0 %v1425
      %1538 = vmatpush.bf16.msra.mxu0 %v1423
      %1539 = vmatpush.bf16.msra.mxu0 %v1421
      %1540 = vmatpush.bf16.msra.mxu0 %v1419
      %1541 = vmatpush.bf16.msra.mxu0 %v1417
      %1542 = vmatpush.bf16.msra.mxu0 %v1415
      %1543 = vmatmul.bf16.gmra.mxu0 %v1328
      %v1544 = vpop.f32.mrf.mxu0
      %v1545 = vadd.f32 %v1363, %v1544
      %v1546 = vpop.f32.mrf.mxu0
      %v1547 = vadd.f32 %v1363, %v1546
      %1548 = vmatmul.bf16.gmra.mxu0 %v1329
      %v1549 = vpop.f32.mrf.mxu0
      %v1550 = vadd.f32 %v1363, %v1549
      %v1551 = vpop.f32.mrf.mxu0
      %v1552 = vadd.f32 %v1363, %v1551
      %1553 = vmatmul.bf16.gmra.mxu0 %v1330
      %v1554 = vpop.f32.mrf.mxu0
      %v1555 = vadd.f32 %v1363, %v1554
      %v1556 = vpop.f32.mrf.mxu0
      %v1557 = vadd.f32 %v1363, %v1556
      %1558 = vmatmul.bf16.gmra.mxu0 %v1331
      %v1559 = vpop.f32.mrf.mxu0
      %v1560 = vadd.f32 %v1363, %v1559
      %v1561 = vpop.f32.mrf.mxu0
      %v1562 = vadd.f32 %v1363, %v1561
      %1563 = vmatmul.bf16.gmra.mxu0 %v1332
      %v1564 = vpop.f32.mrf.mxu0
      %v1565 = vadd.f32 %v1363, %v1564
      %v1566 = vpop.f32.mrf.mxu0
      %v1567 = vadd.f32 %v1363, %v1566
      %1568 = vmatmul.bf16.gmra.mxu0 %v1333
      %v1569 = vpop.f32.mrf.mxu0
      %v1570 = vadd.f32 %v1363, %v1569
      %v1571 = vpop.f32.mrf.mxu0
      %v1572 = vadd.f32 %v1363, %v1571
      %1573 = vmatmul.bf16.gmra.mxu0 %v1334
      %v1574 = vpop.f32.mrf.mxu0
      %v1575 = vadd.f32 %v1363, %v1574
      %v1576 = vpop.f32.mrf.mxu0
      %v1577 = vadd.f32 %v1363, %v1576
      %1578 = vmatmul.bf16.gmra.mxu0 %v1335
      %v1579 = vpop.f32.mrf.mxu0
      %v1580 = vadd.f32 %v1363, %v1579
      %v1581 = vpop.f32.mrf.mxu0
      %v1582 = vadd.f32 %v1363, %v1581
      %1583 = vmatmul.bf16.gmra.mxu0 %v1336
      %v1584 = vpop.f32.mrf.mxu0
      %v1585 = vadd.f32 %v1363, %v1584
      %v1586 = vpop.f32.mrf.mxu0
      %v1587 = vadd.f32 %v1363, %v1586
      %1588 = vmatmul.bf16.gmra.mxu0 %v1337
      %v1589 = vpop.f32.mrf.mxu0
      %v1590 = vadd.f32 %v1363, %v1589
      %v1591 = vpop.f32.mrf.mxu0
      %v1592 = vadd.f32 %v1363, %v1591
      %1593 = vmatmul.bf16.gmra.mxu0 %v1338
      %v1594 = vpop.f32.mrf.mxu0
      %v1595 = vadd.f32 %v1363, %v1594
      %v1596 = vpop.f32.mrf.mxu0
      %v1597 = vadd.f32 %v1363, %v1596
      %1598 = vmatmul.bf16.gmra.mxu0 %v1339
      %v1599 = vpop.f32.mrf.mxu0
      %v1600 = vadd.f32 %v1363, %v1599
      %v1601 = vpop.f32.mrf.mxu0
      %v1602 = vadd.f32 %v1363, %v1601
      %1603 = vmatmul.bf16.gmra.mxu0 %v1340
      %v1604 = vpop.f32.mrf.mxu0
      %v1605 = vadd.f32 %v1363, %v1604
      %v1606 = vpop.f32.mrf.mxu0
      %v1607 = vadd.f32 %v1363, %v1606
      %1608 = vmatmul.bf16.gmra.mxu0 %v1341
      %v1609 = vpop.f32.mrf.mxu0
      %v1610 = vadd.f32 %v1363, %v1609
      %v1611 = vpop.f32.mrf.mxu0
      %v1612 = vadd.f32 %v1363, %v1611
      %1613 = vmatmul.bf16.gmra.mxu0 %v1342
      %v1614 = vpop.f32.mrf.mxu0
      %v1615 = vadd.f32 %v1363, %v1614
      %v1616 = vpop.f32.mrf.mxu0
      %v1617 = vadd.f32 %v1363, %v1616
      %1618 = vmatmul.bf16.gmra.mxu0 %v1343
      %v1619 = vpop.f32.mrf.mxu0
      %v1620 = vadd.f32 %v1363, %v1619
      %v1621 = vpop.f32.mrf.mxu0
      %v1622 = vadd.f32 %v1363, %v1621
      %1623 = vdwg.mxu0
      %vm1624 = vcmp.gt.f32.partialorder %v1456, 0.0
      %vm1625 = vcmp.gt.f32.partialorder %v1545, 0.0
      %vm1626 = vcmp.gt.f32.partialorder %v1458, 0.0
      %vm1627 = vcmp.gt.f32.partialorder %v1547, 0.0
      %vm1628 = vcmp.gt.f32.partialorder %v1461, 0.0
      %vm1629 = vcmp.gt.f32.partialorder %v1550, 0.0
      %vm1630 = vcmp.gt.f32.partialorder %v1463, 0.0
      %vm1631 = vcmp.gt.f32.partialorder %v1552, 0.0
      %vm1632 = vcmp.gt.f32.partialorder %v1466, 0.0
      %vm1633 = vcmp.gt.f32.partialorder %v1555, 0.0
      %vm1634 = vcmp.gt.f32.partialorder %v1468, 0.0
      %vm1635 = vcmp.gt.f32.partialorder %v1557, 0.0
      %vm1636 = vcmp.gt.f32.partialorder %v1471, 0.0
      %vm1637 = vcmp.gt.f32.partialorder %v1560, 0.0
      %vm1638 = vcmp.gt.f32.partialorder %v1473, 0.0
      %vm1639 = vcmp.gt.f32.partialorder %v1562, 0.0
      %vm1640 = vcmp.gt.f32.partialorder %v1476, 0.0
      %vm1641 = vcmp.gt.f32.partialorder %v1565, 0.0
      %vm1642 = vcmp.gt.f32.partialorder %v1478, 0.0
      %vm1643 = vcmp.gt.f32.partialorder %v1567, 0.0
      %vm1644 = vcmp.gt.f32.partialorder %v1481, 0.0
      %vm1645 = vcmp.gt.f32.partialorder %v1570, 0.0
      %vm1646 = vcmp.gt.f32.partialorder %v1483, 0.0
      %vm1647 = vcmp.gt.f32.partialorder %v1572, 0.0
      %vm1648 = vcmp.gt.f32.partialorder %v1486, 0.0
      %vm1649 = vcmp.gt.f32.partialorder %v1575, 0.0
      %vm1650 = vcmp.gt.f32.partialorder %v1488, 0.0
      %vm1651 = vcmp.gt.f32.partialorder %v1577, 0.0
      %vm1652 = vcmp.gt.f32.partialorder %v1491, 0.0
      %vm1653 = vcmp.gt.f32.partialorder %v1580, 0.0
      %vm1654 = vcmp.gt.f32.partialorder %v1493, 0.0
      %vm1655 = vcmp.gt.f32.partialorder %v1582, 0.0
      %vm1656 = vcmp.gt.f32.partialorder %v1496, 0.0
      %vm1657 = vcmp.gt.f32.partialorder %v1585, 0.0
      %vm1658 = vcmp.gt.f32.partialorder %v1498, 0.0
      %vm1659 = vcmp.gt.f32.partialorder %v1587, 0.0
      %vm1660 = vcmp.gt.f32.partialorder %v1501, 0.0
      %vm1661 = vcmp.gt.f32.partialorder %v1590, 0.0
      %vm1662 = vcmp.gt.f32.partialorder %v1503, 0.0
      %vm1663 = vcmp.gt.f32.partialorder %v1592, 0.0
      %vm1664 = vcmp.gt.f32.partialorder %v1506, 0.0
      %vm1665 = vcmp.gt.f32.partialorder %v1595, 0.0
      %vm1666 = vcmp.gt.f32.partialorder %v1508, 0.0
      %vm1667 = vcmp.gt.f32.partialorder %v1597, 0.0
      %vm1668 = vcmp.gt.f32.partialorder %v1511, 0.0
      %vm1669 = vcmp.gt.f32.partialorder %v1600, 0.0
      %vm1670 = vcmp.gt.f32.partialorder %v1513, 0.0
      %vm1671 = vcmp.gt.f32.partialorder %v1602, 0.0
      %vm1672 = vcmp.gt.f32.partialorder %v1516, 0.0
      %vm1673 = vcmp.gt.f32.partialorder %v1605, 0.0
      %vm1674 = vcmp.gt.f32.partialorder %v1518, 0.0
      %vm1675 = vcmp.gt.f32.partialorder %v1607, 0.0
      %vm1676 = vcmp.gt.f32.partialorder %v1521, 0.0
      %vm1677 = vcmp.gt.f32.partialorder %v1610, 0.0
      %vm1678 = vcmp.gt.f32.partialorder %v1523, 0.0
      %vm1679 = vcmp.gt.f32.partialorder %v1612, 0.0
      %vm1680 = vcmp.gt.f32.partialorder %v1526, 0.0
      %vm1681 = vcmp.gt.f32.partialorder %v1615, 0.0
      %vm1682 = vcmp.gt.f32.partialorder %v1528, 0.0
      %vm1683 = vcmp.gt.f32.partialorder %v1617, 0.0
      %vm1684 = vcmp.gt.f32.partialorder %v1531, 0.0
      %vm1685 = vcmp.gt.f32.partialorder %v1620, 0.0
      %vm1686 = vcmp.gt.f32.partialorder %v1533, 0.0
      %vm1687 = vcmp.gt.f32.partialorder %v1622, 0.0
      %v1688 = vmul.f32 %v1456, 0.1
      %v1689 = vmul.f32 %v1545, 0.1
      %v1690 = vmul.f32 %v1458, 0.1
      %v1691 = vmul.f32 %v1547, 0.1
      %v1692 = vmul.f32 %v1461, 0.1
      %v1693 = vmul.f32 %v1550, 0.1
      %v1694 = vmul.f32 %v1463, 0.1
      %v1695 = vmul.f32 %v1552, 0.1
      %v1696 = vmul.f32 %v1466, 0.1
      %v1697 = vmul.f32 %v1555, 0.1
      %v1698 = vmul.f32 %v1468, 0.1
      %v1699 = vmul.f32 %v1557, 0.1
      %v1700 = vmul.f32 %v1471, 0.1
      %v1701 = vmul.f32 %v1560, 0.1
      %v1702 = vmul.f32 %v1473, 0.1
      %v1703 = vmul.f32 %v1562, 0.1
      %v1704 = vmul.f32 %v1476, 0.1
      %v1705 = vmul.f32 %v1565, 0.1
      %v1706 = vmul.f32 %v1478, 0.1
      %v1707 = vmul.f32 %v1567, 0.1
      %v1708 = vmul.f32 %v1481, 0.1
      %v1709 = vmul.f32 %v1570, 0.1
      %v1710 = vmul.f32 %v1483, 0.1
      %v1711 = vmul.f32 %v1572, 0.1
      %v1712 = vmul.f32 %v1486, 0.1
      %v1713 = vmul.f32 %v1575, 0.1
      %v1714 = vmul.f32 %v1488, 0.1
      %v1715 = vmul.f32 %v1577, 0.1
      %v1716 = vmul.f32 %v1491, 0.1
      %v1717 = vmul.f32 %v1580, 0.1
      %v1718 = vmul.f32 %v1493, 0.1
      %v1719 = vmul.f32 %v1582, 0.1
      %v1720 = vmul.f32 %v1496, 0.1
      %v1721 = vmul.f32 %v1585, 0.1
      %v1722 = vmul.f32 %v1498, 0.1
      %v1723 = vmul.f32 %v1587, 0.1
      %v1724 = vmul.f32 %v1501, 0.1
      %v1725 = vmul.f32 %v1590, 0.1
      %v1726 = vmul.f32 %v1503, 0.1
      %v1727 = vmul.f32 %v1592, 0.1
      %v1728 = vmul.f32 %v1506, 0.1
      %v1729 = vmul.f32 %v1595, 0.1
      %v1730 = vmul.f32 %v1508, 0.1
      %v1731 = vmul.f32 %v1597, 0.1
      %v1732 = vmul.f32 %v1511, 0.1
      %v1733 = vmul.f32 %v1600, 0.1
      %v1734 = vmul.f32 %v1513, 0.1
      %v1735 = vmul.f32 %v1602, 0.1
      %v1736 = vmul.f32 %v1516, 0.1
      %v1737 = vmul.f32 %v1605, 0.1
      %v1738 = vmul.f32 %v1518, 0.1
      %v1739 = vmul.f32 %v1607, 0.1
      %v1740 = vmul.f32 %v1521, 0.1
      %v1741 = vmul.f32 %v1610, 0.1
      %v1742 = vmul.f32 %v1523, 0.1
      %v1743 = vmul.f32 %v1612, 0.1
      %v1744 = vmul.f32 %v1526, 0.1
      %v1745 = vmul.f32 %v1615, 0.1
      %v1746 = vmul.f32 %v1528, 0.1
      %v1747 = vmul.f32 %v1617, 0.1
      %v1748 = vmul.f32 %v1531, 0.1
      %v1749 = vmul.f32 %v1620, 0.1
      %v1750 = vmul.f32 %v1533, 0.1
      %v1751 = vmul.f32 %v1622, 0.1
      %v1752 = vsel %vm1624, %v1456, %v1688
      %v1753 = vsel %vm1625, %v1545, %v1689
      %v1754 = vsel %vm1626, %v1458, %v1690
      %v1755 = vsel %vm1627, %v1547, %v1691
      %v1756 = vsel %vm1628, %v1461, %v1692
      %v1757 = vsel %vm1629, %v1550, %v1693
      %v1758 = vsel %vm1630, %v1463, %v1694
      %v1759 = vsel %vm1631, %v1552, %v1695
      %v1760 = vsel %vm1632, %v1466, %v1696
      %v1761 = vsel %vm1633, %v1555, %v1697
      %v1762 = vsel %vm1634, %v1468, %v1698
      %v1763 = vsel %vm1635, %v1557, %v1699
      %v1764 = vsel %vm1636, %v1471, %v1700
      %v1765 = vsel %vm1637, %v1560, %v1701
      %v1766 = vsel %vm1638, %v1473, %v1702
      %v1767 = vsel %vm1639, %v1562, %v1703
      %v1768 = vsel %vm1640, %v1476, %v1704
      %v1769 = vsel %vm1641, %v1565, %v1705
      %v1770 = vsel %vm1642, %v1478, %v1706
      %v1771 = vsel %vm1643, %v1567, %v1707
      %v1772 = vsel %vm1644, %v1481, %v1708
      %v1773 = vsel %vm1645, %v1570, %v1709
      %v1774 = vsel %vm1646, %v1483, %v1710
      %v1775 = vsel %vm1647, %v1572, %v1711
      %v1776 = vsel %vm1648, %v1486, %v1712
      %v1777 = vsel %vm1649, %v1575, %v1713
      %v1778 = vsel %vm1650, %v1488, %v1714
      %v1779 = vsel %vm1651, %v1577, %v1715
      %v1780 = vsel %vm1652, %v1491, %v1716
      %v1781 = vsel %vm1653, %v1580, %v1717
      %v1782 = vsel %vm1654, %v1493, %v1718
      %v1783 = vsel %vm1655, %v1582, %v1719
      %v1784 = vsel %vm1656, %v1496, %v1720
      %v1785 = vsel %vm1657, %v1585, %v1721
      %v1786 = vsel %vm1658, %v1498, %v1722
      %v1787 = vsel %vm1659, %v1587, %v1723
      %v1788 = vsel %vm1660, %v1501, %v1724
      %v1789 = vsel %vm1661, %v1590, %v1725
      %v1790 = vsel %vm1662, %v1503, %v1726
      %v1791 = vsel %vm1663, %v1592, %v1727
      %v1792 = vsel %vm1664, %v1506, %v1728
      %v1793 = vsel %vm1665, %v1595, %v1729
      %v1794 = vsel %vm1666, %v1508, %v1730
      %v1795 = vsel %vm1667, %v1597, %v1731
      %v1796 = vsel %vm1668, %v1511, %v1732
      %v1797 = vsel %vm1669, %v1600, %v1733
      %v1798 = vsel %vm1670, %v1513, %v1734
      %v1799 = vsel %vm1671, %v1602, %v1735
      %v1800 = vsel %vm1672, %v1516, %v1736
      %v1801 = vsel %vm1673, %v1605, %v1737
      %v1802 = vsel %vm1674, %v1518, %v1738
      %v1803 = vsel %vm1675, %v1607, %v1739
      %v1804 = vsel %vm1676, %v1521, %v1740
      %v1805 = vsel %vm1677, %v1610, %v1741
      %v1806 = vsel %vm1678, %v1523, %v1742
      %v1807 = vsel %vm1679, %v1612, %v1743
      %v1808 = vsel %vm1680, %v1526, %v1744
      %v1809 = vsel %vm1681, %v1615, %v1745
      %v1810 = vsel %vm1682, %v1528, %v1746
      %v1811 = vsel %vm1683, %v1617, %v1747
      %v1812 = vsel %vm1684, %v1531, %v1748
      %v1813 = vsel %vm1685, %v1620, %v1749
      %v1814 = vsel %vm1686, %v1533, %v1750
      %v1815 = vsel %vm1687, %v1622, %v1751
      %v1816 = vpack.c.bf16 %v1754, %v1752
      %v1817 = vpack.c.bf16 %v1755, %v1753
      %v1818 = vpack.c.bf16 %v1758, %v1756
      %v1819 = vpack.c.bf16 %v1759, %v1757
      %v1820 = vpack.c.bf16 %v1762, %v1760
      %v1821 = vpack.c.bf16 %v1763, %v1761
      %v1822 = vpack.c.bf16 %v1766, %v1764
      %v1823 = vpack.c.bf16 %v1767, %v1765
      %v1824 = vpack.c.bf16 %v1770, %v1768
      %v1825 = vpack.c.bf16 %v1771, %v1769
      %v1826 = vpack.c.bf16 %v1774, %v1772
      %v1827 = vpack.c.bf16 %v1775, %v1773
      %v1828 = vpack.c.bf16 %v1778, %v1776
      %v1829 = vpack.c.bf16 %v1779, %v1777
      %v1830 = vpack.c.bf16 %v1782, %v1780
      %v1831 = vpack.c.bf16 %v1783, %v1781
      %v1832 = vpack.c.bf16 %v1786, %v1784
      %v1833 = vpack.c.bf16 %v1787, %v1785
      %v1834 = vpack.c.bf16 %v1790, %v1788
      %v1835 = vpack.c.bf16 %v1791, %v1789
      %v1836 = vpack.c.bf16 %v1794, %v1792
      %v1837 = vpack.c.bf16 %v1795, %v1793
      %v1838 = vpack.c.bf16 %v1798, %v1796
      %v1839 = vpack.c.bf16 %v1799, %v1797
      %v1840 = vpack.c.bf16 %v1802, %v1800
      %v1841 = vpack.c.bf16 %v1803, %v1801
      %v1842 = vpack.c.bf16 %v1806, %v1804
      %v1843 = vpack.c.bf16 %v1807, %v1805
      %v1844 = vpack.c.bf16 %v1810, %v1808
      %v1845 = vpack.c.bf16 %v1811, %v1809
      %v1846 = vpack.c.bf16 %v1814, %v1812
      %v1847 = vpack.c.bf16 %v1815, %v1813
      %v1848 = vld [vmem:[%s9] sm:$0xff]
      %v1849 = vld [vmem:[%s9 + $0x8] sm:$0xff]
      %v1850 = vld [vmem:[%s9 + $0x10] sm:$0xff]
      %v1851 = vld [vmem:[%s9 + $0x18] sm:$0xff]
      %v1852 = vld [vmem:[%s9 + $0x20] sm:$0xff]
      %v1853 = vld [vmem:[%s9 + $0x28] sm:$0xff]
      %v1854 = vld [vmem:[%s9 + $0x30] sm:$0xff]
      %v1855 = vld [vmem:[%s9 + $0x38] sm:$0xff]
      %v1856 = vld [vmem:[%s9 + $0x40] sm:$0xff]
      %v1857 = vld [vmem:[%s9 + $0x48] sm:$0xff]
      %v1858 = vld [vmem:[%s9 + $0x50] sm:$0xff]
      %v1859 = vld [vmem:[%s9 + $0x58] sm:$0xff]
      %v1860 = vld [vmem:[%s9 + $0x60] sm:$0xff]
      %v1861 = vld [vmem:[%s9 + $0x68] sm:$0xff]
      %v1862 = vld [vmem:[%s9 + $0x70] sm:$0xff]
      %v1863 = vld [vmem:[%s9 + $0x78] sm:$0xff]
      %v1864 = vld [vmem:[%s9 + $0x80] sm:$0xff]
      %v1865 = vld [vmem:[%s9 + $0x88] sm:$0xff]
      %v1866 = vld [vmem:[%s9 + $0x90] sm:$0xff]
      %v1867 = vld [vmem:[%s9 + $0x98] sm:$0xff]
      %v1868 = vld [vmem:[%s9 + $0xa0] sm:$0xff]
      %v1869 = vld [vmem:[%s9 + $0xa8] sm:$0xff]
      %v1870 = vld [vmem:[%s9 + $0xb0] sm:$0xff]
      %v1871 = vld [vmem:[%s9 + $0xb8] sm:$0xff]
      %v1872 = vld [vmem:[%s9 + $0xc0] sm:$0xff]
      %v1873 = vld [vmem:[%s9 + $0xc8] sm:$0xff]
      %v1874 = vld [vmem:[%s9 + $0xd0] sm:$0xff]
      %v1875 = vld [vmem:[%s9 + $0xd8] sm:$0xff]
      %v1876 = vld [vmem:[%s9 + $0xe0] sm:$0xff]
      %v1877 = vld [vmem:[%s9 + $0xe8] sm:$0xff]
      %v1878 = vld [vmem:[%s9 + $0xf0] sm:$0xff]
      %v1879 = vld [vmem:[%s9 + $0xf8] sm:$0xff]
      %v1880 = vld [vmem:[%s10] sm:$0x3]
      %v1882 = vperm.slane %v1880, 0
      %v1883 = vperm.slane %v1880, 1
      %v1918 = vunpack.c.l.b16 %v1848
      %v1919 = vunpack.c.h.b16 %v1848
      %v1920 = vunpack.c.l.b16 %v1849
      %v1921 = vunpack.c.h.b16 %v1849
      %v1922 = vunpack.c.l.b16 %v1850
      %v1923 = vunpack.c.h.b16 %v1850
      %v1924 = vunpack.c.l.b16 %v1851
      %v1925 = vunpack.c.h.b16 %v1851
      %v1926 = vunpack.c.l.b16 %v1852
      %v1927 = vunpack.c.h.b16 %v1852
      %v1928 = vunpack.c.l.b16 %v1853
      %v1929 = vunpack.c.h.b16 %v1853
      %v1930 = vunpack.c.l.b16 %v1854
      %v1931 = vunpack.c.h.b16 %v1854
      %v1932 = vunpack.c.l.b16 %v1855
      %v1933 = vunpack.c.h.b16 %v1855
      %v1934 = vunpack.c.l.b16 %v1856
      %v1935 = vunpack.c.h.b16 %v1856
      %v1936 = vunpack.c.l.b16 %v1857
      %v1937 = vunpack.c.h.b16 %v1857
      %v1938 = vunpack.c.l.b16 %v1858
      %v1939 = vunpack.c.h.b16 %v1858
      %v1940 = vunpack.c.l.b16 %v1859
      %v1941 = vunpack.c.h.b16 %v1859
      %v1942 = vunpack.c.l.b16 %v1860
      %v1943 = vunpack.c.h.b16 %v1860
      %v1944 = vunpack.c.l.b16 %v1861
      %v1945 = vunpack.c.h.b16 %v1861
      %v1946 = vunpack.c.l.b16 %v1862
      %v1947 = vunpack.c.h.b16 %v1862
      %v1948 = vunpack.c.l.b16 %v1863
      %v1949 = vunpack.c.h.b16 %v1863
      %v1950 = vunpack.c.l.b16 %v1864
      %v1951 = vunpack.c.h.b16 %v1864
      %v1952 = vunpack.c.l.b16 %v1865
      %v1953 = vunpack.c.h.b16 %v1865
      %v1954 = vunpack.c.l.b16 %v1866
      %v1955 = vunpack.c.h.b16 %v1866
      %v1956 = vunpack.c.l.b16 %v1867
      %v1957 = vunpack.c.h.b16 %v1867
      %v1958 = vunpack.c.l.b16 %v1868
      %v1959 = vunpack.c.h.b16 %v1868
      %v1960 = vunpack.c.l.b16 %v1869
      %v1961 = vunpack.c.h.b16 %v1869
      %v1962 = vunpack.c.l.b16 %v1870
      %v1963 = vunpack.c.h.b16 %v1870
      %v1964 = vunpack.c.l.b16 %v1871
      %v1965 = vunpack.c.h.b16 %v1871
      %v1966 = vunpack.c.l.b16 %v1872
      %v1967 = vunpack.c.h.b16 %v1872
      %v1968 = vunpack.c.l.b16 %v1873
      %v1969 = vunpack.c.h.b16 %v1873
      %v1970 = vunpack.c.l.b16 %v1874
      %v1971 = vunpack.c.h.b16 %v1874
      %v1972 = vunpack.c.l.b16 %v1875
      %v1973 = vunpack.c.h.b16 %v1875
      %v1974 = vunpack.c.l.b16 %v1876
      %v1975 = vunpack.c.h.b16 %v1876
      %v1976 = vunpack.c.l.b16 %v1877
      %v1977 = vunpack.c.h.b16 %v1877
      %v1978 = vunpack.c.l.b16 %v1878
      %v1979 = vunpack.c.h.b16 %v1878
      %v1980 = vunpack.c.l.b16 %v1879
      %v1981 = vunpack.c.h.b16 %v1879
      %v1982 = vpack.c.b16 %v1920, %v1918
      %v1983 = vpack.c.b16 %v1921, %v1919
      %v1984 = vpack.c.b16 %v1924, %v1922
      %v1985 = vpack.c.b16 %v1925, %v1923
      %v1986 = vpack.c.b16 %v1928, %v1926
      %v1987 = vpack.c.b16 %v1929, %v1927
      %v1988 = vpack.c.b16 %v1932, %v1930
      %v1989 = vpack.c.b16 %v1933, %v1931
      %v1990 = vpack.c.b16 %v1936, %v1934
      %v1991 = vpack.c.b16 %v1937, %v1935
      %v1992 = vpack.c.b16 %v1940, %v1938
      %v1993 = vpack.c.b16 %v1941, %v1939
      %v1994 = vpack.c.b16 %v1944, %v1942
      %v1995 = vpack.c.b16 %v1945, %v1943
      %v1996 = vpack.c.b16 %v1948, %v1946
      %v1997 = vpack.c.b16 %v1949, %v1947
      %v1998 = vpack.c.b16 %v1952, %v1950
      %v1999 = vpack.c.b16 %v1953, %v1951
      %v2000 = vpack.c.b16 %v1956, %v1954
      %v2001 = vpack.c.b16 %v1957, %v1955
      %v2002 = vpack.c.b16 %v1960, %v1958
      %v2003 = vpack.c.b16 %v1961, %v1959
      %v2004 = vpack.c.b16 %v1964, %v1962
      %v2005 = vpack.c.b16 %v1965, %v1963
      %v2006 = vpack.c.b16 %v1968, %v1966
      %v2007 = vpack.c.b16 %v1969, %v1967
      %v2008 = vpack.c.b16 %v1972, %v1970
      %v2009 = vpack.c.b16 %v1973, %v1971
      %v2010 = vpack.c.b16 %v1976, %v1974
      %v2011 = vpack.c.b16 %v1977, %v1975
      %v2012 = vpack.c.b16 %v1980, %v1978
      %v2013 = vpack.c.b16 %v1981, %v1979
      %2046 = vmatpush.bf16.msra.mxu0 %v1996
      %2047 = vmatpush.bf16.msra.mxu0 %v1994
      %2048 = vmatpush.bf16.msra.mxu0 %v1992
      %2049 = vmatpush.bf16.msra.mxu0 %v1990
      %2050 = vmatpush.bf16.msra.mxu0 %v1988
      %2051 = vmatpush.bf16.msra.mxu0 %v1986
      %2052 = vmatpush.bf16.msra.mxu0 %v1984
      %2053 = vmatpush.bf16.msra.mxu0 %v1982
      %2054 = vmatmul.bf16.gmra.mxu0 %v1816
      %v2055 = vpop.f32.mrf.mxu0
      %v2056 = vadd.f32 %v1882, %v2055
      %v2057 = vpop.f32.mrf.mxu0
      %v2058 = vadd.f32 %v1882, %v2057
      %2059 = vmatmul.bf16.gmra.mxu0 %v1818
      %v2060 = vpop.f32.mrf.mxu0
      %v2061 = vadd.f32 %v1882, %v2060
      %v2062 = vpop.f32.mrf.mxu0
      %v2063 = vadd.f32 %v1882, %v2062
      %2064 = vmatmul.bf16.gmra.mxu0 %v1820
      %v2065 = vpop.f32.mrf.mxu0
      %v2066 = vadd.f32 %v1882, %v2065
      %v2067 = vpop.f32.mrf.mxu0
      %v2068 = vadd.f32 %v1882, %v2067
      %2069 = vmatmul.bf16.gmra.mxu0 %v1822
      %v2070 = vpop.f32.mrf.mxu0
      %v2071 = vadd.f32 %v1882, %v2070
      %v2072 = vpop.f32.mrf.mxu0
      %v2073 = vadd.f32 %v1882, %v2072
      %2074 = vmatmul.bf16.gmra.mxu0 %v1824
      %v2075 = vpop.f32.mrf.mxu0
      %v2076 = vadd.f32 %v1882, %v2075
      %v2077 = vpop.f32.mrf.mxu0
      %v2078 = vadd.f32 %v1882, %v2077
      %2079 = vmatmul.bf16.gmra.mxu0 %v1826
      %v2080 = vpop.f32.mrf.mxu0
      %v2081 = vadd.f32 %v1882, %v2080
      %v2082 = vpop.f32.mrf.mxu0
      %v2083 = vadd.f32 %v1882, %v2082
      %2084 = vmatmul.bf16.gmra.mxu0 %v1828
      %v2085 = vpop.f32.mrf.mxu0
      %v2086 = vadd.f32 %v1882, %v2085
      %v2087 = vpop.f32.mrf.mxu0
      %v2088 = vadd.f32 %v1882, %v2087
      %2089 = vmatmul.bf16.gmra.mxu0 %v1830
      %v2090 = vpop.f32.mrf.mxu0
      %v2091 = vadd.f32 %v1882, %v2090
      %v2092 = vpop.f32.mrf.mxu0
      %v2093 = vadd.f32 %v1882, %v2092
      %2094 = vmatmul.bf16.gmra.mxu0 %v1832
      %v2095 = vpop.f32.mrf.mxu0
      %v2096 = vadd.f32 %v1882, %v2095
      %v2097 = vpop.f32.mrf.mxu0
      %v2098 = vadd.f32 %v1882, %v2097
      %2099 = vmatmul.bf16.gmra.mxu0 %v1834
      %v2100 = vpop.f32.mrf.mxu0
      %v2101 = vadd.f32 %v1882, %v2100
      %v2102 = vpop.f32.mrf.mxu0
      %v2103 = vadd.f32 %v1882, %v2102
      %2104 = vmatmul.bf16.gmra.mxu0 %v1836
      %v2105 = vpop.f32.mrf.mxu0
      %v2106 = vadd.f32 %v1882, %v2105
      %v2107 = vpop.f32.mrf.mxu0
      %v2108 = vadd.f32 %v1882, %v2107
      %2109 = vmatmul.bf16.gmra.mxu0 %v1838
      %v2110 = vpop.f32.mrf.mxu0
      %v2111 = vadd.f32 %v1882, %v2110
      %v2112 = vpop.f32.mrf.mxu0
      %v2113 = vadd.f32 %v1882, %v2112
      %2114 = vmatmul.bf16.gmra.mxu0 %v1840
      %v2115 = vpop.f32.mrf.mxu0
      %v2116 = vadd.f32 %v1882, %v2115
      %v2117 = vpop.f32.mrf.mxu0
      %v2118 = vadd.f32 %v1882, %v2117
      %2119 = vmatmul.bf16.gmra.mxu0 %v1842
      %v2120 = vpop.f32.mrf.mxu0
      %v2121 = vadd.f32 %v1882, %v2120
      %v2122 = vpop.f32.mrf.mxu0
      %v2123 = vadd.f32 %v1882, %v2122
      %2124 = vmatmul.bf16.gmra.mxu0 %v1844
      %v2125 = vpop.f32.mrf.mxu0
      %v2126 = vadd.f32 %v1882, %v2125
      %v2127 = vpop.f32.mrf.mxu0
      %v2128 = vadd.f32 %v1882, %v2127
      %2129 = vmatmul.bf16.gmra.mxu0 %v1846
      %v2130 = vpop.f32.mrf.mxu0
      %v2131 = vadd.f32 %v1882, %v2130
      %v2132 = vpop.f32.mrf.mxu0
      %v2133 = vadd.f32 %v1882, %v2132
      %2134 = vdwg.mxu0
      %2135 = vmatpush.bf16.msra.mxu0 %v2012
      %2136 = vmatpush.bf16.msra.mxu0 %v2010
      %2137 = vmatpush.bf16.msra.mxu0 %v2008
      %2138 = vmatpush.bf16.msra.mxu0 %v2006
      %2139 = vmatpush.bf16.msra.mxu0 %v2004
      %2140 = vmatpush.bf16.msra.mxu0 %v2002
      %2141 = vmatpush.bf16.msra.mxu0 %v2000
      %2142 = vmatpush.bf16.msra.mxu0 %v1998
      %2143 = vmatmul.bf16.gmra.mxu0 %v1817
      %v2144 = vpop.f32.mrf.mxu0
      %v2145 = vadd.f32 %v2056, %v2144
      %v2146 = vpop.f32.mrf.mxu0
      %v2147 = vadd.f32 %v2058, %v2146
      %2148 = vmatmul.bf16.gmra.mxu0 %v1819
      %v2149 = vpop.f32.mrf.mxu0
      %v2150 = vadd.f32 %v2061, %v2149
      %v2151 = vpop.f32.mrf.mxu0
      %v2152 = vadd.f32 %v2063, %v2151
      %2153 = vmatmul.bf16.gmra.mxu0 %v1821
      %v2154 = vpop.f32.mrf.mxu0
      %v2155 = vadd.f32 %v2066, %v2154
      %v2156 = vpop.f32.mrf.mxu0
      %v2157 = vadd.f32 %v2068, %v2156
      %2158 = vmatmul.bf16.gmra.mxu0 %v1823
      %v2159 = vpop.f32.mrf.mxu0
      %v2160 = vadd.f32 %v2071, %v2159
      %v2161 = vpop.f32.mrf.mxu0
      %v2162 = vadd.f32 %v2073, %v2161
      %2163 = vmatmul.bf16.gmra.mxu0 %v1825
      %v2164 = vpop.f32.mrf.mxu0
      %v2165 = vadd.f32 %v2076, %v2164
      %v2166 = vpop.f32.mrf.mxu0
      %v2167 = vadd.f32 %v2078, %v2166
      %2168 = vmatmul.bf16.gmra.mxu0 %v1827
      %v2169 = vpop.f32.mrf.mxu0
      %v2170 = vadd.f32 %v2081, %v2169
      %v2171 = vpop.f32.mrf.mxu0
      %v2172 = vadd.f32 %v2083, %v2171
      %2173 = vmatmul.bf16.gmra.mxu0 %v1829
      %v2174 = vpop.f32.mrf.mxu0
      %v2175 = vadd.f32 %v2086, %v2174
      %v2176 = vpop.f32.mrf.mxu0
      %v2177 = vadd.f32 %v2088, %v2176
      %2178 = vmatmul.bf16.gmra.mxu0 %v1831
      %v2179 = vpop.f32.mrf.mxu0
      %v2180 = vadd.f32 %v2091, %v2179
      %v2181 = vpop.f32.mrf.mxu0
      %v2182 = vadd.f32 %v2093, %v2181
      %2183 = vmatmul.bf16.gmra.mxu0 %v1833
      %v2184 = vpop.f32.mrf.mxu0
      %v2185 = vadd.f32 %v2096, %v2184
      %v2186 = vpop.f32.mrf.mxu0
      %v2187 = vadd.f32 %v2098, %v2186
      %2188 = vmatmul.bf16.gmra.mxu0 %v1835
      %v2189 = vpop.f32.mrf.mxu0
      %v2190 = vadd.f32 %v2101, %v2189
      %v2191 = vpop.f32.mrf.mxu0
      %v2192 = vadd.f32 %v2103, %v2191
      %2193 = vmatmul.bf16.gmra.mxu0 %v1837
      %v2194 = vpop.f32.mrf.mxu0
      %v2195 = vadd.f32 %v2106, %v2194
      %v2196 = vpop.f32.mrf.mxu0
      %v2197 = vadd.f32 %v2108, %v2196
      %2198 = vmatmul.bf16.gmra.mxu0 %v1839
      %v2199 = vpop.f32.mrf.mxu0
      %v2200 = vadd.f32 %v2111, %v2199
      %v2201 = vpop.f32.mrf.mxu0
      %v2202 = vadd.f32 %v2113, %v2201
      %2203 = vmatmul.bf16.gmra.mxu0 %v1841
      %v2204 = vpop.f32.mrf.mxu0
      %v2205 = vadd.f32 %v2116, %v2204
      %v2206 = vpop.f32.mrf.mxu0
      %v2207 = vadd.f32 %v2118, %v2206
      %2208 = vmatmul.bf16.gmra.mxu0 %v1843
      %v2209 = vpop.f32.mrf.mxu0
      %v2210 = vadd.f32 %v2121, %v2209
      %v2211 = vpop.f32.mrf.mxu0
      %v2212 = vadd.f32 %v2123, %v2211
      %2213 = vmatmul.bf16.gmra.mxu0 %v1845
      %v2214 = vpop.f32.mrf.mxu0
      %v2215 = vadd.f32 %v2126, %v2214
      %v2216 = vpop.f32.mrf.mxu0
      %v2217 = vadd.f32 %v2128, %v2216
      %2218 = vmatmul.bf16.gmra.mxu0 %v1847
      %v2219 = vpop.f32.mrf.mxu0
      %v2220 = vadd.f32 %v2131, %v2219
      %v2221 = vpop.f32.mrf.mxu0
      %v2222 = vadd.f32 %v2133, %v2221
      %2223 = vdwg.mxu0
      %2224 = vmatpush.bf16.msra.mxu0 %v1997
      %2225 = vmatpush.bf16.msra.mxu0 %v1995
      %2226 = vmatpush.bf16.msra.mxu0 %v1993
      %2227 = vmatpush.bf16.msra.mxu0 %v1991
      %2228 = vmatpush.bf16.msra.mxu0 %v1989
      %2229 = vmatpush.bf16.msra.mxu0 %v1987
      %2230 = vmatpush.bf16.msra.mxu0 %v1985
      %2231 = vmatpush.bf16.msra.mxu0 %v1983
      %2232 = vmatmul.bf16.gmra.mxu0 %v1816
      %v2233 = vpop.f32.mrf.mxu0
      %v2234 = vadd.f32 %v1883, %v2233
      %v2235 = vpop.f32.mrf.mxu0
      %v2236 = vadd.f32 %v1883, %v2235
      %2237 = vmatmul.bf16.gmra.mxu0 %v1818
      %v2238 = vpop.f32.mrf.mxu0
      %v2239 = vadd.f32 %v1883, %v2238
      %v2240 = vpop.f32.mrf.mxu0
      %v2241 = vadd.f32 %v1883, %v2240
      %2242 = vmatmul.bf16.gmra.mxu0 %v1820
      %v2243 = vpop.f32.mrf.mxu0
      %v2244 = vadd.f32 %v1883, %v2243
      %v2245 = vpop.f32.mrf.mxu0
      %v2246 = vadd.f32 %v1883, %v2245
      %2247 = vmatmul.bf16.gmra.mxu0 %v1822
      %v2248 = vpop.f32.mrf.mxu0
      %v2249 = vadd.f32 %v1883, %v2248
      %v2250 = vpop.f32.mrf.mxu0
      %v2251 = vadd.f32 %v1883, %v2250
      %2252 = vmatmul.bf16.gmra.mxu0 %v1824
      %v2253 = vpop.f32.mrf.mxu0
      %v2254 = vadd.f32 %v1883, %v2253
      %v2255 = vpop.f32.mrf.mxu0
      %v2256 = vadd.f32 %v1883, %v2255
      %2257 = vmatmul.bf16.gmra.mxu0 %v1826
      %v2258 = vpop.f32.mrf.mxu0
      %v2259 = vadd.f32 %v1883, %v2258
      %v2260 = vpop.f32.mrf.mxu0
      %v2261 = vadd.f32 %v1883, %v2260
      %2262 = vmatmul.bf16.gmra.mxu0 %v1828
      %v2263 = vpop.f32.mrf.mxu0
      %v2264 = vadd.f32 %v1883, %v2263
      %v2265 = vpop.f32.mrf.mxu0
      %v2266 = vadd.f32 %v1883, %v2265
      %2267 = vmatmul.bf16.gmra.mxu0 %v1830
      %v2268 = vpop.f32.mrf.mxu0
      %v2269 = vadd.f32 %v1883, %v2268
      %v2270 = vpop.f32.mrf.mxu0
      %v2271 = vadd.f32 %v1883, %v2270
      %2272 = vmatmul.bf16.gmra.mxu0 %v1832
      %v2273 = vpop.f32.mrf.mxu0
      %v2274 = vadd.f32 %v1883, %v2273
      %v2275 = vpop.f32.mrf.mxu0
      %v2276 = vadd.f32 %v1883, %v2275
      %2277 = vmatmul.bf16.gmra.mxu0 %v1834
      %v2278 = vpop.f32.mrf.mxu0
      %v2279 = vadd.f32 %v1883, %v2278
      %v2280 = vpop.f32.mrf.mxu0
      %v2281 = vadd.f32 %v1883, %v2280
      %2282 = vmatmul.bf16.gmra.mxu0 %v1836
      %v2283 = vpop.f32.mrf.mxu0
      %v2284 = vadd.f32 %v1883, %v2283
      %v2285 = vpop.f32.mrf.mxu0
      %v2286 = vadd.f32 %v1883, %v2285
      %2287 = vmatmul.bf16.gmra.mxu0 %v1838
      %v2288 = vpop.f32.mrf.mxu0
      %v2289 = vadd.f32 %v1883, %v2288
      %v2290 = vpop.f32.mrf.mxu0
      %v2291 = vadd.f32 %v1883, %v2290
      %2292 = vmatmul.bf16.gmra.mxu0 %v1840
      %v2293 = vpop.f32.mrf.mxu0
      %v2294 = vadd.f32 %v1883, %v2293
      %v2295 = vpop.f32.mrf.mxu0
      %v2296 = vadd.f32 %v1883, %v2295
      %2297 = vmatmul.bf16.gmra.mxu0 %v1842
      %v2298 = vpop.f32.mrf.mxu0
      %v2299 = vadd.f32 %v1883, %v2298
      %v2300 = vpop.f32.mrf.mxu0
      %v2301 = vadd.f32 %v1883, %v2300
      %2302 = vmatmul.bf16.gmra.mxu0 %v1844
      %v2303 = vpop.f32.mrf.mxu0
      %v2304 = vadd.f32 %v1883, %v2303
      %v2305 = vpop.f32.mrf.mxu0
      %v2306 = vadd.f32 %v1883, %v2305
      %2307 = vmatmul.bf16.gmra.mxu0 %v1846
      %v2308 = vpop.f32.mrf.mxu0
      %v2309 = vadd.f32 %v1883, %v2308
      %v2310 = vpop.f32.mrf.mxu0
      %v2311 = vadd.f32 %v1883, %v2310
      %2312 = vdwg.mxu0
      %2313 = vmatpush.bf16.msra.mxu0 %v2013
      %2314 = vmatpush.bf16.msra.mxu0 %v2011
      %2315 = vmatpush.bf16.msra.mxu0 %v2009
      %2316 = vmatpush.bf16.msra.mxu0 %v2007
      %2317 = vmatpush.bf16.msra.mxu0 %v2005
      %2318 = vmatpush.bf16.msra.mxu0 %v2003
      %2319 = vmatpush.bf16.msra.mxu0 %v2001
      %2320 = vmatpush.bf16.msra.mxu0 %v1999
      %2321 = vmatmul.bf16.gmra.mxu0 %v1817
      %v2322 = vpop.f32.mrf.mxu0
      %v2323 = vadd.f32 %v2234, %v2322
      %v2324 = vpop.f32.mrf.mxu0
      %v2325 = vadd.f32 %v2236, %v2324
      %2326 = vmatmul.bf16.gmra.mxu0 %v1819
      %v2327 = vpop.f32.mrf.mxu0
      %v2328 = vadd.f32 %v2239, %v2327
      %v2329 = vpop.f32.mrf.mxu0
      %v2330 = vadd.f32 %v2241, %v2329
      %2331 = vmatmul.bf16.gmra.mxu0 %v1821
      %v2332 = vpop.f32.mrf.mxu0
      %v2333 = vadd.f32 %v2244, %v2332
      %v2334 = vpop.f32.mrf.mxu0
      %v2335 = vadd.f32 %v2246, %v2334
      %2336 = vmatmul.bf16.gmra.mxu0 %v1823
      %v2337 = vpop.f32.mrf.mxu0
      %v2338 = vadd.f32 %v2249, %v2337
      %v2339 = vpop.f32.mrf.mxu0
      %v2340 = vadd.f32 %v2251, %v2339
      %2341 = vmatmul.bf16.gmra.mxu0 %v1825
      %v2342 = vpop.f32.mrf.mxu0
      %v2343 = vadd.f32 %v2254, %v2342
      %v2344 = vpop.f32.mrf.mxu0
      %v2345 = vadd.f32 %v2256, %v2344
      %2346 = vmatmul.bf16.gmra.mxu0 %v1827
      %v2347 = vpop.f32.mrf.mxu0
      %v2348 = vadd.f32 %v2259, %v2347
      %v2349 = vpop.f32.mrf.mxu0
      %v2350 = vadd.f32 %v2261, %v2349
      %2351 = vmatmul.bf16.gmra.mxu0 %v1829
      %v2352 = vpop.f32.mrf.mxu0
      %v2353 = vadd.f32 %v2264, %v2352
      %v2354 = vpop.f32.mrf.mxu0
      %v2355 = vadd.f32 %v2266, %v2354
      %2356 = vmatmul.bf16.gmra.mxu0 %v1831
      %v2357 = vpop.f32.mrf.mxu0
      %v2358 = vadd.f32 %v2269, %v2357
      %v2359 = vpop.f32.mrf.mxu0
      %v2360 = vadd.f32 %v2271, %v2359
      %2361 = vmatmul.bf16.gmra.mxu0 %v1833
      %v2362 = vpop.f32.mrf.mxu0
      %v2363 = vadd.f32 %v2274, %v2362
      %v2364 = vpop.f32.mrf.mxu0
      %v2365 = vadd.f32 %v2276, %v2364
      %2366 = vmatmul.bf16.gmra.mxu0 %v1835
      %v2367 = vpop.f32.mrf.mxu0
      %v2368 = vadd.f32 %v2279, %v2367
      %v2369 = vpop.f32.mrf.mxu0
      %v2370 = vadd.f32 %v2281, %v2369
      %2371 = vmatmul.bf16.gmra.mxu0 %v1837
      %v2372 = vpop.f32.mrf.mxu0
      %v2373 = vadd.f32 %v2284, %v2372
      %v2374 = vpop.f32.mrf.mxu0
      %v2375 = vadd.f32 %v2286, %v2374
      %2376 = vmatmul.bf16.gmra.mxu0 %v1839
      %v2377 = vpop.f32.mrf.mxu0
      %v2378 = vadd.f32 %v2289, %v2377
      %v2379 = vpop.f32.mrf.mxu0
      %v2380 = vadd.f32 %v2291, %v2379
      %2381 = vmatmul.bf16.gmra.mxu0 %v1841
      %v2382 = vpop.f32.mrf.mxu0
      %v2383 = vadd.f32 %v2294, %v2382
      %v2384 = vpop.f32.mrf.mxu0
      %v2385 = vadd.f32 %v2296, %v2384
      %2386 = vmatmul.bf16.gmra.mxu0 %v1843
      %v2387 = vpop.f32.mrf.mxu0
      %v2388 = vadd.f32 %v2299, %v2387
      %v2389 = vpop.f32.mrf.mxu0
      %v2390 = vadd.f32 %v2301, %v2389
      %2391 = vmatmul.bf16.gmra.mxu0 %v1845
      %v2392 = vpop.f32.mrf.mxu0
      %v2393 = vadd.f32 %v2304, %v2392
      %v2394 = vpop.f32.mrf.mxu0
      %v2395 = vadd.f32 %v2306, %v2394
      %2396 = vmatmul.bf16.gmra.mxu0 %v1847
      %v2397 = vpop.f32.mrf.mxu0
      %v2398 = vadd.f32 %v2309, %v2397
      %v2399 = vpop.f32.mrf.mxu0
      %v2400 = vadd.f32 %v2311, %v2399
      %2401 = vdwg.mxu0
      %vm2402 = vcmp.gt.f32.partialorder %v2145, 0.0
      %vm2403 = vcmp.gt.f32.partialorder %v2323, 0.0
      %vm2404 = vcmp.gt.f32.partialorder %v2147, 0.0
      %vm2405 = vcmp.gt.f32.partialorder %v2325, 0.0
      %vm2406 = vcmp.gt.f32.partialorder %v2150, 0.0
      %vm2407 = vcmp.gt.f32.partialorder %v2328, 0.0
      %vm2408 = vcmp.gt.f32.partialorder %v2152, 0.0
      %vm2409 = vcmp.gt.f32.partialorder %v2330, 0.0
      %vm2410 = vcmp.gt.f32.partialorder %v2155, 0.0
      %vm2411 = vcmp.gt.f32.partialorder %v2333, 0.0
      %vm2412 = vcmp.gt.f32.partialorder %v2157, 0.0
      %vm2413 = vcmp.gt.f32.partialorder %v2335, 0.0
      %vm2414 = vcmp.gt.f32.partialorder %v2160, 0.0
      %vm2415 = vcmp.gt.f32.partialorder %v2338, 0.0
      %vm2416 = vcmp.gt.f32.partialorder %v2162, 0.0
      %vm2417 = vcmp.gt.f32.partialorder %v2340, 0.0
      %vm2418 = vcmp.gt.f32.partialorder %v2165, 0.0
      %vm2419 = vcmp.gt.f32.partialorder %v2343, 0.0
      %vm2420 = vcmp.gt.f32.partialorder %v2167, 0.0
      %vm2421 = vcmp.gt.f32.partialorder %v2345, 0.0
      %vm2422 = vcmp.gt.f32.partialorder %v2170, 0.0
      %vm2423 = vcmp.gt.f32.partialorder %v2348, 0.0
      %vm2424 = vcmp.gt.f32.partialorder %v2172, 0.0
      %vm2425 = vcmp.gt.f32.partialorder %v2350, 0.0
      %vm2426 = vcmp.gt.f32.partialorder %v2175, 0.0
      %vm2427 = vcmp.gt.f32.partialorder %v2353, 0.0
      %vm2428 = vcmp.gt.f32.partialorder %v2177, 0.0
      %vm2429 = vcmp.gt.f32.partialorder %v2355, 0.0
      %vm2430 = vcmp.gt.f32.partialorder %v2180, 0.0
      %vm2431 = vcmp.gt.f32.partialorder %v2358, 0.0
      %vm2432 = vcmp.gt.f32.partialorder %v2182, 0.0
      %vm2433 = vcmp.gt.f32.partialorder %v2360, 0.0
      %vm2434 = vcmp.gt.f32.partialorder %v2185, 0.0
      %vm2435 = vcmp.gt.f32.partialorder %v2363, 0.0
      %vm2436 = vcmp.gt.f32.partialorder %v2187, 0.0
      %vm2437 = vcmp.gt.f32.partialorder %v2365, 0.0
      %vm2438 = vcmp.gt.f32.partialorder %v2190, 0.0
      %vm2439 = vcmp.gt.f32.partialorder %v2368, 0.0
      %vm2440 = vcmp.gt.f32.partialorder %v2192, 0.0
      %vm2441 = vcmp.gt.f32.partialorder %v2370, 0.0
      %vm2442 = vcmp.gt.f32.partialorder %v2195, 0.0
      %vm2443 = vcmp.gt.f32.partialorder %v2373, 0.0
      %vm2444 = vcmp.gt.f32.partialorder %v2197, 0.0
      %vm2445 = vcmp.gt.f32.partialorder %v2375, 0.0
      %vm2446 = vcmp.gt.f32.partialorder %v2200, 0.0
      %vm2447 = vcmp.gt.f32.partialorder %v2378, 0.0
      %vm2448 = vcmp.gt.f32.partialorder %v2202, 0.0
      %vm2449 = vcmp.gt.f32.partialorder %v2380, 0.0
      %vm2450 = vcmp.gt.f32.partialorder %v2205, 0.0
      %vm2451 = vcmp.gt.f32.partialorder %v2383, 0.0
      %vm2452 = vcmp.gt.f32.partialorder %v2207, 0.0
      %vm2453 = vcmp.gt.f32.partialorder %v2385, 0.0
      %vm2454 = vcmp.gt.f32.partialorder %v2210, 0.0
      %vm2455 = vcmp.gt.f32.partialorder %v2388, 0.0
      %vm2456 = vcmp.gt.f32.partialorder %v2212, 0.0
      %vm2457 = vcmp.gt.f32.partialorder %v2390, 0.0
      %vm2458 = vcmp.gt.f32.partialorder %v2215, 0.0
      %vm2459 = vcmp.gt.f32.partialorder %v2393, 0.0
      %vm2460 = vcmp.gt.f32.partialorder %v2217, 0.0
      %vm2461 = vcmp.gt.f32.partialorder %v2395, 0.0
      %vm2462 = vcmp.gt.f32.partialorder %v2220, 0.0
      %vm2463 = vcmp.gt.f32.partialorder %v2398, 0.0
      %vm2464 = vcmp.gt.f32.partialorder %v2222, 0.0
      %vm2465 = vcmp.gt.f32.partialorder %v2400, 0.0
      %v2466 = vmul.f32 %v2145, 0.1
      %v2467 = vmul.f32 %v2323, 0.1
      %v2468 = vmul.f32 %v2147, 0.1
      %v2469 = vmul.f32 %v2325, 0.1
      %v2470 = vmul.f32 %v2150, 0.1
      %v2471 = vmul.f32 %v2328, 0.1
      %v2472 = vmul.f32 %v2152, 0.1
      %v2473 = vmul.f32 %v2330, 0.1
      %v2474 = vmul.f32 %v2155, 0.1
      %v2475 = vmul.f32 %v2333, 0.1
      %v2476 = vmul.f32 %v2157, 0.1
      %v2477 = vmul.f32 %v2335, 0.1
      %v2478 = vmul.f32 %v2160, 0.1
      %v2479 = vmul.f32 %v2338, 0.1
      %v2480 = vmul.f32 %v2162, 0.1
      %v2481 = vmul.f32 %v2340, 0.1
      %v2482 = vmul.f32 %v2165, 0.1
      %v2483 = vmul.f32 %v2343, 0.1
      %v2484 = vmul.f32 %v2167, 0.1
      %v2485 = vmul.f32 %v2345, 0.1
      %v2486 = vmul.f32 %v2170, 0.1
      %v2487 = vmul.f32 %v2348, 0.1
      %v2488 = vmul.f32 %v2172, 0.1
      %v2489 = vmul.f32 %v2350, 0.1
      %v2490 = vmul.f32 %v2175, 0.1
      %v2491 = vmul.f32 %v2353, 0.1
      %v2492 = vmul.f32 %v2177, 0.1
      %v2493 = vmul.f32 %v2355, 0.1
      %v2494 = vmul.f32 %v2180, 0.1
      %v2495 = vmul.f32 %v2358, 0.1
      %v2496 = vmul.f32 %v2182, 0.1
      %v2497 = vmul.f32 %v2360, 0.1
      %v2498 = vmul.f32 %v2185, 0.1
      %v2499 = vmul.f32 %v2363, 0.1
      %v2500 = vmul.f32 %v2187, 0.1
      %v2501 = vmul.f32 %v2365, 0.1
      %v2502 = vmul.f32 %v2190, 0.1
      %v2503 = vmul.f32 %v2368, 0.1
      %v2504 = vmul.f32 %v2192, 0.1
      %v2505 = vmul.f32 %v2370, 0.1
      %v2506 = vmul.f32 %v2195, 0.1
      %v2507 = vmul.f32 %v2373, 0.1
      %v2508 = vmul.f32 %v2197, 0.1
      %v2509 = vmul.f32 %v2375, 0.1
      %v2510 = vmul.f32 %v2200, 0.1
      %v2511 = vmul.f32 %v2378, 0.1
      %v2512 = vmul.f32 %v2202, 0.1
      %v2513 = vmul.f32 %v2380, 0.1
      %v2514 = vmul.f32 %v2205, 0.1
      %v2515 = vmul.f32 %v2383, 0.1
      %v2516 = vmul.f32 %v2207, 0.1
      %v2517 = vmul.f32 %v2385, 0.1
      %v2518 = vmul.f32 %v2210, 0.1
      %v2519 = vmul.f32 %v2388, 0.1
      %v2520 = vmul.f32 %v2212, 0.1
      %v2521 = vmul.f32 %v2390, 0.1
      %v2522 = vmul.f32 %v2215, 0.1
      %v2523 = vmul.f32 %v2393, 0.1
      %v2524 = vmul.f32 %v2217, 0.1
      %v2525 = vmul.f32 %v2395, 0.1
      %v2526 = vmul.f32 %v2220, 0.1
      %v2527 = vmul.f32 %v2398, 0.1
      %v2528 = vmul.f32 %v2222, 0.1
      %v2529 = vmul.f32 %v2400, 0.1
      %v2530 = vsel %vm2402, %v2145, %v2466
      %v2531 = vsel %vm2403, %v2323, %v2467
      %v2532 = vsel %vm2404, %v2147, %v2468
      %v2533 = vsel %vm2405, %v2325, %v2469
      %v2534 = vsel %vm2406, %v2150, %v2470
      %v2535 = vsel %vm2407, %v2328, %v2471
      %v2536 = vsel %vm2408, %v2152, %v2472
      %v2537 = vsel %vm2409, %v2330, %v2473
      %v2538 = vsel %vm2410, %v2155, %v2474
      %v2539 = vsel %vm2411, %v2333, %v2475
      %v2540 = vsel %vm2412, %v2157, %v2476
      %v2541 = vsel %vm2413, %v2335, %v2477
      %v2542 = vsel %vm2414, %v2160, %v2478
      %v2543 = vsel %vm2415, %v2338, %v2479
      %v2544 = vsel %vm2416, %v2162, %v2480
      %v2545 = vsel %vm2417, %v2340, %v2481
      %v2546 = vsel %vm2418, %v2165, %v2482
      %v2547 = vsel %vm2419, %v2343, %v2483
      %v2548 = vsel %vm2420, %v2167, %v2484
      %v2549 = vsel %vm2421, %v2345, %v2485
      %v2550 = vsel %vm2422, %v2170, %v2486
      %v2551 = vsel %vm2423, %v2348, %v2487
      %v2552 = vsel %vm2424, %v2172, %v2488
      %v2553 = vsel %vm2425, %v2350, %v2489
      %v2554 = vsel %vm2426, %v2175, %v2490
      %v2555 = vsel %vm2427, %v2353, %v2491
      %v2556 = vsel %vm2428, %v2177, %v2492
      %v2557 = vsel %vm2429, %v2355, %v2493
      %v2558 = vsel %vm2430, %v2180, %v2494
      %v2559 = vsel %vm2431, %v2358, %v2495
      %v2560 = vsel %vm2432, %v2182, %v2496
      %v2561 = vsel %vm2433, %v2360, %v2497
      %v2562 = vsel %vm2434, %v2185, %v2498
      %v2563 = vsel %vm2435, %v2363, %v2499
      %v2564 = vsel %vm2436, %v2187, %v2500
      %v2565 = vsel %vm2437, %v2365, %v2501
      %v2566 = vsel %vm2438, %v2190, %v2502
      %v2567 = vsel %vm2439, %v2368, %v2503
      %v2568 = vsel %vm2440, %v2192, %v2504
      %v2569 = vsel %vm2441, %v2370, %v2505
      %v2570 = vsel %vm2442, %v2195, %v2506
      %v2571 = vsel %vm2443, %v2373, %v2507
      %v2572 = vsel %vm2444, %v2197, %v2508
      %v2573 = vsel %vm2445, %v2375, %v2509
      %v2574 = vsel %vm2446, %v2200, %v2510
      %v2575 = vsel %vm2447, %v2378, %v2511
      %v2576 = vsel %vm2448, %v2202, %v2512
      %v2577 = vsel %vm2449, %v2380, %v2513
      %v2578 = vsel %vm2450, %v2205, %v2514
      %v2579 = vsel %vm2451, %v2383, %v2515
      %v2580 = vsel %vm2452, %v2207, %v2516
      %v2581 = vsel %vm2453, %v2385, %v2517
      %v2582 = vsel %vm2454, %v2210, %v2518
      %v2583 = vsel %vm2455, %v2388, %v2519
      %v2584 = vsel %vm2456, %v2212, %v2520
      %v2585 = vsel %vm2457, %v2390, %v2521
      %v2586 = vsel %vm2458, %v2215, %v2522
      %v2587 = vsel %vm2459, %v2393, %v2523
      %v2588 = vsel %vm2460, %v2217, %v2524
      %v2589 = vsel %vm2461, %v2395, %v2525
      %v2590 = vsel %vm2462, %v2220, %v2526
      %v2591 = vsel %vm2463, %v2398, %v2527
      %v2592 = vsel %vm2464, %v2222, %v2528
      %v2593 = vsel %vm2465, %v2400, %v2529
      %v2594 = vpack.c.bf16 %v2532, %v2530
      %v2595 = vpack.c.bf16 %v2533, %v2531
      %v2596 = vpack.c.bf16 %v2536, %v2534
      %v2597 = vpack.c.bf16 %v2537, %v2535
      %v2598 = vpack.c.bf16 %v2540, %v2538
      %v2599 = vpack.c.bf16 %v2541, %v2539
      %v2600 = vpack.c.bf16 %v2544, %v2542
      %v2601 = vpack.c.bf16 %v2545, %v2543
      %v2602 = vpack.c.bf16 %v2548, %v2546
      %v2603 = vpack.c.bf16 %v2549, %v2547
      %v2604 = vpack.c.bf16 %v2552, %v2550
      %v2605 = vpack.c.bf16 %v2553, %v2551
      %v2606 = vpack.c.bf16 %v2556, %v2554
      %v2607 = vpack.c.bf16 %v2557, %v2555
      %v2608 = vpack.c.bf16 %v2560, %v2558
      %v2609 = vpack.c.bf16 %v2561, %v2559
      %v2610 = vpack.c.bf16 %v2564, %v2562
      %v2611 = vpack.c.bf16 %v2565, %v2563
      %v2612 = vpack.c.bf16 %v2568, %v2566
      %v2613 = vpack.c.bf16 %v2569, %v2567
      %v2614 = vpack.c.bf16 %v2572, %v2570
      %v2615 = vpack.c.bf16 %v2573, %v2571
      %v2616 = vpack.c.bf16 %v2576, %v2574
      %v2617 = vpack.c.bf16 %v2577, %v2575
      %v2618 = vpack.c.bf16 %v2580, %v2578
      %v2619 = vpack.c.bf16 %v2581, %v2579
      %v2620 = vpack.c.bf16 %v2584, %v2582
      %v2621 = vpack.c.bf16 %v2585, %v2583
      %v2622 = vpack.c.bf16 %v2588, %v2586
      %v2623 = vpack.c.bf16 %v2589, %v2587
      %v2624 = vpack.c.bf16 %v2592, %v2590
      %v2625 = vpack.c.bf16 %v2593, %v2591
      %v2626 = vld [vmem:[%s11] sm:$0xff]
      %v2627 = vld [vmem:[%s11 + $0x8] sm:$0xf]
      %v2628 = vld [vmem:[%s11 + $0xc] sm:$0xff]
      %v2629 = vld [vmem:[%s11 + $0x14] sm:$0xf]
      %v2630 = vld [vmem:[%s11 + $0x18] sm:$0xff]
      %v2631 = vld [vmem:[%s11 + $0x20] sm:$0xf]
      %v2632 = vld [vmem:[%s11 + $0x24] sm:$0xff]
      %v2633 = vld [vmem:[%s11 + $0x2c] sm:$0xf]
      %v2634 = vld [vmem:[%s11 + $0x30] sm:$0xff]
      %v2635 = vld [vmem:[%s11 + $0x38] sm:$0xf]
      %v2636 = vld [vmem:[%s11 + $0x3c] sm:$0xff]
      %v2637 = vld [vmem:[%s11 + $0x44] sm:$0xf]
      %v2638 = vld [vmem:[%s11 + $0x48] sm:$0xff]
      %v2639 = vld [vmem:[%s11 + $0x50] sm:$0xf]
      %v2640 = vld [vmem:[%s11 + $0x54] sm:$0xff]
      %v2641 = vld [vmem:[%s11 + $0x5c] sm:$0xf]
      %v2642 = vld [vmem:[%s11 + $0x60] sm:$0xff]
      %v2643 = vld [vmem:[%s11 + $0x68] sm:$0xf]
      %v2644 = vld [vmem:[%s11 + $0x6c] sm:$0xff]
      %v2645 = vld [vmem:[%s11 + $0x74] sm:$0xf]
      %v2646 = vld [vmem:[%s11 + $0x78] sm:$0xff]
      %v2647 = vld [vmem:[%s11 + $0x80] sm:$0xf]
      %v2648 = vld [vmem:[%s11 + $0x84] sm:$0xff]
      %v2649 = vld [vmem:[%s11 + $0x8c] sm:$0xf]
      %v2650 = vld [vmem:[%s11 + $0x90] sm:$0xff]
      %v2651 = vld [vmem:[%s11 + $0x98] sm:$0xf]
      %v2652 = vld [vmem:[%s11 + $0x9c] sm:$0xff]
      %v2653 = vld [vmem:[%s11 + $0xa4] sm:$0xf]
      %v2654 = vld [vmem:[%s11 + $0xa8] sm:$0xff]
      %v2655 = vld [vmem:[%s11 + $0xb0] sm:$0xf]
      %v2656 = vld [vmem:[%s11 + $0xb4] sm:$0xff]
      %v2657 = vld [vmem:[%s11 + $0xbc] sm:$0xf]
      %v2658 = vld [vmem:[%s11 + $0xc0] sm:$0xff]
      %v2659 = vld [vmem:[%s11 + $0xc8] sm:$0xf]
      %v2660 = vld [vmem:[%s11 + $0xcc] sm:$0xff]
      %v2661 = vld [vmem:[%s11 + $0xd4] sm:$0xf]
      %v2662 = vld [vmem:[%s11 + $0xd8] sm:$0xff]
      %v2663 = vld [vmem:[%s11 + $0xe0] sm:$0xf]
      %v2664 = vld [vmem:[%s11 + $0xe4] sm:$0xff]
      %v2665 = vld [vmem:[%s11 + $0xec] sm:$0xf]
      %v2666 = vld [vmem:[%s11 + $0xf0] sm:$0xff]
      %v2667 = vld [vmem:[%s11 + $0xf8] sm:$0xf]
      %v2668 = vld [vmem:[%s11 + $0xfc] sm:$0xff]
      %v2669 = vld [vmem:[%s11 + $0x104] sm:$0xf]
      %v2670 = vld [vmem:[%s11 + $0x108] sm:$0xff]
      %v2671 = vld [vmem:[%s11 + $0x110] sm:$0xf]
      %v2672 = vld [vmem:[%s11 + $0x114] sm:$0xff]
      %v2673 = vld [vmem:[%s11 + $0x11c] sm:$0xf]
      %v2674 = vld [vmem:[%s11 + $0x120] sm:$0xff]
      %v2675 = vld [vmem:[%s11 + $0x128] sm:$0xf]
      %v2676 = vld [vmem:[%s11 + $0x12c] sm:$0xff]
      %v2677 = vld [vmem:[%s11 + $0x134] sm:$0xf]
      %v2678 = vld [vmem:[%s11 + $0x138] sm:$0xff]
      %v2679 = vld [vmem:[%s11 + $0x140] sm:$0xf]
      %v2680 = vld [vmem:[%s11 + $0x144] sm:$0xff]
      %v2681 = vld [vmem:[%s11 + $0x14c] sm:$0xf]
      %v2682 = vld [vmem:[%s11 + $0x150] sm:$0xff]
      %v2683 = vld [vmem:[%s11 + $0x158] sm:$0xf]
      %v2684 = vld [vmem:[%s11 + $0x15c] sm:$0xff]
      %v2685 = vld [vmem:[%s11 + $0x164] sm:$0xf]
      %v2686 = vld [vmem:[%s11 + $0x168] sm:$0xff]
      %v2687 = vld [vmem:[%s11 + $0x170] sm:$0xf]
      %v2688 = vld [vmem:[%s11 + $0x174] sm:$0xff]
      %v2689 = vld [vmem:[%s11 + $0x17c] sm:$0xf]
      %v2690 = vld [vmem:[%s12] sm:$0x7]
      %v2692 = vperm.slane %v2690, 0
      %v2693 = vperm.slane %v2690, 1
      %v2694 = vperm.slane %v2690, 2
      %v2762 = vunpack.c.l.b16 %v2626
      %v2763 = vunpack.c.h.b16 %v2626
      %v2764 = vunpack.c.l.b16 %v2627
      %v2765 = vunpack.c.l.b16 %v2628
      %v2766 = vunpack.c.h.b16 %v2628
      %v2767 = vunpack.c.l.b16 %v2629
      %v2768 = vunpack.c.l.b16 %v2630
      %v2769 = vunpack.c.h.b16 %v2630
      %v2770 = vunpack.c.l.b16 %v2631
      %v2771 = vunpack.c.l.b16 %v2632
      %v2772 = vunpack.c.h.b16 %v2632
      %v2773 = vunpack.c.l.b16 %v2633
      %v2774 = vunpack.c.l.b16 %v2634
      %v2775 = vunpack.c.h.b16 %v2634
      %v2776 = vunpack.c.l.b16 %v2635
      %v2777 = vunpack.c.l.b16 %v2636
      %v2778 = vunpack.c.h.b16 %v2636
      %v2779 = vunpack.c.l.b16 %v2637
      %v2780 = vunpack.c.l.b16 %v2638
      %v2781 = vunpack.c.h.b16 %v2638
      %v2782 = vunpack.c.l.b16 %v2639
      %v2783 = vunpack.c.l.b16 %v2640
      %v2784 = vunpack.c.h.b16 %v2640
      %v2785 = vunpack.c.l.b16 %v2641
      %v2786 = vunpack.c.l.b16 %v2642
      %v2787 = vunpack.c.h.b16 %v2642
      %v2788 = vunpack.c.l.b16 %v2643
      %v2789 = vunpack.c.l.b16 %v2644
      %v2790 = vunpack.c.h.b16 %v2644
      %v2791 = vunpack.c.l.b16 %v2645
      %v2792 = vunpack.c.l.b16 %v2646
      %v2793 = vunpack.c.h.b16 %v2646
      %v2794 = vunpack.c.l.b16 %v2647
      %v2795 = vunpack.c.l.b16 %v2648
      %v2796 = vunpack.c.h.b16 %v2648
      %v2797 = vunpack.c.l.b16 %v2649
      %v2798 = vunpack.c.l.b16 %v2650
      %v2799 = vunpack.c.h.b16 %v2650
      %v2800 = vunpack.c.l.b16 %v2651
      %v2801 = vunpack.c.l.b16 %v2652
      %v2802 = vunpack.c.h.b16 %v2652
      %v2803 = vunpack.c.l.b16 %v2653
      %v2804 = vunpack.c.l.b16 %v2654
      %v2805 = vunpack.c.h.b16 %v2654
      %v2806 = vunpack.c.l.b16 %v2655
      %v2807 = vunpack.c.l.b16 %v2656
      %v2808 = vunpack.c.h.b16 %v2656
      %v2809 = vunpack.c.l.b16 %v2657
      %v2810 = vunpack.c.l.b16 %v2658
      %v2811 = vunpack.c.h.b16 %v2658
      %v2812 = vunpack.c.l.b16 %v2659
      %v2813 = vunpack.c.l.b16 %v2660
      %v2814 = vunpack.c.h.b16 %v2660
      %v2815 = vunpack.c.l.b16 %v2661
      %v2816 = vunpack.c.l.b16 %v2662
      %v2817 = vunpack.c.h.b16 %v2662
      %v2818 = vunpack.c.l.b16 %v2663
      %v2819 = vunpack.c.l.b16 %v2664
      %v2820 = vunpack.c.h.b16 %v2664
      %v2821 = vunpack.c.l.b16 %v2665
      %v2822 = vunpack.c.l.b16 %v2666
      %v2823 = vunpack.c.h.b16 %v2666
      %v2824 = vunpack.c.l.b16 %v2667
      %v2825 = vunpack.c.l.b16 %v2668
      %v2826 = vunpack.c.h.b16 %v2668
      %v2827 = vunpack.c.l.b16 %v2669
      %v2828 = vunpack.c.l.b16 %v2670
      %v2829 = vunpack.c.h.b16 %v2670
      %v2830 = vunpack.c.l.b16 %v2671
      %v2831 = vunpack.c.l.b16 %v2672
      %v2832 = vunpack.c.h.b16 %v2672
      %v2833 = vunpack.c.l.b16 %v2673
      %v2834 = vunpack.c.l.b16 %v2674
      %v2835 = vunpack.c.h.b16 %v2674
      %v2836 = vunpack.c.l.b16 %v2675
      %v2837 = vunpack.c.l.b16 %v2676
      %v2838 = vunpack.c.h.b16 %v2676
      %v2839 = vunpack.c.l.b16 %v2677
      %v2840 = vunpack.c.l.b16 %v2678
      %v2841 = vunpack.c.h.b16 %v2678
      %v2842 = vunpack.c.l.b16 %v2679
      %v2843 = vunpack.c.l.b16 %v2680
      %v2844 = vunpack.c.h.b16 %v2680
      %v2845 = vunpack.c.l.b16 %v2681
      %v2846 = vunpack.c.l.b16 %v2682
      %v2847 = vunpack.c.h.b16 %v2682
      %v2848 = vunpack.c.l.b16 %v2683
      %v2849 = vunpack.c.l.b16 %v2684
      %v2850 = vunpack.c.h.b16 %v2684
      %v2851 = vunpack.c.l.b16 %v2685
      %v2852 = vunpack.c.l.b16 %v2686
      %v2853 = vunpack.c.h.b16 %v2686
      %v2854 = vunpack.c.l.b16 %v2687
      %v2855 = vunpack.c.l.b16 %v2688
      %v2856 = vunpack.c.h.b16 %v2688
      %v2857 = vunpack.c.l.b16 %v2689
      %v2858 = vpack.c.b16 %v2765, %v2762
      %v2859 = vpack.c.b16 %v2766, %v2763
      %v2860 = vpack.c.b16 %v2767, %v2764
      %v2861 = vpack.c.b16 %v2771, %v2768
      %v2862 = vpack.c.b16 %v2772, %v2769
      %v2863 = vpack.c.b16 %v2773, %v2770
      %v2864 = vpack.c.b16 %v2777, %v2774
      %v2865 = vpack.c.b16 %v2778, %v2775
      %v2866 = vpack.c.b16 %v2779, %v2776
      %v2867 = vpack.c.b16 %v2783, %v2780
      %v2868 = vpack.c.b16 %v2784, %v2781
      %v2869 = vpack.c.b16 %v2785, %v2782
      %v2870 = vpack.c.b16 %v2789, %v2786
      %v2871 = vpack.c.b16 %v2790, %v2787
      %v2872 = vpack.c.b16 %v2791, %v2788
      %v2873 = vpack.c.b16 %v2795, %v2792
      %v2874 = vpack.c.b16 %v2796, %v2793
      %v2875 = vpack.c.b16 %v2797, %v2794
      %v2876 = vpack.c.b16 %v2801, %v2798
      %v2877 = vpack.c.b16 %v2802, %v2799
      %v2878 = vpack.c.b16 %v2803, %v2800
      %v2879 = vpack.c.b16 %v2807, %v2804
      %v2880 = vpack.c.b16 %v2808, %v2805
      %v2881 = vpack.c.b16 %v2809, %v2806
      %v2882 = vpack.c.b16 %v2813, %v2810
      %v2883 = vpack.c.b16 %v2814, %v2811
      %v2884 = vpack.c.b16 %v2815, %v2812
      %v2885 = vpack.c.b16 %v2819, %v2816
      %v2886 = vpack.c.b16 %v2820, %v2817
      %v2887 = vpack.c.b16 %v2821, %v2818
      %v2888 = vpack.c.b16 %v2825, %v2822
      %v2889 = vpack.c.b16 %v2826, %v2823
      %v2890 = vpack.c.b16 %v2827, %v2824
      %v2891 = vpack.c.b16 %v2831, %v2828
      %v2892 = vpack.c.b16 %v2832, %v2829
      %v2893 = vpack.c.b16 %v2833, %v2830
      %v2894 = vpack.c.b16 %v2837, %v2834
      %v2895 = vpack.c.b16 %v2838, %v2835
      %v2896 = vpack.c.b16 %v2839, %v2836
      %v2897 = vpack.c.b16 %v2843, %v2840
      %v2898 = vpack.c.b16 %v2844, %v2841
      %v2899 = vpack.c.b16 %v2845, %v2842
      %v2900 = vpack.c.b16 %v2849, %v2846
      %v2901 = vpack.c.b16 %v2850, %v2847
      %v2902 = vpack.c.b16 %v2851, %v2848
      %v2903 = vpack.c.b16 %v2855, %v2852
      %v2904 = vpack.c.b16 %v2856, %v2853
      %v2905 = vpack.c.b16 %v2857, %v2854
      %2954 = vmatpush.bf16.msra.mxu0 %v2879
      %2955 = vmatpush.bf16.msra.mxu0 %v2876
      %2956 = vmatpush.bf16.msra.mxu0 %v2873
      %2957 = vmatpush.bf16.msra.mxu0 %v2870
      %2958 = vmatpush.bf16.msra.mxu0 %v2867
      %2959 = vmatpush.bf16.msra.mxu0 %v2864
      %2960 = vmatpush.bf16.msra.mxu0 %v2861
      %2961 = vmatpush.bf16.msra.mxu0 %v2858
      %2962 = vmatmul.bf16.gmra.mxu0 %v2594
      %v2963 = vpop.f32.mrf.mxu0
      %v2964 = vadd.f32 %v2692, %v2963
      %v2965 = vpop.f32.mrf.mxu0
      %v2966 = vadd.f32 %v2692, %v2965
      %2967 = vmatmul.bf16.gmra.mxu0 %v2596
      %v2968 = vpop.f32.mrf.mxu0
      %v2969 = vadd.f32 %v2692, %v2968
      %v2970 = vpop.f32.mrf.mxu0
      %v2971 = vadd.f32 %v2692, %v2970
      %2972 = vmatmul.bf16.gmra.mxu0 %v2598
      %v2973 = vpop.f32.mrf.mxu0
      %v2974 = vadd.f32 %v2692, %v2973
      %v2975 = vpop.f32.mrf.mxu0
      %v2976 = vadd.f32 %v2692, %v2975
      %2977 = vmatmul.bf16.gmra.mxu0 %v2600
      %v2978 = vpop.f32.mrf.mxu0
      %v2979 = vadd.f32 %v2692, %v2978
      %v2980 = vpop.f32.mrf.mxu0
      %v2981 = vadd.f32 %v2692, %v2980
      %2982 = vmatmul.bf16.gmra.mxu0 %v2602
      %v2983 = vpop.f32.mrf.mxu0
      %v2984 = vadd.f32 %v2692, %v2983
      %v2985 = vpop.f32.mrf.mxu0
      %v2986 = vadd.f32 %v2692, %v2985
      %2987 = vmatmul.bf16.gmra.mxu0 %v2604
      %v2988 = vpop.f32.mrf.mxu0
      %v2989 = vadd.f32 %v2692, %v2988
      %v2990 = vpop.f32.mrf.mxu0
      %v2991 = vadd.f32 %v2692, %v2990
      %2992 = vmatmul.bf16.gmra.mxu0 %v2606
      %v2993 = vpop.f32.mrf.mxu0
      %v2994 = vadd.f32 %v2692, %v2993
      %v2995 = vpop.f32.mrf.mxu0
      %v2996 = vadd.f32 %v2692, %v2995
      %2997 = vmatmul.bf16.gmra.mxu0 %v2608
      %v2998 = vpop.f32.mrf.mxu0
      %v2999 = vadd.f32 %v2692, %v2998
      %v3000 = vpop.f32.mrf.mxu0
      %v3001 = vadd.f32 %v2692, %v3000
      %3002 = vmatmul.bf16.gmra.mxu0 %v2610
      %v3003 = vpop.f32.mrf.mxu0
      %v3004 = vadd.f32 %v2692, %v3003
      %v3005 = vpop.f32.mrf.mxu0
      %v3006 = vadd.f32 %v2692, %v3005
      %3007 = vmatmul.bf16.gmra.mxu0 %v2612
      %v3008 = vpop.f32.mrf.mxu0
      %v3009 = vadd.f32 %v2692, %v3008
      %v3010 = vpop.f32.mrf.mxu0
      %v3011 = vadd.f32 %v2692, %v3010
      %3012 = vmatmul.bf16.gmra.mxu0 %v2614
      %v3013 = vpop.f32.mrf.mxu0
      %v3014 = vadd.f32 %v2692, %v3013
      %v3015 = vpop.f32.mrf.mxu0
      %v3016 = vadd.f32 %v2692, %v3015
      %3017 = vmatmul.bf16.gmra.mxu0 %v2616
      %v3018 = vpop.f32.mrf.mxu0
      %v3019 = vadd.f32 %v2692, %v3018
      %v3020 = vpop.f32.mrf.mxu0
      %v3021 = vadd.f32 %v2692, %v3020
      %3022 = vmatmul.bf16.gmra.mxu0 %v2618
      %v3023 = vpop.f32.mrf.mxu0
      %v3024 = vadd.f32 %v2692, %v3023
      %v3025 = vpop.f32.mrf.mxu0
      %v3026 = vadd.f32 %v2692, %v3025
      %3027 = vmatmul.bf16.gmra.mxu0 %v2620
      %v3028 = vpop.f32.mrf.mxu0
      %v3029 = vadd.f32 %v2692, %v3028
      %v3030 = vpop.f32.mrf.mxu0
      %v3031 = vadd.f32 %v2692, %v3030
      %3032 = vmatmul.bf16.gmra.mxu0 %v2622
      %v3033 = vpop.f32.mrf.mxu0
      %v3034 = vadd.f32 %v2692, %v3033
      %v3035 = vpop.f32.mrf.mxu0
      %v3036 = vadd.f32 %v2692, %v3035
      %3037 = vmatmul.bf16.gmra.mxu0 %v2624
      %v3038 = vpop.f32.mrf.mxu0
      %v3039 = vadd.f32 %v2692, %v3038
      %v3040 = vpop.f32.mrf.mxu0
      %v3041 = vadd.f32 %v2692, %v3040
      %3042 = vdwg.mxu0
      %3043 = vmatpush.bf16.msra.mxu0 %v2903
      %3044 = vmatpush.bf16.msra.mxu0 %v2900
      %3045 = vmatpush.bf16.msra.mxu0 %v2897
      %3046 = vmatpush.bf16.msra.mxu0 %v2894
      %3047 = vmatpush.bf16.msra.mxu0 %v2891
      %3048 = vmatpush.bf16.msra.mxu0 %v2888
      %3049 = vmatpush.bf16.msra.mxu0 %v2885
      %3050 = vmatpush.bf16.msra.mxu0 %v2882
      %3051 = vmatmul.bf16.gmra.mxu0 %v2595
      %v3052 = vpop.f32.mrf.mxu0
      %v3053 = vadd.f32 %v2964, %v3052
      %v3054 = vpop.f32.mrf.mxu0
      %v3055 = vadd.f32 %v2966, %v3054
      %3056 = vmatmul.bf16.gmra.mxu0 %v2597
      %v3057 = vpop.f32.mrf.mxu0
      %v3058 = vadd.f32 %v2969, %v3057
      %v3059 = vpop.f32.mrf.mxu0
      %v3060 = vadd.f32 %v2971, %v3059
      %3061 = vmatmul.bf16.gmra.mxu0 %v2599
      %v3062 = vpop.f32.mrf.mxu0
      %v3063 = vadd.f32 %v2974, %v3062
      %v3064 = vpop.f32.mrf.mxu0
      %v3065 = vadd.f32 %v2976, %v3064
      %3066 = vmatmul.bf16.gmra.mxu0 %v2601
      %v3067 = vpop.f32.mrf.mxu0
      %v3068 = vadd.f32 %v2979, %v3067
      %v3069 = vpop.f32.mrf.mxu0
      %v3070 = vadd.f32 %v2981, %v3069
      %3071 = vmatmul.bf16.gmra.mxu0 %v2603
      %v3072 = vpop.f32.mrf.mxu0
      %v3073 = vadd.f32 %v2984, %v3072
      %v3074 = vpop.f32.mrf.mxu0
      %v3075 = vadd.f32 %v2986, %v3074
      %3076 = vmatmul.bf16.gmra.mxu0 %v2605
      %v3077 = vpop.f32.mrf.mxu0
      %v3078 = vadd.f32 %v2989, %v3077
      %v3079 = vpop.f32.mrf.mxu0
      %v3080 = vadd.f32 %v2991, %v3079
      %3081 = vmatmul.bf16.gmra.mxu0 %v2607
      %v3082 = vpop.f32.mrf.mxu0
      %v3083 = vadd.f32 %v2994, %v3082
      %v3084 = vpop.f32.mrf.mxu0
      %v3085 = vadd.f32 %v2996, %v3084
      %3086 = vmatmul.bf16.gmra.mxu0 %v2609
      %v3087 = vpop.f32.mrf.mxu0
      %v3088 = vadd.f32 %v2999, %v3087
      %v3089 = vpop.f32.mrf.mxu0
      %v3090 = vadd.f32 %v3001, %v3089
      %3091 = vmatmul.bf16.gmra.mxu0 %v2611
      %v3092 = vpop.f32.mrf.mxu0
      %v3093 = vadd.f32 %v3004, %v3092
      %v3094 = vpop.f32.mrf.mxu0
      %v3095 = vadd.f32 %v3006, %v3094
      %3096 = vmatmul.bf16.gmra.mxu0 %v2613
      %v3097 = vpop.f32.mrf.mxu0
      %v3098 = vadd.f32 %v3009, %v3097
      %v3099 = vpop.f32.mrf.mxu0
      %v3100 = vadd.f32 %v3011, %v3099
      %3101 = vmatmul.bf16.gmra.mxu0 %v2615
      %v3102 = vpop.f32.mrf.mxu0
      %v3103 = vadd.f32 %v3014, %v3102
      %v3104 = vpop.f32.mrf.mxu0
      %v3105 = vadd.f32 %v3016, %v3104
      %3106 = vmatmul.bf16.gmra.mxu0 %v2617
      %v3107 = vpop.f32.mrf.mxu0
      %v3108 = vadd.f32 %v3019, %v3107
      %v3109 = vpop.f32.mrf.mxu0
      %v3110 = vadd.f32 %v3021, %v3109
      %3111 = vmatmul.bf16.gmra.mxu0 %v2619
      %v3112 = vpop.f32.mrf.mxu0
      %v3113 = vadd.f32 %v3024, %v3112
      %v3114 = vpop.f32.mrf.mxu0
      %v3115 = vadd.f32 %v3026, %v3114
      %3116 = vmatmul.bf16.gmra.mxu0 %v2621
      %v3117 = vpop.f32.mrf.mxu0
      %v3118 = vadd.f32 %v3029, %v3117
      %v3119 = vpop.f32.mrf.mxu0
      %v3120 = vadd.f32 %v3031, %v3119
      %3121 = vmatmul.bf16.gmra.mxu0 %v2623
      %v3122 = vpop.f32.mrf.mxu0
      %v3123 = vadd.f32 %v3034, %v3122
      %v3124 = vpop.f32.mrf.mxu0
      %v3125 = vadd.f32 %v3036, %v3124
      %3126 = vmatmul.bf16.gmra.mxu0 %v2625
      %v3127 = vpop.f32.mrf.mxu0
      %v3128 = vadd.f32 %v3039, %v3127
      %v3129 = vpop.f32.mrf.mxu0
      %v3130 = vadd.f32 %v3041, %v3129
      %3131 = vdwg.mxu0
      %3132 = vmatpush.bf16.msra.mxu0 %v2880
      %3133 = vmatpush.bf16.msra.mxu0 %v2877
      %3134 = vmatpush.bf16.msra.mxu0 %v2874
      %3135 = vmatpush.bf16.msra.mxu0 %v2871
      %3136 = vmatpush.bf16.msra.mxu0 %v2868
      %3137 = vmatpush.bf16.msra.mxu0 %v2865
      %3138 = vmatpush.bf16.msra.mxu0 %v2862
      %3139 = vmatpush.bf16.msra.mxu0 %v2859
      %3140 = vmatmul.bf16.gmra.mxu0 %v2594
      %v3141 = vpop.f32.mrf.mxu0
      %v3142 = vadd.f32 %v2693, %v3141
      %v3143 = vpop.f32.mrf.mxu0
      %v3144 = vadd.f32 %v2693, %v3143
      %3145 = vmatmul.bf16.gmra.mxu0 %v2596
      %v3146 = vpop.f32.mrf.mxu0
      %v3147 = vadd.f32 %v2693, %v3146
      %v3148 = vpop.f32.mrf.mxu0
      %v3149 = vadd.f32 %v2693, %v3148
      %3150 = vmatmul.bf16.gmra.mxu0 %v2598
      %v3151 = vpop.f32.mrf.mxu0
      %v3152 = vadd.f32 %v2693, %v3151
      %v3153 = vpop.f32.mrf.mxu0
      %v3154 = vadd.f32 %v2693, %v3153
      %3155 = vmatmul.bf16.gmra.mxu0 %v2600
      %v3156 = vpop.f32.mrf.mxu0
      %v3157 = vadd.f32 %v2693, %v3156
      %v3158 = vpop.f32.mrf.mxu0
      %v3159 = vadd.f32 %v2693, %v3158
      %3160 = vmatmul.bf16.gmra.mxu0 %v2602
      %v3161 = vpop.f32.mrf.mxu0
      %v3162 = vadd.f32 %v2693, %v3161
      %v3163 = vpop.f32.mrf.mxu0
      %v3164 = vadd.f32 %v2693, %v3163
      %3165 = vmatmul.bf16.gmra.mxu0 %v2604
      %v3166 = vpop.f32.mrf.mxu0
      %v3167 = vadd.f32 %v2693, %v3166
      %v3168 = vpop.f32.mrf.mxu0
      %v3169 = vadd.f32 %v2693, %v3168
      %3170 = vmatmul.bf16.gmra.mxu0 %v2606
      %v3171 = vpop.f32.mrf.mxu0
      %v3172 = vadd.f32 %v2693, %v3171
      %v3173 = vpop.f32.mrf.mxu0
      %v3174 = vadd.f32 %v2693, %v3173
      %3175 = vmatmul.bf16.gmra.mxu0 %v2608
      %v3176 = vpop.f32.mrf.mxu0
      %v3177 = vadd.f32 %v2693, %v3176
      %v3178 = vpop.f32.mrf.mxu0
      %v3179 = vadd.f32 %v2693, %v3178
      %3180 = vmatmul.bf16.gmra.mxu0 %v2610
      %v3181 = vpop.f32.mrf.mxu0
      %v3182 = vadd.f32 %v2693, %v3181
      %v3183 = vpop.f32.mrf.mxu0
      %v3184 = vadd.f32 %v2693, %v3183
      %3185 = vmatmul.bf16.gmra.mxu0 %v2612
      %v3186 = vpop.f32.mrf.mxu0
      %v3187 = vadd.f32 %v2693, %v3186
      %v3188 = vpop.f32.mrf.mxu0
      %v3189 = vadd.f32 %v2693, %v3188
      %3190 = vmatmul.bf16.gmra.mxu0 %v2614
      %v3191 = vpop.f32.mrf.mxu0
      %v3192 = vadd.f32 %v2693, %v3191
      %v3193 = vpop.f32.mrf.mxu0
      %v3194 = vadd.f32 %v2693, %v3193
      %3195 = vmatmul.bf16.gmra.mxu0 %v2616
      %v3196 = vpop.f32.mrf.mxu0
      %v3197 = vadd.f32 %v2693, %v3196
      %v3198 = vpop.f32.mrf.mxu0
      %v3199 = vadd.f32 %v2693, %v3198
      %3200 = vmatmul.bf16.gmra.mxu0 %v2618
      %v3201 = vpop.f32.mrf.mxu0
      %v3202 = vadd.f32 %v2693, %v3201
      %v3203 = vpop.f32.mrf.mxu0
      %v3204 = vadd.f32 %v2693, %v3203
      %3205 = vmatmul.bf16.gmra.mxu0 %v2620
      %v3206 = vpop.f32.mrf.mxu0
      %v3207 = vadd.f32 %v2693, %v3206
      %v3208 = vpop.f32.mrf.mxu0
      %v3209 = vadd.f32 %v2693, %v3208
      %3210 = vmatmul.bf16.gmra.mxu0 %v2622
      %v3211 = vpop.f32.mrf.mxu0
      %v3212 = vadd.f32 %v2693, %v3211
      %v3213 = vpop.f32.mrf.mxu0
      %v3214 = vadd.f32 %v2693, %v3213
      %3215 = vmatmul.bf16.gmra.mxu0 %v2624
      %v3216 = vpop.f32.mrf.mxu0
      %v3217 = vadd.f32 %v2693, %v3216
      %v3218 = vpop.f32.mrf.mxu0
      %v3219 = vadd.f32 %v2693, %v3218
      %3220 = vdwg.mxu0
      %3221 = vmatpush.bf16.msra.mxu0 %v2904
      %3222 = vmatpush.bf16.msra.mxu0 %v2901
      %3223 = vmatpush.bf16.msra.mxu0 %v2898
      %3224 = vmatpush.bf16.msra.mxu0 %v2895
      %3225 = vmatpush.bf16.msra.mxu0 %v2892
      %3226 = vmatpush.bf16.msra.mxu0 %v2889
      %3227 = vmatpush.bf16.msra.mxu0 %v2886
      %3228 = vmatpush.bf16.msra.mxu0 %v2883
      %3229 = vmatmul.bf16.gmra.mxu0 %v2595
      %v3230 = vpop.f32.mrf.mxu0
      %v3231 = vadd.f32 %v3142, %v3230
      %v3232 = vpop.f32.mrf.mxu0
      %v3233 = vadd.f32 %v3144, %v3232
      %3234 = vmatmul.bf16.gmra.mxu0 %v2597
      %v3235 = vpop.f32.mrf.mxu0
      %v3236 = vadd.f32 %v3147, %v3235
      %v3237 = vpop.f32.mrf.mxu0
      %v3238 = vadd.f32 %v3149, %v3237
      %3239 = vmatmul.bf16.gmra.mxu0 %v2599
      %v3240 = vpop.f32.mrf.mxu0
      %v3241 = vadd.f32 %v3152, %v3240
      %v3242 = vpop.f32.mrf.mxu0
      %v3243 = vadd.f32 %v3154, %v3242
      %3244 = vmatmul.bf16.gmra.mxu0 %v2601
      %v3245 = vpop.f32.mrf.mxu0
      %v3246 = vadd.f32 %v3157, %v3245
      %v3247 = vpop.f32.mrf.mxu0
      %v3248 = vadd.f32 %v3159, %v3247
      %3249 = vmatmul.bf16.gmra.mxu0 %v2603
      %v3250 = vpop.f32.mrf.mxu0
      %v3251 = vadd.f32 %v3162, %v3250
      %v3252 = vpop.f32.mrf.mxu0
      %v3253 = vadd.f32 %v3164, %v3252
      %3254 = vmatmul.bf16.gmra.mxu0 %v2605
      %v3255 = vpop.f32.mrf.mxu0
      %v3256 = vadd.f32 %v3167, %v3255
      %v3257 = vpop.f32.mrf.mxu0
      %v3258 = vadd.f32 %v3169, %v3257
      %3259 = vmatmul.bf16.gmra.mxu0 %v2607
      %v3260 = vpop.f32.mrf.mxu0
      %v3261 = vadd.f32 %v3172, %v3260
      %v3262 = vpop.f32.mrf.mxu0
      %v3263 = vadd.f32 %v3174, %v3262
      %3264 = vmatmul.bf16.gmra.mxu0 %v2609
      %v3265 = vpop.f32.mrf.mxu0
      %v3266 = vadd.f32 %v3177, %v3265
      %v3267 = vpop.f32.mrf.mxu0
      %v3268 = vadd.f32 %v3179, %v3267
      %3269 = vmatmul.bf16.gmra.mxu0 %v2611
      %v3270 = vpop.f32.mrf.mxu0
      %v3271 = vadd.f32 %v3182, %v3270
      %v3272 = vpop.f32.mrf.mxu0
      %v3273 = vadd.f32 %v3184, %v3272
      %3274 = vmatmul.bf16.gmra.mxu0 %v2613
      %v3275 = vpop.f32.mrf.mxu0
      %v3276 = vadd.f32 %v3187, %v3275
      %v3277 = vpop.f32.mrf.mxu0
      %v3278 = vadd.f32 %v3189, %v3277
      %3279 = vmatmul.bf16.gmra.mxu0 %v2615
      %v3280 = vpop.f32.mrf.mxu0
      %v3281 = vadd.f32 %v3192, %v3280
      %v3282 = vpop.f32.mrf.mxu0
      %v3283 = vadd.f32 %v3194, %v3282
      %3284 = vmatmul.bf16.gmra.mxu0 %v2617
      %v3285 = vpop.f32.mrf.mxu0
      %v3286 = vadd.f32 %v3197, %v3285
      %v3287 = vpop.f32.mrf.mxu0
      %v3288 = vadd.f32 %v3199, %v3287
      %3289 = vmatmul.bf16.gmra.mxu0 %v2619
      %v3290 = vpop.f32.mrf.mxu0
      %v3291 = vadd.f32 %v3202, %v3290
      %v3292 = vpop.f32.mrf.mxu0
      %v3293 = vadd.f32 %v3204, %v3292
      %3294 = vmatmul.bf16.gmra.mxu0 %v2621
      %v3295 = vpop.f32.mrf.mxu0
      %v3296 = vadd.f32 %v3207, %v3295
      %v3297 = vpop.f32.mrf.mxu0
      %v3298 = vadd.f32 %v3209, %v3297
      %3299 = vmatmul.bf16.gmra.mxu0 %v2623
      %v3300 = vpop.f32.mrf.mxu0
      %v3301 = vadd.f32 %v3212, %v3300
      %v3302 = vpop.f32.mrf.mxu0
      %v3303 = vadd.f32 %v3214, %v3302
      %3304 = vmatmul.bf16.gmra.mxu0 %v2625
      %v3305 = vpop.f32.mrf.mxu0
      %v3306 = vadd.f32 %v3217, %v3305
      %v3307 = vpop.f32.mrf.mxu0
      %v3308 = vadd.f32 %v3219, %v3307
      %3309 = vdwg.mxu0
      %3310 = vmatpush.bf16.msra.mxu0 %v2881
      %3311 = vmatpush.bf16.msra.mxu0 %v2878
      %3312 = vmatpush.bf16.msra.mxu0 %v2875
      %3313 = vmatpush.bf16.msra.mxu0 %v2872
      %3314 = vmatpush.bf16.msra.mxu0 %v2869
      %3315 = vmatpush.bf16.msra.mxu0 %v2866
      %3316 = vmatpush.bf16.msra.mxu0 %v2863
      %3317 = vmatpush.bf16.msra.mxu0 %v2860
      %3318 = vmatmul.bf16.gmra.mxu0 %v2594
      %v3319 = vpop.f32.mrf.mxu0
      %v3320 = vadd.f32 %v2694, %v3319
      %v3321 = vpop.f32.mrf.mxu0
      %v3322 = vadd.f32 %v2694, %v3321
      %3323 = vmatmul.bf16.gmra.mxu0 %v2596
      %v3324 = vpop.f32.mrf.mxu0
      %v3325 = vadd.f32 %v2694, %v3324
      %v3326 = vpop.f32.mrf.mxu0
      %v3327 = vadd.f32 %v2694, %v3326
      %3328 = vmatmul.bf16.gmra.mxu0 %v2598
      %v3329 = vpop.f32.mrf.mxu0
      %v3330 = vadd.f32 %v2694, %v3329
      %v3331 = vpop.f32.mrf.mxu0
      %v3332 = vadd.f32 %v2694, %v3331
      %3333 = vmatmul.bf16.gmra.mxu0 %v2600
      %v3334 = vpop.f32.mrf.mxu0
      %v3335 = vadd.f32 %v2694, %v3334
      %v3336 = vpop.f32.mrf.mxu0
      %v3337 = vadd.f32 %v2694, %v3336
      %3338 = vmatmul.bf16.gmra.mxu0 %v2602
      %v3339 = vpop.f32.mrf.mxu0
      %v3340 = vadd.f32 %v2694, %v3339
      %v3341 = vpop.f32.mrf.mxu0
      %v3342 = vadd.f32 %v2694, %v3341
      %3343 = vmatmul.bf16.gmra.mxu0 %v2604
      %v3344 = vpop.f32.mrf.mxu0
      %v3345 = vadd.f32 %v2694, %v3344
      %v3346 = vpop.f32.mrf.mxu0
      %v3347 = vadd.f32 %v2694, %v3346
      %3348 = vmatmul.bf16.gmra.mxu0 %v2606
      %v3349 = vpop.f32.mrf.mxu0
      %v3350 = vadd.f32 %v2694, %v3349
      %v3351 = vpop.f32.mrf.mxu0
      %v3352 = vadd.f32 %v2694, %v3351
      %3353 = vmatmul.bf16.gmra.mxu0 %v2608
      %v3354 = vpop.f32.mrf.mxu0
      %v3355 = vadd.f32 %v2694, %v3354
      %v3356 = vpop.f32.mrf.mxu0
      %v3357 = vadd.f32 %v2694, %v3356
      %3358 = vmatmul.bf16.gmra.mxu0 %v2610
      %v3359 = vpop.f32.mrf.mxu0
      %v3360 = vadd.f32 %v2694, %v3359
      %v3361 = vpop.f32.mrf.mxu0
      %v3362 = vadd.f32 %v2694, %v3361
      %3363 = vmatmul.bf16.gmra.mxu0 %v2612
      %v3364 = vpop.f32.mrf.mxu0
      %v3365 = vadd.f32 %v2694, %v3364
      %v3366 = vpop.f32.mrf.mxu0
      %v3367 = vadd.f32 %v2694, %v3366
      %3368 = vmatmul.bf16.gmra.mxu0 %v2614
      %v3369 = vpop.f32.mrf.mxu0
      %v3370 = vadd.f32 %v2694, %v3369
      %v3371 = vpop.f32.mrf.mxu0
      %v3372 = vadd.f32 %v2694, %v3371
      %3373 = vmatmul.bf16.gmra.mxu0 %v2616
      %v3374 = vpop.f32.mrf.mxu0
      %v3375 = vadd.f32 %v2694, %v3374
      %v3376 = vpop.f32.mrf.mxu0
      %v3377 = vadd.f32 %v2694, %v3376
      %3378 = vmatmul.bf16.gmra.mxu0 %v2618
      %v3379 = vpop.f32.mrf.mxu0
      %v3380 = vadd.f32 %v2694, %v3379
      %v3381 = vpop.f32.mrf.mxu0
      %v3382 = vadd.f32 %v2694, %v3381
      %3383 = vmatmul.bf16.gmra.mxu0 %v2620
      %v3384 = vpop.f32.mrf.mxu0
      %v3385 = vadd.f32 %v2694, %v3384
      %v3386 = vpop.f32.mrf.mxu0
      %v3387 = vadd.f32 %v2694, %v3386
      %3388 = vmatmul.bf16.gmra.mxu0 %v2622
      %v3389 = vpop.f32.mrf.mxu0
      %v3390 = vadd.f32 %v2694, %v3389
      %v3391 = vpop.f32.mrf.mxu0
      %v3392 = vadd.f32 %v2694, %v3391
      %3393 = vmatmul.bf16.gmra.mxu0 %v2624
      %v3394 = vpop.f32.mrf.mxu0
      %v3395 = vadd.f32 %v2694, %v3394
      %v3396 = vpop.f32.mrf.mxu0
      %v3397 = vadd.f32 %v2694, %v3396
      %3398 = vdwg.mxu0
      %3399 = vmatpush.bf16.msra.mxu0 %v2905
      %3400 = vmatpush.bf16.msra.mxu0 %v2902
      %3401 = vmatpush.bf16.msra.mxu0 %v2899
      %3402 = vmatpush.bf16.msra.mxu0 %v2896
      %3403 = vmatpush.bf16.msra.mxu0 %v2893
      %3404 = vmatpush.bf16.msra.mxu0 %v2890
      %3405 = vmatpush.bf16.msra.mxu0 %v2887
      %3406 = vmatpush.bf16.msra.mxu0 %v2884
      %3407 = vmatmul.bf16.gmra.mxu0 %v2595
      %v3408 = vpop.f32.mrf.mxu0
      %v3409 = vadd.f32 %v3320, %v3408
      %v3410 = vpop.f32.mrf.mxu0
      %v3411 = vadd.f32 %v3322, %v3410
      %3412 = vmatmul.bf16.gmra.mxu0 %v2597
      %v3413 = vpop.f32.mrf.mxu0
      %v3414 = vadd.f32 %v3325, %v3413
      %v3415 = vpop.f32.mrf.mxu0
      %v3416 = vadd.f32 %v3327, %v3415
      %3417 = vmatmul.bf16.gmra.mxu0 %v2599
      %v3418 = vpop.f32.mrf.mxu0
      %v3419 = vadd.f32 %v3330, %v3418
      %v3420 = vpop.f32.mrf.mxu0
      %v3421 = vadd.f32 %v3332, %v3420
      %3422 = vmatmul.bf16.gmra.mxu0 %v2601
      %v3423 = vpop.f32.mrf.mxu0
      %v3424 = vadd.f32 %v3335, %v3423
      %v3425 = vpop.f32.mrf.mxu0
      %v3426 = vadd.f32 %v3337, %v3425
      %3427 = vmatmul.bf16.gmra.mxu0 %v2603
      %v3428 = vpop.f32.mrf.mxu0
      %v3429 = vadd.f32 %v3340, %v3428
      %v3430 = vpop.f32.mrf.mxu0
      %v3431 = vadd.f32 %v3342, %v3430
      %3432 = vmatmul.bf16.gmra.mxu0 %v2605
      %v3433 = vpop.f32.mrf.mxu0
      %v3434 = vadd.f32 %v3345, %v3433
      %v3435 = vpop.f32.mrf.mxu0
      %v3436 = vadd.f32 %v3347, %v3435
      %3437 = vmatmul.bf16.gmra.mxu0 %v2607
      %v3438 = vpop.f32.mrf.mxu0
      %v3439 = vadd.f32 %v3350, %v3438
      %v3440 = vpop.f32.mrf.mxu0
      %v3441 = vadd.f32 %v3352, %v3440
      %3442 = vmatmul.bf16.gmra.mxu0 %v2609
      %v3443 = vpop.f32.mrf.mxu0
      %v3444 = vadd.f32 %v3355, %v3443
      %v3445 = vpop.f32.mrf.mxu0
      %v3446 = vadd.f32 %v3357, %v3445
      %3447 = vmatmul.bf16.gmra.mxu0 %v2611
      %v3448 = vpop.f32.mrf.mxu0
      %v3449 = vadd.f32 %v3360, %v3448
      %v3450 = vpop.f32.mrf.mxu0
      %v3451 = vadd.f32 %v3362, %v3450
      %3452 = vmatmul.bf16.gmra.mxu0 %v2613
      %v3453 = vpop.f32.mrf.mxu0
      %v3454 = vadd.f32 %v3365, %v3453
      %v3455 = vpop.f32.mrf.mxu0
      %v3456 = vadd.f32 %v3367, %v3455
      %3457 = vmatmul.bf16.gmra.mxu0 %v2615
      %v3458 = vpop.f32.mrf.mxu0
      %v3459 = vadd.f32 %v3370, %v3458
      %v3460 = vpop.f32.mrf.mxu0
      %v3461 = vadd.f32 %v3372, %v3460
      %3462 = vmatmul.bf16.gmra.mxu0 %v2617
      %v3463 = vpop.f32.mrf.mxu0
      %v3464 = vadd.f32 %v3375, %v3463
      %v3465 = vpop.f32.mrf.mxu0
      %v3466 = vadd.f32 %v3377, %v3465
      %3467 = vmatmul.bf16.gmra.mxu0 %v2619
      %v3468 = vpop.f32.mrf.mxu0
      %v3469 = vadd.f32 %v3380, %v3468
      %v3470 = vpop.f32.mrf.mxu0
      %v3471 = vadd.f32 %v3382, %v3470
      %3472 = vmatmul.bf16.gmra.mxu0 %v2621
      %v3473 = vpop.f32.mrf.mxu0
      %v3474 = vadd.f32 %v3385, %v3473
      %v3475 = vpop.f32.mrf.mxu0
      %v3476 = vadd.f32 %v3387, %v3475
      %3477 = vmatmul.bf16.gmra.mxu0 %v2623
      %v3478 = vpop.f32.mrf.mxu0
      %v3479 = vadd.f32 %v3390, %v3478
      %v3480 = vpop.f32.mrf.mxu0
      %v3481 = vadd.f32 %v3392, %v3480
      %3482 = vmatmul.bf16.gmra.mxu0 %v2625
      %v3483 = vpop.f32.mrf.mxu0
      %v3484 = vadd.f32 %v3395, %v3483
      %v3485 = vpop.f32.mrf.mxu0
      %v3486 = vadd.f32 %v3397, %v3485
      %3487 = vdwg.mxu0
      %vm3488 = vcmp.gt.f32.partialorder %v3053, 0.0
      %vm3489 = vcmp.gt.f32.partialorder %v3231, 0.0
      %vm3490 = vcmp.gt.f32.partialorder %v3409, 0.0
      %vm3491 = vcmp.gt.f32.partialorder %v3055, 0.0
      %vm3492 = vcmp.gt.f32.partialorder %v3233, 0.0
      %vm3493 = vcmp.gt.f32.partialorder %v3411, 0.0
      %vm3494 = vcmp.gt.f32.partialorder %v3058, 0.0
      %vm3495 = vcmp.gt.f32.partialorder %v3236, 0.0
      %vm3496 = vcmp.gt.f32.partialorder %v3414, 0.0
      %vm3497 = vcmp.gt.f32.partialorder %v3060, 0.0
      %vm3498 = vcmp.gt.f32.partialorder %v3238, 0.0
      %vm3499 = vcmp.gt.f32.partialorder %v3416, 0.0
      %vm3500 = vcmp.gt.f32.partialorder %v3063, 0.0
      %vm3501 = vcmp.gt.f32.partialorder %v3241, 0.0
      %vm3502 = vcmp.gt.f32.partialorder %v3419, 0.0
      %vm3503 = vcmp.gt.f32.partialorder %v3065, 0.0
      %vm3504 = vcmp.gt.f32.partialorder %v3243, 0.0
      %vm3505 = vcmp.gt.f32.partialorder %v3421, 0.0
      %vm3506 = vcmp.gt.f32.partialorder %v3068, 0.0
      %vm3507 = vcmp.gt.f32.partialorder %v3246, 0.0
      %vm3508 = vcmp.gt.f32.partialorder %v3424, 0.0
      %vm3509 = vcmp.gt.f32.partialorder %v3070, 0.0
      %vm3510 = vcmp.gt.f32.partialorder %v3248, 0.0
      %vm3511 = vcmp.gt.f32.partialorder %v3426, 0.0
      %vm3512 = vcmp.gt.f32.partialorder %v3073, 0.0
      %vm3513 = vcmp.gt.f32.partialorder %v3251, 0.0
      %vm3514 = vcmp.gt.f32.partialorder %v3429, 0.0
      %vm3515 = vcmp.gt.f32.partialorder %v3075, 0.0
      %vm3516 = vcmp.gt.f32.partialorder %v3253, 0.0
      %vm3517 = vcmp.gt.f32.partialorder %v3431, 0.0
      %vm3518 = vcmp.gt.f32.partialorder %v3078, 0.0
      %vm3519 = vcmp.gt.f32.partialorder %v3256, 0.0
      %vm3520 = vcmp.gt.f32.partialorder %v3434, 0.0
      %vm3521 = vcmp.gt.f32.partialorder %v3080, 0.0
      %vm3522 = vcmp.gt.f32.partialorder %v3258, 0.0
      %vm3523 = vcmp.gt.f32.partialorder %v3436, 0.0
      %vm3524 = vcmp.gt.f32.partialorder %v3083, 0.0
      %vm3525 = vcmp.gt.f32.partialorder %v3261, 0.0
      %vm3526 = vcmp.gt.f32.partialorder %v3439, 0.0
      %vm3527 = vcmp.gt.f32.partialorder %v3085, 0.0
      %vm3528 = vcmp.gt.f32.partialorder %v3263, 0.0
      %vm3529 = vcmp.gt.f32.partialorder %v3441, 0.0
      %vm3530 = vcmp.gt.f32.partialorder %v3088, 0.0
      %vm3531 = vcmp.gt.f32.partialorder %v3266, 0.0
      %vm3532 = vcmp.gt.f32.partialorder %v3444, 0.0
      %vm3533 = vcmp.gt.f32.partialorder %v3090, 0.0
      %vm3534 = vcmp.gt.f32.partialorder %v3268, 0.0
      %vm3535 = vcmp.gt.f32.partialorder %v3446, 0.0
      %vm3536 = vcmp.gt.f32.partialorder %v3093, 0.0
      %vm3537 = vcmp.gt.f32.partialorder %v3271, 0.0
      %vm3538 = vcmp.gt.f32.partialorder %v3449, 0.0
      %vm3539 = vcmp.gt.f32.partialorder %v3095, 0.0
      %vm3540 = vcmp.gt.f32.partialorder %v3273, 0.0
      %vm3541 = vcmp.gt.f32.partialorder %v3451, 0.0
      %vm3542 = vcmp.gt.f32.partialorder %v3098, 0.0
      %vm3543 = vcmp.gt.f32.partialorder %v3276, 0.0
      %vm3544 = vcmp.gt.f32.partialorder %v3454, 0.0
      %vm3545 = vcmp.gt.f32.partialorder %v3100, 0.0
      %vm3546 = vcmp.gt.f32.partialorder %v3278, 0.0
      %vm3547 = vcmp.gt.f32.partialorder %v3456, 0.0
      %vm3548 = vcmp.gt.f32.partialorder %v3103, 0.0
      %vm3549 = vcmp.gt.f32.partialorder %v3281, 0.0
      %vm3550 = vcmp.gt.f32.partialorder %v3459, 0.0
      %vm3551 = vcmp.gt.f32.partialorder %v3105, 0.0
      %vm3552 = vcmp.gt.f32.partialorder %v3283, 0.0
      %vm3553 = vcmp.gt.f32.partialorder %v3461, 0.0
      %vm3554 = vcmp.gt.f32.partialorder %v3108, 0.0
      %vm3555 = vcmp.gt.f32.partialorder %v3286, 0.0
      %vm3556 = vcmp.gt.f32.partialorder %v3464, 0.0
      %vm3557 = vcmp.gt.f32.partialorder %v3110, 0.0
      %vm3558 = vcmp.gt.f32.partialorder %v3288, 0.0
      %vm3559 = vcmp.gt.f32.partialorder %v3466, 0.0
      %vm3560 = vcmp.gt.f32.partialorder %v3113, 0.0
      %vm3561 = vcmp.gt.f32.partialorder %v3291, 0.0
      %vm3562 = vcmp.gt.f32.partialorder %v3469, 0.0
      %vm3563 = vcmp.gt.f32.partialorder %v3115, 0.0
      %vm3564 = vcmp.gt.f32.partialorder %v3293, 0.0
      %vm3565 = vcmp.gt.f32.partialorder %v3471, 0.0
      %vm3566 = vcmp.gt.f32.partialorder %v3118, 0.0
      %vm3567 = vcmp.gt.f32.partialorder %v3296, 0.0
      %vm3568 = vcmp.gt.f32.partialorder %v3474, 0.0
      %vm3569 = vcmp.gt.f32.partialorder %v3120, 0.0
      %vm3570 = vcmp.gt.f32.partialorder %v3298, 0.0
      %vm3571 = vcmp.gt.f32.partialorder %v3476, 0.0
      %vm3572 = vcmp.gt.f32.partialorder %v3123, 0.0
      %vm3573 = vcmp.gt.f32.partialorder %v3301, 0.0
      %vm3574 = vcmp.gt.f32.partialorder %v3479, 0.0
      %vm3575 = vcmp.gt.f32.partialorder %v3125, 0.0
      %vm3576 = vcmp.gt.f32.partialorder %v3303, 0.0
      %vm3577 = vcmp.gt.f32.partialorder %v3481, 0.0
      %vm3578 = vcmp.gt.f32.partialorder %v3128, 0.0
      %vm3579 = vcmp.gt.f32.partialorder %v3306, 0.0
      %vm3580 = vcmp.gt.f32.partialorder %v3484, 0.0
      %vm3581 = vcmp.gt.f32.partialorder %v3130, 0.0
      %vm3582 = vcmp.gt.f32.partialorder %v3308, 0.0
      %vm3583 = vcmp.gt.f32.partialorder %v3486, 0.0
      %v3584 = vmul.f32 %v3053, 0.1
      %v3585 = vmul.f32 %v3231, 0.1
      %v3586 = vmul.f32 %v3409, 0.1
      %v3587 = vmul.f32 %v3055, 0.1
      %v3588 = vmul.f32 %v3233, 0.1
      %v3589 = vmul.f32 %v3411, 0.1
      %v3590 = vmul.f32 %v3058, 0.1
      %v3591 = vmul.f32 %v3236, 0.1
      %v3592 = vmul.f32 %v3414, 0.1
      %v3593 = vmul.f32 %v3060, 0.1
      %v3594 = vmul.f32 %v3238, 0.1
      %v3595 = vmul.f32 %v3416, 0.1
      %v3596 = vmul.f32 %v3063, 0.1
      %v3597 = vmul.f32 %v3241, 0.1
      %v3598 = vmul.f32 %v3419, 0.1
      %v3599 = vmul.f32 %v3065, 0.1
      %v3600 = vmul.f32 %v3243, 0.1
      %v3601 = vmul.f32 %v3421, 0.1
      %v3602 = vmul.f32 %v3068, 0.1
      %v3603 = vmul.f32 %v3246, 0.1
      %v3604 = vmul.f32 %v3424, 0.1
      %v3605 = vmul.f32 %v3070, 0.1
      %v3606 = vmul.f32 %v3248, 0.1
      %v3607 = vmul.f32 %v3426, 0.1
      %v3608 = vmul.f32 %v3073, 0.1
      %v3609 = vmul.f32 %v3251, 0.1
      %v3610 = vmul.f32 %v3429, 0.1
      %v3611 = vmul.f32 %v3075, 0.1
      %v3612 = vmul.f32 %v3253, 0.1
      %v3613 = vmul.f32 %v3431, 0.1
      %v3614 = vmul.f32 %v3078, 0.1
      %v3615 = vmul.f32 %v3256, 0.1
      %v3616 = vmul.f32 %v3434, 0.1
      %v3617 = vmul.f32 %v3080, 0.1
      %v3618 = vmul.f32 %v3258, 0.1
      %v3619 = vmul.f32 %v3436, 0.1
      %v3620 = vmul.f32 %v3083, 0.1
      %v3621 = vmul.f32 %v3261, 0.1
      %v3622 = vmul.f32 %v3439, 0.1
      %v3623 = vmul.f32 %v3085, 0.1
      %v3624 = vmul.f32 %v3263, 0.1
      %v3625 = vmul.f32 %v3441, 0.1
      %v3626 = vmul.f32 %v3088, 0.1
      %v3627 = vmul.f32 %v3266, 0.1
      %v3628 = vmul.f32 %v3444, 0.1
      %v3629 = vmul.f32 %v3090, 0.1
      %v3630 = vmul.f32 %v3268, 0.1
      %v3631 = vmul.f32 %v3446, 0.1
      %v3632 = vmul.f32 %v3093, 0.1
      %v3633 = vmul.f32 %v3271, 0.1
      %v3634 = vmul.f32 %v3449, 0.1
      %v3635 = vmul.f32 %v3095, 0.1
      %v3636 = vmul.f32 %v3273, 0.1
      %v3637 = vmul.f32 %v3451, 0.1
      %v3638 = vmul.f32 %v3098, 0.1
      %v3639 = vmul.f32 %v3276, 0.1
      %v3640 = vmul.f32 %v3454, 0.1
      %v3641 = vmul.f32 %v3100, 0.1
      %v3642 = vmul.f32 %v3278, 0.1
      %v3643 = vmul.f32 %v3456, 0.1
      %v3644 = vmul.f32 %v3103, 0.1
      %v3645 = vmul.f32 %v3281, 0.1
      %v3646 = vmul.f32 %v3459, 0.1
      %v3647 = vmul.f32 %v3105, 0.1
      %v3648 = vmul.f32 %v3283, 0.1
      %v3649 = vmul.f32 %v3461, 0.1
      %v3650 = vmul.f32 %v3108, 0.1
      %v3651 = vmul.f32 %v3286, 0.1
      %v3652 = vmul.f32 %v3464, 0.1
      %v3653 = vmul.f32 %v3110, 0.1
      %v3654 = vmul.f32 %v3288, 0.1
      %v3655 = vmul.f32 %v3466, 0.1
      %v3656 = vmul.f32 %v3113, 0.1
      %v3657 = vmul.f32 %v3291, 0.1
      %v3658 = vmul.f32 %v3469, 0.1
      %v3659 = vmul.f32 %v3115, 0.1
      %v3660 = vmul.f32 %v3293, 0.1
      %v3661 = vmul.f32 %v3471, 0.1
      %v3662 = vmul.f32 %v3118, 0.1
      %v3663 = vmul.f32 %v3296, 0.1
      %v3664 = vmul.f32 %v3474, 0.1
      %v3665 = vmul.f32 %v3120, 0.1
      %v3666 = vmul.f32 %v3298, 0.1
      %v3667 = vmul.f32 %v3476, 0.1
      %v3668 = vmul.f32 %v3123, 0.1
      %v3669 = vmul.f32 %v3301, 0.1
      %v3670 = vmul.f32 %v3479, 0.1
      %v3671 = vmul.f32 %v3125, 0.1
      %v3672 = vmul.f32 %v3303, 0.1
      %v3673 = vmul.f32 %v3481, 0.1
      %v3674 = vmul.f32 %v3128, 0.1
      %v3675 = vmul.f32 %v3306, 0.1
      %v3676 = vmul.f32 %v3484, 0.1
      %v3677 = vmul.f32 %v3130, 0.1
      %v3678 = vmul.f32 %v3308, 0.1
      %v3679 = vmul.f32 %v3486, 0.1
      %v3680 = vsel %vm3488, %v3053, %v3584
      %v3681 = vsel %vm3489, %v3231, %v3585
      %v3682 = vsel %vm3490, %v3409, %v3586
      %v3683 = vsel %vm3491, %v3055, %v3587
      %v3684 = vsel %vm3492, %v3233, %v3588
      %v3685 = vsel %vm3493, %v3411, %v3589
      %v3686 = vsel %vm3494, %v3058, %v3590
      %v3687 = vsel %vm3495, %v3236, %v3591
      %v3688 = vsel %vm3496, %v3414, %v3592
      %v3689 = vsel %vm3497, %v3060, %v3593
      %v3690 = vsel %vm3498, %v3238, %v3594
      %v3691 = vsel %vm3499, %v3416, %v3595
      %v3692 = vsel %vm3500, %v3063, %v3596
      %v3693 = vsel %vm3501, %v3241, %v3597
      %v3694 = vsel %vm3502, %v3419, %v3598
      %v3695 = vsel %vm3503, %v3065, %v3599
      %v3696 = vsel %vm3504, %v3243, %v3600
      %v3697 = vsel %vm3505, %v3421, %v3601
      %v3698 = vsel %vm3506, %v3068, %v3602
      %v3699 = vsel %vm3507, %v3246, %v3603
      %v3700 = vsel %vm3508, %v3424, %v3604
      %v3701 = vsel %vm3509, %v3070, %v3605
      %v3702 = vsel %vm3510, %v3248, %v3606
      %v3703 = vsel %vm3511, %v3426, %v3607
      %v3704 = vsel %vm3512, %v3073, %v3608
      %v3705 = vsel %vm3513, %v3251, %v3609
      %v3706 = vsel %vm3514, %v3429, %v3610
      %v3707 = vsel %vm3515, %v3075, %v3611
      %v3708 = vsel %vm3516, %v3253, %v3612
      %v3709 = vsel %vm3517, %v3431, %v3613
      %v3710 = vsel %vm3518, %v3078, %v3614
      %v3711 = vsel %vm3519, %v3256, %v3615
      %v3712 = vsel %vm3520, %v3434, %v3616
      %v3713 = vsel %vm3521, %v3080, %v3617
      %v3714 = vsel %vm3522, %v3258, %v3618
      %v3715 = vsel %vm3523, %v3436, %v3619
      %v3716 = vsel %vm3524, %v3083, %v3620
      %v3717 = vsel %vm3525, %v3261, %v3621
      %v3718 = vsel %vm3526, %v3439, %v3622
      %v3719 = vsel %vm3527, %v3085, %v3623
      %v3720 = vsel %vm3528, %v3263, %v3624
      %v3721 = vsel %vm3529, %v3441, %v3625
      %v3722 = vsel %vm3530, %v3088, %v3626
      %v3723 = vsel %vm3531, %v3266, %v3627
      %v3724 = vsel %vm3532, %v3444, %v3628
      %v3725 = vsel %vm3533, %v3090, %v3629
      %v3726 = vsel %vm3534, %v3268, %v3630
      %v3727 = vsel %vm3535, %v3446, %v3631
      %v3728 = vsel %vm3536, %v3093, %v3632
      %v3729 = vsel %vm3537, %v3271, %v3633
      %v3730 = vsel %vm3538, %v3449, %v3634
      %v3731 = vsel %vm3539, %v3095, %v3635
      %v3732 = vsel %vm3540, %v3273, %v3636
      %v3733 = vsel %vm3541, %v3451, %v3637
      %v3734 = vsel %vm3542, %v3098, %v3638
      %v3735 = vsel %vm3543, %v3276, %v3639
      %v3736 = vsel %vm3544, %v3454, %v3640
      %v3737 = vsel %vm3545, %v3100, %v3641
      %v3738 = vsel %vm3546, %v3278, %v3642
      %v3739 = vsel %vm3547, %v3456, %v3643
      %v3740 = vsel %vm3548, %v3103, %v3644
      %v3741 = vsel %vm3549, %v3281, %v3645
      %v3742 = vsel %vm3550, %v3459, %v3646
      %v3743 = vsel %vm3551, %v3105, %v3647
      %v3744 = vsel %vm3552, %v3283, %v3648
      %v3745 = vsel %vm3553, %v3461, %v3649
      %v3746 = vsel %vm3554, %v3108, %v3650
      %v3747 = vsel %vm3555, %v3286, %v3651
      %v3748 = vsel %vm3556, %v3464, %v3652
      %v3749 = vsel %vm3557, %v3110, %v3653
      %v3750 = vsel %vm3558, %v3288, %v3654
      %v3751 = vsel %vm3559, %v3466, %v3655
      %v3752 = vsel %vm3560, %v3113, %v3656
      %v3753 = vsel %vm3561, %v3291, %v3657
      %v3754 = vsel %vm3562, %v3469, %v3658
      %v3755 = vsel %vm3563, %v3115, %v3659
      %v3756 = vsel %vm3564, %v3293, %v3660
      %v3757 = vsel %vm3565, %v3471, %v3661
      %v3758 = vsel %vm3566, %v3118, %v3662
      %v3759 = vsel %vm3567, %v3296, %v3663
      %v3760 = vsel %vm3568, %v3474, %v3664
      %v3761 = vsel %vm3569, %v3120, %v3665
      %v3762 = vsel %vm3570, %v3298, %v3666
      %v3763 = vsel %vm3571, %v3476, %v3667
      %v3764 = vsel %vm3572, %v3123, %v3668
      %v3765 = vsel %vm3573, %v3301, %v3669
      %v3766 = vsel %vm3574, %v3479, %v3670
      %v3767 = vsel %vm3575, %v3125, %v3671
      %v3768 = vsel %vm3576, %v3303, %v3672
      %v3769 = vsel %vm3577, %v3481, %v3673
      %v3770 = vsel %vm3578, %v3128, %v3674
      %v3771 = vsel %vm3579, %v3306, %v3675
      %v3772 = vsel %vm3580, %v3484, %v3676
      %v3773 = vsel %vm3581, %v3130, %v3677
      %v3774 = vsel %vm3582, %v3308, %v3678
      %v3775 = vsel %vm3583, %v3486, %v3679
      %v3776 = vpack.c.bf16 %v3683, %v3680
      %v3777 = vpack.c.bf16 %v3684, %v3681
      %v3778 = vpack.c.bf16 %v3685, %v3682
      %v3779 = vpack.c.bf16 %v3689, %v3686
      %v3780 = vpack.c.bf16 %v3690, %v3687
      %v3781 = vpack.c.bf16 %v3691, %v3688
      %v3782 = vpack.c.bf16 %v3695, %v3692
      %v3783 = vpack.c.bf16 %v3696, %v3693
      %v3784 = vpack.c.bf16 %v3697, %v3694
      %v3785 = vpack.c.bf16 %v3701, %v3698
      %v3786 = vpack.c.bf16 %v3702, %v3699
      %v3787 = vpack.c.bf16 %v3703, %v3700
      %v3788 = vpack.c.bf16 %v3707, %v3704
      %v3789 = vpack.c.bf16 %v3708, %v3705
      %v3790 = vpack.c.bf16 %v3709, %v3706
      %v3791 = vpack.c.bf16 %v3713, %v3710
      %v3792 = vpack.c.bf16 %v3714, %v3711
      %v3793 = vpack.c.bf16 %v3715, %v3712
      %v3794 = vpack.c.bf16 %v3719, %v3716
      %v3795 = vpack.c.bf16 %v3720, %v3717
      %v3796 = vpack.c.bf16 %v3721, %v3718
      %v3797 = vpack.c.bf16 %v3725, %v3722
      %v3798 = vpack.c.bf16 %v3726, %v3723
      %v3799 = vpack.c.bf16 %v3727, %v3724
      %v3800 = vpack.c.bf16 %v3731, %v3728
      %v3801 = vpack.c.bf16 %v3732, %v3729
      %v3802 = vpack.c.bf16 %v3733, %v3730
      %v3803 = vpack.c.bf16 %v3737, %v3734
      %v3804 = vpack.c.bf16 %v3738, %v3735
      %v3805 = vpack.c.bf16 %v3739, %v3736
      %v3806 = vpack.c.bf16 %v3743, %v3740
      %v3807 = vpack.c.bf16 %v3744, %v3741
      %v3808 = vpack.c.bf16 %v3745, %v3742
      %v3809 = vpack.c.bf16 %v3749, %v3746
      %v3810 = vpack.c.bf16 %v3750, %v3747
      %v3811 = vpack.c.bf16 %v3751, %v3748
      %v3812 = vpack.c.bf16 %v3755, %v3752
      %v3813 = vpack.c.bf16 %v3756, %v3753
      %v3814 = vpack.c.bf16 %v3757, %v3754
      %v3815 = vpack.c.bf16 %v3761, %v3758
      %v3816 = vpack.c.bf16 %v3762, %v3759
      %v3817 = vpack.c.bf16 %v3763, %v3760
      %v3818 = vpack.c.bf16 %v3767, %v3764
      %v3819 = vpack.c.bf16 %v3768, %v3765
      %v3820 = vpack.c.bf16 %v3769, %v3766
      %v3821 = vpack.c.bf16 %v3773, %v3770
      %v3822 = vpack.c.bf16 %v3774, %v3771
      %v3823 = vpack.c.bf16 %v3775, %v3772
      %v3824 = vld [vmem:[%s13] sm:$0xf]
      %v3825 = vld [vmem:[%s13 + $0x4] sm:$0xf]
      %v3826 = vld [vmem:[%s13 + $0x8] sm:$0xf]
      %v3827 = vld [vmem:[%s13 + $0xc] sm:$0xf]
      %v3828 = vld [vmem:[%s13 + $0x10] sm:$0xf]
      %v3829 = vld [vmem:[%s13 + $0x14] sm:$0xf]
      %v3830 = vld [vmem:[%s13 + $0x18] sm:$0xf]
      %v3831 = vld [vmem:[%s13 + $0x1c] sm:$0xf]
      %v3832 = vld [vmem:[%s13 + $0x20] sm:$0xf]
      %v3833 = vld [vmem:[%s13 + $0x24] sm:$0xf]
      %v3834 = vld [vmem:[%s13 + $0x28] sm:$0xf]
      %v3835 = vld [vmem:[%s13 + $0x2c] sm:$0xf]
      %v3836 = vld [vmem:[%s13 + $0x30] sm:$0xf]
      %v3837 = vld [vmem:[%s13 + $0x34] sm:$0xf]
      %v3838 = vld [vmem:[%s13 + $0x38] sm:$0xf]
      %v3839 = vld [vmem:[%s13 + $0x3c] sm:$0xf]
      %v3840 = vld [vmem:[%s13 + $0x40] sm:$0xf]
      %v3841 = vld [vmem:[%s13 + $0x44] sm:$0xf]
      %v3842 = vld [vmem:[%s13 + $0x48] sm:$0xf]
      %v3843 = vld [vmem:[%s13 + $0x4c] sm:$0xf]
      %v3844 = vld [vmem:[%s13 + $0x50] sm:$0xf]
      %v3845 = vld [vmem:[%s13 + $0x54] sm:$0xf]
      %v3846 = vld [vmem:[%s13 + $0x58] sm:$0xf]
      %v3847 = vld [vmem:[%s13 + $0x5c] sm:$0xf]
      %v3848 = vld [vmem:[%s13 + $0x60] sm:$0xf]
      %v3849 = vld [vmem:[%s13 + $0x64] sm:$0xf]
      %v3850 = vld [vmem:[%s13 + $0x68] sm:$0xf]
      %v3851 = vld [vmem:[%s13 + $0x6c] sm:$0xf]
      %v3852 = vld [vmem:[%s13 + $0x70] sm:$0xf]
      %v3853 = vld [vmem:[%s13 + $0x74] sm:$0xf]
      %v3854 = vld [vmem:[%s13 + $0x78] sm:$0xf]
      %v3855 = vld [vmem:[%s13 + $0x7c] sm:$0xf]
      %v3856 = vld [vmem:[%s13 + $0x80] sm:$0xf]
      %v3857 = vld [vmem:[%s13 + $0x84] sm:$0xf]
      %v3858 = vld [vmem:[%s13 + $0x88] sm:$0xf]
      %v3859 = vld [vmem:[%s13 + $0x8c] sm:$0xf]
      %v3860 = vld [vmem:[%s13 + $0x90] sm:$0xf]
      %v3861 = vld [vmem:[%s13 + $0x94] sm:$0xf]
      %v3862 = vld [vmem:[%s13 + $0x98] sm:$0xf]
      %v3863 = vld [vmem:[%s13 + $0x9c] sm:$0xf]
      %v3864 = vld [vmem:[%s13 + $0xa0] sm:$0xf]
      %v3865 = vld [vmem:[%s13 + $0xa4] sm:$0xf]
      %v3866 = vld [vmem:[%s13 + $0xa8] sm:$0xf]
      %v3867 = vld [vmem:[%s13 + $0xac] sm:$0xf]
      %v3868 = vld [vmem:[%s13 + $0xb0] sm:$0xf]
      %v3869 = vld [vmem:[%s13 + $0xb4] sm:$0xf]
      %v3870 = vld [vmem:[%s13 + $0xb8] sm:$0xf]
      %v3871 = vld [vmem:[%s13 + $0xbc] sm:$0xf]
      %v3872 = vld [vmem:[%s14] sm:$0x1]
      %v3874 = vperm.slane %v3872, 0
      %v3924 = vunpack.c.l.b16 %v3824
      %v3925 = vunpack.c.l.b16 %v3825
      %v3926 = vunpack.c.l.b16 %v3826
      %v3927 = vunpack.c.l.b16 %v3827
      %v3928 = vunpack.c.l.b16 %v3828
      %v3929 = vunpack.c.l.b16 %v3829
      %v3930 = vunpack.c.l.b16 %v3830
      %v3931 = vunpack.c.l.b16 %v3831
      %v3932 = vunpack.c.l.b16 %v3832
      %v3933 = vunpack.c.l.b16 %v3833
      %v3934 = vunpack.c.l.b16 %v3834
      %v3935 = vunpack.c.l.b16 %v3835
      %v3936 = vunpack.c.l.b16 %v3836
      %v3937 = vunpack.c.l.b16 %v3837
      %v3938 = vunpack.c.l.b16 %v3838
      %v3939 = vunpack.c.l.b16 %v3839
      %v3940 = vunpack.c.l.b16 %v3840
      %v3941 = vunpack.c.l.b16 %v3841
      %v3942 = vunpack.c.l.b16 %v3842
      %v3943 = vunpack.c.l.b16 %v3843
      %v3944 = vunpack.c.l.b16 %v3844
      %v3945 = vunpack.c.l.b16 %v3845
      %v3946 = vunpack.c.l.b16 %v3846
      %v3947 = vunpack.c.l.b16 %v3847
      %v3948 = vunpack.c.l.b16 %v3848
      %v3949 = vunpack.c.l.b16 %v3849
      %v3950 = vunpack.c.l.b16 %v3850
      %v3951 = vunpack.c.l.b16 %v3851
      %v3952 = vunpack.c.l.b16 %v3852
      %v3953 = vunpack.c.l.b16 %v3853
      %v3954 = vunpack.c.l.b16 %v3854
      %v3955 = vunpack.c.l.b16 %v3855
      %v3956 = vunpack.c.l.b16 %v3856
      %v3957 = vunpack.c.l.b16 %v3857
      %v3958 = vunpack.c.l.b16 %v3858
      %v3959 = vunpack.c.l.b16 %v3859
      %v3960 = vunpack.c.l.b16 %v3860
      %v3961 = vunpack.c.l.b16 %v3861
      %v3962 = vunpack.c.l.b16 %v3862
      %v3963 = vunpack.c.l.b16 %v3863
      %v3964 = vunpack.c.l.b16 %v3864
      %v3965 = vunpack.c.l.b16 %v3865
      %v3966 = vunpack.c.l.b16 %v3866
      %v3967 = vunpack.c.l.b16 %v3867
      %v3968 = vunpack.c.l.b16 %v3868
      %v3969 = vunpack.c.l.b16 %v3869
      %v3970 = vunpack.c.l.b16 %v3870
      %v3971 = vunpack.c.l.b16 %v3871
      %v3972 = vpack.c.b16 %v3925, %v3924
      %v3973 = vpack.c.b16 %v3927, %v3926
      %v3974 = vpack.c.b16 %v3929, %v3928
      %v3975 = vpack.c.b16 %v3931, %v3930
      %v3976 = vpack.c.b16 %v3933, %v3932
      %v3977 = vpack.c.b16 %v3935, %v3934
      %v3978 = vpack.c.b16 %v3937, %v3936
      %v3979 = vpack.c.b16 %v3939, %v3938
      %v3980 = vpack.c.b16 %v3941, %v3940
      %v3981 = vpack.c.b16 %v3943, %v3942
      %v3982 = vpack.c.b16 %v3945, %v3944
      %v3983 = vpack.c.b16 %v3947, %v3946
      %v3984 = vpack.c.b16 %v3949, %v3948
      %v3985 = vpack.c.b16 %v3951, %v3950
      %v3986 = vpack.c.b16 %v3953, %v3952
      %v3987 = vpack.c.b16 %v3955, %v3954
      %v3988 = vpack.c.b16 %v3957, %v3956
      %v3989 = vpack.c.b16 %v3959, %v3958
      %v3990 = vpack.c.b16 %v3961, %v3960
      %v3991 = vpack.c.b16 %v3963, %v3962
      %v3992 = vpack.c.b16 %v3965, %v3964
      %v3993 = vpack.c.b16 %v3967, %v3966
      %v3994 = vpack.c.b16 %v3969, %v3968
      %v3995 = vpack.c.b16 %v3971, %v3970
      %4020 = vmatpush.bf16.msra.mxu0 %v3979
      %4021 = vmatpush.bf16.msra.mxu0 %v3978
      %4022 = vmatpush.bf16.msra.mxu0 %v3977
      %4023 = vmatpush.bf16.msra.mxu0 %v3976
      %4024 = vmatpush.bf16.msra.mxu0 %v3975
      %4025 = vmatpush.bf16.msra.mxu0 %v3974
      %4026 = vmatpush.bf16.msra.mxu0 %v3973
      %4027 = vmatpush.bf16.msra.mxu0 %v3972
      %4028 = vmatmul.bf16.gmra.mxu0 %v3776
      %v4029 = vpop.f32.mrf.mxu0
      %v4030 = vadd.f32 %v3874, %v4029
      %v4031 = vpop.f32.mrf.mxu0
      %v4032 = vadd.f32 %v3874, %v4031
      %4033 = vmatmul.bf16.gmra.mxu0 %v3779
      %v4034 = vpop.f32.mrf.mxu0
      %v4035 = vadd.f32 %v3874, %v4034
      %v4036 = vpop.f32.mrf.mxu0
      %v4037 = vadd.f32 %v3874, %v4036
      %4038 = vmatmul.bf16.gmra.mxu0 %v3782
      %v4039 = vpop.f32.mrf.mxu0
      %v4040 = vadd.f32 %v3874, %v4039
      %v4041 = vpop.f32.mrf.mxu0
      %v4042 = vadd.f32 %v3874, %v4041
      %4043 = vmatmul.bf16.gmra.mxu0 %v3785
      %v4044 = vpop.f32.mrf.mxu0
      %v4045 = vadd.f32 %v3874, %v4044
      %v4046 = vpop.f32.mrf.mxu0
      %v4047 = vadd.f32 %v3874, %v4046
      %4048 = vmatmul.bf16.gmra.mxu0 %v3788
      %v4049 = vpop.f32.mrf.mxu0
      %v4050 = vadd.f32 %v3874, %v4049
      %v4051 = vpop.f32.mrf.mxu0
      %v4052 = vadd.f32 %v3874, %v4051
      %4053 = vmatmul.bf16.gmra.mxu0 %v3791
      %v4054 = vpop.f32.mrf.mxu0
      %v4055 = vadd.f32 %v3874, %v4054
      %v4056 = vpop.f32.mrf.mxu0
      %v4057 = vadd.f32 %v3874, %v4056
      %4058 = vmatmul.bf16.gmra.mxu0 %v3794
      %v4059 = vpop.f32.mrf.mxu0
      %v4060 = vadd.f32 %v3874, %v4059
      %v4061 = vpop.f32.mrf.mxu0
      %v4062 = vadd.f32 %v3874, %v4061
      %4063 = vmatmul.bf16.gmra.mxu0 %v3797
      %v4064 = vpop.f32.mrf.mxu0
      %v4065 = vadd.f32 %v3874, %v4064
      %v4066 = vpop.f32.mrf.mxu0
      %v4067 = vadd.f32 %v3874, %v4066
      %4068 = vmatmul.bf16.gmra.mxu0 %v3800
      %v4069 = vpop.f32.mrf.mxu0
      %v4070 = vadd.f32 %v3874, %v4069
      %v4071 = vpop.f32.mrf.mxu0
      %v4072 = vadd.f32 %v3874, %v4071
      %4073 = vmatmul.bf16.gmra.mxu0 %v3803
      %v4074 = vpop.f32.mrf.mxu0
      %v4075 = vadd.f32 %v3874, %v4074
      %v4076 = vpop.f32.mrf.mxu0
      %v4077 = vadd.f32 %v3874, %v4076
      %4078 = vmatmul.bf16.gmra.mxu0 %v3806
      %v4079 = vpop.f32.mrf.mxu0
      %v4080 = vadd.f32 %v3874, %v4079
      %v4081 = vpop.f32.mrf.mxu0
      %v4082 = vadd.f32 %v3874, %v4081
      %4083 = vmatmul.bf16.gmra.mxu0 %v3809
      %v4084 = vpop.f32.mrf.mxu0
      %v4085 = vadd.f32 %v3874, %v4084
      %v4086 = vpop.f32.mrf.mxu0
      %v4087 = vadd.f32 %v3874, %v4086
      %4088 = vmatmul.bf16.gmra.mxu0 %v3812
      %v4089 = vpop.f32.mrf.mxu0
      %v4090 = vadd.f32 %v3874, %v4089
      %v4091 = vpop.f32.mrf.mxu0
      %v4092 = vadd.f32 %v3874, %v4091
      %4093 = vmatmul.bf16.gmra.mxu0 %v3815
      %v4094 = vpop.f32.mrf.mxu0
      %v4095 = vadd.f32 %v3874, %v4094
      %v4096 = vpop.f32.mrf.mxu0
      %v4097 = vadd.f32 %v3874, %v4096
      %4098 = vmatmul.bf16.gmra.mxu0 %v3818
      %v4099 = vpop.f32.mrf.mxu0
      %v4100 = vadd.f32 %v3874, %v4099
      %v4101 = vpop.f32.mrf.mxu0
      %v4102 = vadd.f32 %v3874, %v4101
      %4103 = vmatmul.bf16.gmra.mxu0 %v3821
      %v4104 = vpop.f32.mrf.mxu0
      %v4105 = vadd.f32 %v3874, %v4104
      %v4106 = vpop.f32.mrf.mxu0
      %v4107 = vadd.f32 %v3874, %v4106
      %4108 = vdwg.mxu0
      %4109 = vmatpush.bf16.msra.mxu0 %v3987
      %4110 = vmatpush.bf16.msra.mxu0 %v3986
      %4111 = vmatpush.bf16.msra.mxu0 %v3985
      %4112 = vmatpush.bf16.msra.mxu0 %v3984
      %4113 = vmatpush.bf16.msra.mxu0 %v3983
      %4114 = vmatpush.bf16.msra.mxu0 %v3982
      %4115 = vmatpush.bf16.msra.mxu0 %v3981
      %4116 = vmatpush.bf16.msra.mxu0 %v3980
      %4117 = vmatmul.bf16.gmra.mxu0 %v3777
      %v4118 = vpop.f32.mrf.mxu0
      %v4119 = vadd.f32 %v4030, %v4118
      %v4120 = vpop.f32.mrf.mxu0
      %v4121 = vadd.f32 %v4032, %v4120
      %4122 = vmatmul.bf16.gmra.mxu0 %v3780
      %v4123 = vpop.f32.mrf.mxu0
      %v4124 = vadd.f32 %v4035, %v4123
      %v4125 = vpop.f32.mrf.mxu0
      %v4126 = vadd.f32 %v4037, %v4125
      %4127 = vmatmul.bf16.gmra.mxu0 %v3783
      %v4128 = vpop.f32.mrf.mxu0
      %v4129 = vadd.f32 %v4040, %v4128
      %v4130 = vpop.f32.mrf.mxu0
      %v4131 = vadd.f32 %v4042, %v4130
      %4132 = vmatmul.bf16.gmra.mxu0 %v3786
      %v4133 = vpop.f32.mrf.mxu0
      %v4134 = vadd.f32 %v4045, %v4133
      %v4135 = vpop.f32.mrf.mxu0
      %v4136 = vadd.f32 %v4047, %v4135
      %4137 = vmatmul.bf16.gmra.mxu0 %v3789
      %v4138 = vpop.f32.mrf.mxu0
      %v4139 = vadd.f32 %v4050, %v4138
      %v4140 = vpop.f32.mrf.mxu0
      %v4141 = vadd.f32 %v4052, %v4140
      %4142 = vmatmul.bf16.gmra.mxu0 %v3792
      %v4143 = vpop.f32.mrf.mxu0
      %v4144 = vadd.f32 %v4055, %v4143
      %v4145 = vpop.f32.mrf.mxu0
      %v4146 = vadd.f32 %v4057, %v4145
      %4147 = vmatmul.bf16.gmra.mxu0 %v3795
      %v4148 = vpop.f32.mrf.mxu0
      %v4149 = vadd.f32 %v4060, %v4148
      %v4150 = vpop.f32.mrf.mxu0
      %v4151 = vadd.f32 %v4062, %v4150
      %4152 = vmatmul.bf16.gmra.mxu0 %v3798
      %v4153 = vpop.f32.mrf.mxu0
      %v4154 = vadd.f32 %v4065, %v4153
      %v4155 = vpop.f32.mrf.mxu0
      %v4156 = vadd.f32 %v4067, %v4155
      %4157 = vmatmul.bf16.gmra.mxu0 %v3801
      %v4158 = vpop.f32.mrf.mxu0
      %v4159 = vadd.f32 %v4070, %v4158
      %v4160 = vpop.f32.mrf.mxu0
      %v4161 = vadd.f32 %v4072, %v4160
      %4162 = vmatmul.bf16.gmra.mxu0 %v3804
      %v4163 = vpop.f32.mrf.mxu0
      %v4164 = vadd.f32 %v4075, %v4163
      %v4165 = vpop.f32.mrf.mxu0
      %v4166 = vadd.f32 %v4077, %v4165
      %4167 = vmatmul.bf16.gmra.mxu0 %v3807
      %v4168 = vpop.f32.mrf.mxu0
      %v4169 = vadd.f32 %v4080, %v4168
      %v4170 = vpop.f32.mrf.mxu0
      %v4171 = vadd.f32 %v4082, %v4170
      %4172 = vmatmul.bf16.gmra.mxu0 %v3810
      %v4173 = vpop.f32.mrf.mxu0
      %v4174 = vadd.f32 %v4085, %v4173
      %v4175 = vpop.f32.mrf.mxu0
      %v4176 = vadd.f32 %v4087, %v4175
      %4177 = vmatmul.bf16.gmra.mxu0 %v3813
      %v4178 = vpop.f32.mrf.mxu0
      %v4179 = vadd.f32 %v4090, %v4178
      %v4180 = vpop.f32.mrf.mxu0
      %v4181 = vadd.f32 %v4092, %v4180
      %4182 = vmatmul.bf16.gmra.mxu0 %v3816
      %v4183 = vpop.f32.mrf.mxu0
      %v4184 = vadd.f32 %v4095, %v4183
      %v4185 = vpop.f32.mrf.mxu0
      %v4186 = vadd.f32 %v4097, %v4185
      %4187 = vmatmul.bf16.gmra.mxu0 %v3819
      %v4188 = vpop.f32.mrf.mxu0
      %v4189 = vadd.f32 %v4100, %v4188
      %v4190 = vpop.f32.mrf.mxu0
      %v4191 = vadd.f32 %v4102, %v4190
      %4192 = vmatmul.bf16.gmra.mxu0 %v3822
      %v4193 = vpop.f32.mrf.mxu0
      %v4194 = vadd.f32 %v4105, %v4193
      %v4195 = vpop.f32.mrf.mxu0
      %v4196 = vadd.f32 %v4107, %v4195
      %4197 = vdwg.mxu0
      %4198 = vmatpush.bf16.msra.mxu0 %v3995
      %4199 = vmatpush.bf16.msra.mxu0 %v3994
      %4200 = vmatpush.bf16.msra.mxu0 %v3993
      %4201 = vmatpush.bf16.msra.mxu0 %v3992
      %4202 = vmatpush.bf16.msra.mxu0 %v3991
      %4203 = vmatpush.bf16.msra.mxu0 %v3990
      %4204 = vmatpush.bf16.msra.mxu0 %v3989
      %4205 = vmatpush.bf16.msra.mxu0 %v3988
      %4206 = vmatmul.bf16.gmra.mxu0 %v3778
      %v4207 = vpop.f32.mrf.mxu0
      %v4208 = vadd.f32 %v4119, %v4207
      %v4209 = vpop.f32.mrf.mxu0
      %v4210 = vadd.f32 %v4121, %v4209
      %4211 = vmatmul.bf16.gmra.mxu0 %v3781
      %v4212 = vpop.f32.mrf.mxu0
      %v4213 = vadd.f32 %v4124, %v4212
      %v4214 = vpop.f32.mrf.mxu0
      %v4215 = vadd.f32 %v4126, %v4214
      %4216 = vmatmul.bf16.gmra.mxu0 %v3784
      %v4217 = vpop.f32.mrf.mxu0
      %v4218 = vadd.f32 %v4129, %v4217
      %v4219 = vpop.f32.mrf.mxu0
      %v4220 = vadd.f32 %v4131, %v4219
      %4221 = vmatmul.bf16.gmra.mxu0 %v3787
      %v4222 = vpop.f32.mrf.mxu0
      %v4223 = vadd.f32 %v4134, %v4222
      %v4224 = vpop.f32.mrf.mxu0
      %v4225 = vadd.f32 %v4136, %v4224
      %4226 = vmatmul.bf16.gmra.mxu0 %v3790
      %v4227 = vpop.f32.mrf.mxu0
      %v4228 = vadd.f32 %v4139, %v4227
      %v4229 = vpop.f32.mrf.mxu0
      %v4230 = vadd.f32 %v4141, %v4229
      %4231 = vmatmul.bf16.gmra.mxu0 %v3793
      %v4232 = vpop.f32.mrf.mxu0
      %v4233 = vadd.f32 %v4144, %v4232
      %v4234 = vpop.f32.mrf.mxu0
      %v4235 = vadd.f32 %v4146, %v4234
      %4236 = vmatmul.bf16.gmra.mxu0 %v3796
      %v4237 = vpop.f32.mrf.mxu0
      %v4238 = vadd.f32 %v4149, %v4237
      %v4239 = vpop.f32.mrf.mxu0
      %v4240 = vadd.f32 %v4151, %v4239
      %4241 = vmatmul.bf16.gmra.mxu0 %v3799
      %v4242 = vpop.f32.mrf.mxu0
      %v4243 = vadd.f32 %v4154, %v4242
      %v4244 = vpop.f32.mrf.mxu0
      %v4245 = vadd.f32 %v4156, %v4244
      %4246 = vmatmul.bf16.gmra.mxu0 %v3802
      %v4247 = vpop.f32.mrf.mxu0
      %v4248 = vadd.f32 %v4159, %v4247
      %v4249 = vpop.f32.mrf.mxu0
      %v4250 = vadd.f32 %v4161, %v4249
      %4251 = vmatmul.bf16.gmra.mxu0 %v3805
      %v4252 = vpop.f32.mrf.mxu0
      %v4253 = vadd.f32 %v4164, %v4252
      %v4254 = vpop.f32.mrf.mxu0
      %v4255 = vadd.f32 %v4166, %v4254
      %4256 = vmatmul.bf16.gmra.mxu0 %v3808
      %v4257 = vpop.f32.mrf.mxu0
      %v4258 = vadd.f32 %v4169, %v4257
      %v4259 = vpop.f32.mrf.mxu0
      %v4260 = vadd.f32 %v4171, %v4259
      %4261 = vmatmul.bf16.gmra.mxu0 %v3811
      %v4262 = vpop.f32.mrf.mxu0
      %v4263 = vadd.f32 %v4174, %v4262
      %v4264 = vpop.f32.mrf.mxu0
      %v4265 = vadd.f32 %v4176, %v4264
      %4266 = vmatmul.bf16.gmra.mxu0 %v3814
      %v4267 = vpop.f32.mrf.mxu0
      %v4268 = vadd.f32 %v4179, %v4267
      %v4269 = vpop.f32.mrf.mxu0
      %v4270 = vadd.f32 %v4181, %v4269
      %4271 = vmatmul.bf16.gmra.mxu0 %v3817
      %v4272 = vpop.f32.mrf.mxu0
      %v4273 = vadd.f32 %v4184, %v4272
      %v4274 = vpop.f32.mrf.mxu0
      %v4275 = vadd.f32 %v4186, %v4274
      %4276 = vmatmul.bf16.gmra.mxu0 %v3820
      %v4277 = vpop.f32.mrf.mxu0
      %v4278 = vadd.f32 %v4189, %v4277
      %v4279 = vpop.f32.mrf.mxu0
      %v4280 = vadd.f32 %v4191, %v4279
      %4281 = vmatmul.bf16.gmra.mxu0 %v3823
      %v4282 = vpop.f32.mrf.mxu0
      %v4283 = vadd.f32 %v4194, %v4282
      %v4284 = vpop.f32.mrf.mxu0
      %v4285 = vadd.f32 %v4196, %v4284
      %4286 = vdwg.mxu0
      %v4287 = vlaneseq
      %v4288 = vand.u32 %v4287, 127
      %vm4289 = vcmp.ge.s32.totalorder %v4288, 8
      %vm4290 = vcmp.lt.s32.totalorder %v4288, 16
      %vm4291 = vmand %vm4289, %vm4290
      %vm4292 = vcmp.ge.s32.totalorder %v4288, 16
      %vm4293 = vcmp.lt.s32.totalorder %v4288, 24
      %vm4294 = vmand %vm4292, %vm4293
      %v4295 = vmax.f32 %v4208, -5.0
      %v4296 = vmax.f32 %v4210, -5.0
      %v4297 = vmax.f32 %v4213, -5.0
      %v4298 = vmax.f32 %v4215, -5.0
      %v4299 = vmax.f32 %v4218, -5.0
      %v4300 = vmax.f32 %v4220, -5.0
      %v4301 = vmax.f32 %v4223, -5.0
      %v4302 = vmax.f32 %v4225, -5.0
      %v4303 = vmax.f32 %v4228, -5.0
      %v4304 = vmax.f32 %v4230, -5.0
      %v4305 = vmax.f32 %v4233, -5.0
      %v4306 = vmax.f32 %v4235, -5.0
      %v4307 = vmax.f32 %v4238, -5.0
      %v4308 = vmax.f32 %v4240, -5.0
      %v4309 = vmax.f32 %v4243, -5.0
      %v4310 = vmax.f32 %v4245, -5.0
      %v4311 = vmax.f32 %v4248, -5.0
      %v4312 = vmax.f32 %v4250, -5.0
      %v4313 = vmax.f32 %v4253, -5.0
      %v4314 = vmax.f32 %v4255, -5.0
      %v4315 = vmax.f32 %v4258, -5.0
      %v4316 = vmax.f32 %v4260, -5.0
      %v4317 = vmax.f32 %v4263, -5.0
      %v4318 = vmax.f32 %v4265, -5.0
      %v4319 = vmax.f32 %v4268, -5.0
      %v4320 = vmax.f32 %v4270, -5.0
      %v4321 = vmax.f32 %v4273, -5.0
      %v4322 = vmax.f32 %v4275, -5.0
      %v4323 = vmax.f32 %v4278, -5.0
      %v4324 = vmax.f32 %v4280, -5.0
      %v4325 = vmax.f32 %v4283, -5.0
      %v4326 = vmax.f32 %v4285, -5.0
      %v4327 = vmin.f32 %v4295, 5.0
      %v4328 = vmin.f32 %v4296, 5.0
      %v4329 = vmin.f32 %v4297, 5.0
      %v4330 = vmin.f32 %v4298, 5.0
      %v4331 = vmin.f32 %v4299, 5.0
      %v4332 = vmin.f32 %v4300, 5.0
      %v4333 = vmin.f32 %v4301, 5.0
      %v4334 = vmin.f32 %v4302, 5.0
      %v4335 = vmin.f32 %v4303, 5.0
      %v4336 = vmin.f32 %v4304, 5.0
      %v4337 = vmin.f32 %v4305, 5.0
      %v4338 = vmin.f32 %v4306, 5.0
      %v4339 = vmin.f32 %v4307, 5.0
      %v4340 = vmin.f32 %v4308, 5.0
      %v4341 = vmin.f32 %v4309, 5.0
      %v4342 = vmin.f32 %v4310, 5.0
      %v4343 = vmin.f32 %v4311, 5.0
      %v4344 = vmin.f32 %v4312, 5.0
      %v4345 = vmin.f32 %v4313, 5.0
      %v4346 = vmin.f32 %v4314, 5.0
      %v4347 = vmin.f32 %v4315, 5.0
      %v4348 = vmin.f32 %v4316, 5.0
      %v4349 = vmin.f32 %v4317, 5.0
      %v4350 = vmin.f32 %v4318, 5.0
      %v4351 = vmin.f32 %v4319, 5.0
      %v4352 = vmin.f32 %v4320, 5.0
      %v4353 = vmin.f32 %v4321, 5.0
      %v4354 = vmin.f32 %v4322, 5.0
      %v4355 = vmin.f32 %v4323, 5.0
      %v4356 = vmin.f32 %v4324, 5.0
      %v4357 = vmin.f32 %v4325, 5.0
      %v4358 = vmin.f32 %v4326, 5.0
      %v4359 = vsel %vm4291, %v4327, %v4208
      %v4360 = vsel %vm4291, %v4328, %v4210
      %v4361 = vsel %vm4291, %v4329, %v4213
      %v4362 = vsel %vm4291, %v4330, %v4215
      %v4363 = vsel %vm4291, %v4331, %v4218
      %v4364 = vsel %vm4291, %v4332, %v4220
      %v4365 = vsel %vm4291, %v4333, %v4223
      %v4366 = vsel %vm4291, %v4334, %v4225
      %v4367 = vsel %vm4291, %v4335, %v4228
      %v4368 = vsel %vm4291, %v4336, %v4230
      %v4369 = vsel %vm4291, %v4337, %v4233
      %v4370 = vsel %vm4291, %v4338, %v4235
      %v4371 = vsel %vm4291, %v4339, %v4238
      %v4372 = vsel %vm4291, %v4340, %v4240
      %v4373 = vsel %vm4291, %v4341, %v4243
      %v4374 = vsel %vm4291, %v4342, %v4245
      %v4375 = vsel %vm4291, %v4343, %v4248
      %v4376 = vsel %vm4291, %v4344, %v4250
      %v4377 = vsel %vm4291, %v4345, %v4253
      %v4378 = vsel %vm4291, %v4346, %v4255
      %v4379 = vsel %vm4291, %v4347, %v4258
      %v4380 = vsel %vm4291, %v4348, %v4260
      %v4381 = vsel %vm4291, %v4349, %v4263
      %v4382 = vsel %vm4291, %v4350, %v4265
      %v4383 = vsel %vm4291, %v4351, %v4268
      %v4384 = vsel %vm4291, %v4352, %v4270
      %v4385 = vsel %vm4291, %v4353, %v4273
      %v4386 = vsel %vm4291, %v4354, %v4275
      %v4387 = vsel %vm4291, %v4355, %v4278
      %v4388 = vsel %vm4291, %v4356, %v4280
      %v4389 = vsel %vm4291, %v4357, %v4283
      %v4390 = vsel %vm4291, %v4358, %v4285
      %v4391 = vsel %vm4294, %v4359, -1e+30
      %v4392 = vsel %vm4294, %v4360, -1e+30
      %v4393 = vsel %vm4294, %v4361, -1e+30
      %v4394 = vsel %vm4294, %v4362, -1e+30
      %v4395 = vsel %vm4294, %v4363, -1e+30
      %v4396 = vsel %vm4294, %v4364, -1e+30
      %v4397 = vsel %vm4294, %v4365, -1e+30
      %v4398 = vsel %vm4294, %v4366, -1e+30
      %v4399 = vsel %vm4294, %v4367, -1e+30
      %v4400 = vsel %vm4294, %v4368, -1e+30
      %v4401 = vsel %vm4294, %v4369, -1e+30
      %v4402 = vsel %vm4294, %v4370, -1e+30
      %v4403 = vsel %vm4294, %v4371, -1e+30
      %v4404 = vsel %vm4294, %v4372, -1e+30
      %v4405 = vsel %vm4294, %v4373, -1e+30
      %v4406 = vsel %vm4294, %v4374, -1e+30
      %v4407 = vsel %vm4294, %v4375, -1e+30
      %v4408 = vsel %vm4294, %v4376, -1e+30
      %v4409 = vsel %vm4294, %v4377, -1e+30
      %v4410 = vsel %vm4294, %v4378, -1e+30
      %v4411 = vsel %vm4294, %v4379, -1e+30
      %v4412 = vsel %vm4294, %v4380, -1e+30
      %v4413 = vsel %vm4294, %v4381, -1e+30
      %v4414 = vsel %vm4294, %v4382, -1e+30
      %v4415 = vsel %vm4294, %v4383, -1e+30
      %v4416 = vsel %vm4294, %v4384, -1e+30
      %v4417 = vsel %vm4294, %v4385, -1e+30
      %v4418 = vsel %vm4294, %v4386, -1e+30
      %v4419 = vsel %vm4294, %v4387, -1e+30
      %v4420 = vsel %vm4294, %v4388, -1e+30
      %v4421 = vsel %vm4294, %v4389, -1e+30
      %v4422 = vsel %vm4294, %v4390, -1e+30
      %4423 = vmax.xlane.f32.xlu0 %v4391
      %v4424 = vpop.xlane.xlu0 %4423
      %4425 = vmax.xlane.f32.xlu0 %v4392
      %v4426 = vpop.xlane.xlu0 %4425
      %4427 = vmax.xlane.f32.xlu0 %v4393
      %v4428 = vpop.xlane.xlu0 %4427
      %4429 = vmax.xlane.f32.xlu0 %v4394
      %v4430 = vpop.xlane.xlu0 %4429
      %4431 = vmax.xlane.f32.xlu0 %v4395
      %v4432 = vpop.xlane.xlu0 %4431
      %4433 = vmax.xlane.f32.xlu0 %v4396
      %v4434 = vpop.xlane.xlu0 %4433
      %4435 = vmax.xlane.f32.xlu0 %v4397
      %v4436 = vpop.xlane.xlu0 %4435
      %4437 = vmax.xlane.f32.xlu0 %v4398
      %v4438 = vpop.xlane.xlu0 %4437
      %4439 = vmax.xlane.f32.xlu0 %v4399
      %v4440 = vpop.xlane.xlu0 %4439
      %4441 = vmax.xlane.f32.xlu0 %v4400
      %v4442 = vpop.xlane.xlu0 %4441
      %4443 = vmax.xlane.f32.xlu0 %v4401
      %v4444 = vpop.xlane.xlu0 %4443
      %4445 = vmax.xlane.f32.xlu0 %v4402
      %v4446 = vpop.xlane.xlu0 %4445
      %4447 = vmax.xlane.f32.xlu0 %v4403
      %v4448 = vpop.xlane.xlu0 %4447
      %4449 = vmax.xlane.f32.xlu0 %v4404
      %v4450 = vpop.xlane.xlu0 %4449
      %4451 = vmax.xlane.f32.xlu0 %v4405
      %v4452 = vpop.xlane.xlu0 %4451
      %4453 = vmax.xlane.f32.xlu0 %v4406
      %v4454 = vpop.xlane.xlu0 %4453
      %4455 = vmax.xlane.f32.xlu0 %v4407
      %v4456 = vpop.xlane.xlu0 %4455
      %4457 = vmax.xlane.f32.xlu0 %v4408
      %v4458 = vpop.xlane.xlu0 %4457
      %4459 = vmax.xlane.f32.xlu0 %v4409
      %v4460 = vpop.xlane.xlu0 %4459
      %4461 = vmax.xlane.f32.xlu0 %v4410
      %v4462 = vpop.xlane.xlu0 %4461
      %4463 = vmax.xlane.f32.xlu0 %v4411
      %v4464 = vpop.xlane.xlu0 %4463
      %4465 = vmax.xlane.f32.xlu0 %v4412
      %v4466 = vpop.xlane.xlu0 %4465
      %4467 = vmax.xlane.f32.xlu0 %v4413
      %v4468 = vpop.xlane.xlu0 %4467
      %4469 = vmax.xlane.f32.xlu0 %v4414
      %v4470 = vpop.xlane.xlu0 %4469
      %4471 = vmax.xlane.f32.xlu0 %v4415
      %v4472 = vpop.xlane.xlu0 %4471
      %4473 = vmax.xlane.f32.xlu0 %v4416
      %v4474 = vpop.xlane.xlu0 %4473
      %4475 = vmax.xlane.f32.xlu0 %v4417
      %v4476 = vpop.xlane.xlu0 %4475
      %4477 = vmax.xlane.f32.xlu0 %v4418
      %v4478 = vpop.xlane.xlu0 %4477
      %4479 = vmax.xlane.f32.xlu0 %v4419
      %v4480 = vpop.xlane.xlu0 %4479
      %4481 = vmax.xlane.f32.xlu0 %v4420
      %v4482 = vpop.xlane.xlu0 %4481
      %4483 = vmax.xlane.f32.xlu0 %v4421
      %v4484 = vpop.xlane.xlu0 %4483
      %4485 = vmax.xlane.f32.xlu0 %v4422
      %v4486 = vpop.xlane.xlu0 %4485
      %v4487 = vsub.f32 %v4391, %v4424
      %v4488 = vsub.f32 %v4392, %v4426
      %v4489 = vsub.f32 %v4393, %v4428
      %v4490 = vsub.f32 %v4394, %v4430
      %v4491 = vsub.f32 %v4395, %v4432
      %v4492 = vsub.f32 %v4396, %v4434
      %v4493 = vsub.f32 %v4397, %v4436
      %v4494 = vsub.f32 %v4398, %v4438
      %v4495 = vsub.f32 %v4399, %v4440
      %v4496 = vsub.f32 %v4400, %v4442
      %v4497 = vsub.f32 %v4401, %v4444
      %v4498 = vsub.f32 %v4402, %v4446
      %v4499 = vsub.f32 %v4403, %v4448
      %v4500 = vsub.f32 %v4404, %v4450
      %v4501 = vsub.f32 %v4405, %v4452
      %v4502 = vsub.f32 %v4406, %v4454
      %v4503 = vsub.f32 %v4407, %v4456
      %v4504 = vsub.f32 %v4408, %v4458
      %v4505 = vsub.f32 %v4409, %v4460
      %v4506 = vsub.f32 %v4410, %v4462
      %v4507 = vsub.f32 %v4411, %v4464
      %v4508 = vsub.f32 %v4412, %v4466
      %v4509 = vsub.f32 %v4413, %v4468
      %v4510 = vsub.f32 %v4414, %v4470
      %v4511 = vsub.f32 %v4415, %v4472
      %v4512 = vsub.f32 %v4416, %v4474
      %v4513 = vsub.f32 %v4417, %v4476
      %v4514 = vsub.f32 %v4418, %v4478
      %v4515 = vsub.f32 %v4419, %v4480
      %v4516 = vsub.f32 %v4420, %v4482
      %v4517 = vsub.f32 %v4421, %v4484
      %v4518 = vsub.f32 %v4422, %v4486
      %v4519 = vmul.f32 %v4487, 1.442695
      %v4520 = vpow.pop %v4519
      %v4521 = vmul.f32 %v4488, 1.442695
      %v4522 = vpow.pop %v4521
      %v4523 = vmul.f32 %v4489, 1.442695
      %v4524 = vpow.pop %v4523
      %v4525 = vmul.f32 %v4490, 1.442695
      %v4526 = vpow.pop %v4525
      %v4527 = vmul.f32 %v4491, 1.442695
      %v4528 = vpow.pop %v4527
      %v4529 = vmul.f32 %v4492, 1.442695
      %v4530 = vpow.pop %v4529
      %v4531 = vmul.f32 %v4493, 1.442695
      %v4532 = vpow.pop %v4531
      %v4533 = vmul.f32 %v4494, 1.442695
      %v4534 = vpow.pop %v4533
      %v4535 = vmul.f32 %v4495, 1.442695
      %v4536 = vpow.pop %v4535
      %v4537 = vmul.f32 %v4496, 1.442695
      %v4538 = vpow.pop %v4537
      %v4539 = vmul.f32 %v4497, 1.442695
      %v4540 = vpow.pop %v4539
      %v4541 = vmul.f32 %v4498, 1.442695
      %v4542 = vpow.pop %v4541
      %v4543 = vmul.f32 %v4499, 1.442695
      %v4544 = vpow.pop %v4543
      %v4545 = vmul.f32 %v4500, 1.442695
      %v4546 = vpow.pop %v4545
      %v4547 = vmul.f32 %v4501, 1.442695
      %v4548 = vpow.pop %v4547
      %v4549 = vmul.f32 %v4502, 1.442695
      %v4550 = vpow.pop %v4549
      %v4551 = vmul.f32 %v4503, 1.442695
      %v4552 = vpow.pop %v4551
      %v4553 = vmul.f32 %v4504, 1.442695
      %v4554 = vpow.pop %v4553
      %v4555 = vmul.f32 %v4505, 1.442695
      %v4556 = vpow.pop %v4555
      %v4557 = vmul.f32 %v4506, 1.442695
      %v4558 = vpow.pop %v4557
      %v4559 = vmul.f32 %v4507, 1.442695
      %v4560 = vpow.pop %v4559
      %v4561 = vmul.f32 %v4508, 1.442695
      %v4562 = vpow.pop %v4561
      %v4563 = vmul.f32 %v4509, 1.442695
      %v4564 = vpow.pop %v4563
      %v4565 = vmul.f32 %v4510, 1.442695
      %v4566 = vpow.pop %v4565
      %v4567 = vmul.f32 %v4511, 1.442695
      %v4568 = vpow.pop %v4567
      %v4569 = vmul.f32 %v4512, 1.442695
      %v4570 = vpow.pop %v4569
      %v4571 = vmul.f32 %v4513, 1.442695
      %v4572 = vpow.pop %v4571
      %v4573 = vmul.f32 %v4514, 1.442695
      %v4574 = vpow.pop %v4573
      %v4575 = vmul.f32 %v4515, 1.442695
      %v4576 = vpow.pop %v4575
      %v4577 = vmul.f32 %v4516, 1.442695
      %v4578 = vpow.pop %v4577
      %v4579 = vmul.f32 %v4517, 1.442695
      %v4580 = vpow.pop %v4579
      %v4581 = vmul.f32 %v4518, 1.442695
      %v4582 = vpow.pop %v4581
      %4583 = vadd.xlane.f32.xlu0 %v4520
      %v4584 = vpop.xlane.xlu0 %4583
      %4585 = vadd.xlane.f32.xlu0 %v4522
      %v4586 = vpop.xlane.xlu0 %4585
      %4587 = vadd.xlane.f32.xlu0 %v4524
      %v4588 = vpop.xlane.xlu0 %4587
      %4589 = vadd.xlane.f32.xlu0 %v4526
      %v4590 = vpop.xlane.xlu0 %4589
      %4591 = vadd.xlane.f32.xlu0 %v4528
      %v4592 = vpop.xlane.xlu0 %4591
      %4593 = vadd.xlane.f32.xlu0 %v4530
      %v4594 = vpop.xlane.xlu0 %4593
      %4595 = vadd.xlane.f32.xlu0 %v4532
      %v4596 = vpop.xlane.xlu0 %4595
      %4597 = vadd.xlane.f32.xlu0 %v4534
      %v4598 = vpop.xlane.xlu0 %4597
      %4599 = vadd.xlane.f32.xlu0 %v4536
      %v4600 = vpop.xlane.xlu0 %4599
      %4601 = vadd.xlane.f32.xlu0 %v4538
      %v4602 = vpop.xlane.xlu0 %4601
      %4603 = vadd.xlane.f32.xlu0 %v4540
      %v4604 = vpop.xlane.xlu0 %4603
      %4605 = vadd.xlane.f32.xlu0 %v4542
      %v4606 = vpop.xlane.xlu0 %4605
      %4607 = vadd.xlane.f32.xlu0 %v4544
      %v4608 = vpop.xlane.xlu0 %4607
      %4609 = vadd.xlane.f32.xlu0 %v4546
      %v4610 = vpop.xlane.xlu0 %4609
      %4611 = vadd.xlane.f32.xlu0 %v4548
      %v4612 = vpop.xlane.xlu0 %4611
      %4613 = vadd.xlane.f32.xlu0 %v4550
      %v4614 = vpop.xlane.xlu0 %4613
      %4615 = vadd.xlane.f32.xlu0 %v4552
      %v4616 = vpop.xlane.xlu0 %4615
      %4617 = vadd.xlane.f32.xlu0 %v4554
      %v4618 = vpop.xlane.xlu0 %4617
      %4619 = vadd.xlane.f32.xlu0 %v4556
      %v4620 = vpop.xlane.xlu0 %4619
      %4621 = vadd.xlane.f32.xlu0 %v4558
      %v4622 = vpop.xlane.xlu0 %4621
      %4623 = vadd.xlane.f32.xlu0 %v4560
      %v4624 = vpop.xlane.xlu0 %4623
      %4625 = vadd.xlane.f32.xlu0 %v4562
      %v4626 = vpop.xlane.xlu0 %4625
      %4627 = vadd.xlane.f32.xlu0 %v4564
      %v4628 = vpop.xlane.xlu0 %4627
      %4629 = vadd.xlane.f32.xlu0 %v4566
      %v4630 = vpop.xlane.xlu0 %4629
      %4631 = vadd.xlane.f32.xlu0 %v4568
      %v4632 = vpop.xlane.xlu0 %4631
      %4633 = vadd.xlane.f32.xlu0 %v4570
      %v4634 = vpop.xlane.xlu0 %4633
      %4635 = vadd.xlane.f32.xlu0 %v4572
      %v4636 = vpop.xlane.xlu0 %4635
      %4637 = vadd.xlane.f32.xlu0 %v4574
      %v4638 = vpop.xlane.xlu0 %4637
      %4639 = vadd.xlane.f32.xlu0 %v4576
      %v4640 = vpop.xlane.xlu0 %4639
      %4641 = vadd.xlane.f32.xlu0 %v4578
      %v4642 = vpop.xlane.xlu0 %4641
      %4643 = vadd.xlane.f32.xlu0 %v4580
      %v4644 = vpop.xlane.xlu0 %4643
      %4645 = vadd.xlane.f32.xlu0 %v4582
      %v4646 = vpop.xlane.xlu0 %4645
      %v4647 = vlog2.pop %v4584
      %v4648 = vmul.f32 %v4647, 0.6931472
      %v4649 = vlog2.pop %v4586
      %v4650 = vmul.f32 %v4649, 0.6931472
      %v4651 = vlog2.pop %v4588
      %v4652 = vmul.f32 %v4651, 0.6931472
      %v4653 = vlog2.pop %v4590
      %v4654 = vmul.f32 %v4653, 0.6931472
      %v4655 = vlog2.pop %v4592
      %v4656 = vmul.f32 %v4655, 0.6931472
      %v4657 = vlog2.pop %v4594
      %v4658 = vmul.f32 %v4657, 0.6931472
      %v4659 = vlog2.pop %v4596
      %v4660 = vmul.f32 %v4659, 0.6931472
      %v4661 = vlog2.pop %v4598
      %v4662 = vmul.f32 %v4661, 0.6931472
      %v4663 = vlog2.pop %v4600
      %v4664 = vmul.f32 %v4663, 0.6931472
      %v4665 = vlog2.pop %v4602
      %v4666 = vmul.f32 %v4665, 0.6931472
      %v4667 = vlog2.pop %v4604
      %v4668 = vmul.f32 %v4667, 0.6931472
      %v4669 = vlog2.pop %v4606
      %v4670 = vmul.f32 %v4669, 0.6931472
      %v4671 = vlog2.pop %v4608
      %v4672 = vmul.f32 %v4671, 0.6931472
      %v4673 = vlog2.pop %v4610
      %v4674 = vmul.f32 %v4673, 0.6931472
      %v4675 = vlog2.pop %v4612
      %v4676 = vmul.f32 %v4675, 0.6931472
      %v4677 = vlog2.pop %v4614
      %v4678 = vmul.f32 %v4677, 0.6931472
      %v4679 = vlog2.pop %v4616
      %v4680 = vmul.f32 %v4679, 0.6931472
      %v4681 = vlog2.pop %v4618
      %v4682 = vmul.f32 %v4681, 0.6931472
      %v4683 = vlog2.pop %v4620
      %v4684 = vmul.f32 %v4683, 0.6931472
      %v4685 = vlog2.pop %v4622
      %v4686 = vmul.f32 %v4685, 0.6931472
      %v4687 = vlog2.pop %v4624
      %v4688 = vmul.f32 %v4687, 0.6931472
      %v4689 = vlog2.pop %v4626
      %v4690 = vmul.f32 %v4689, 0.6931472
      %v4691 = vlog2.pop %v4628
      %v4692 = vmul.f32 %v4691, 0.6931472
      %v4693 = vlog2.pop %v4630
      %v4694 = vmul.f32 %v4693, 0.6931472
      %v4695 = vlog2.pop %v4632
      %v4696 = vmul.f32 %v4695, 0.6931472
      %v4697 = vlog2.pop %v4634
      %v4698 = vmul.f32 %v4697, 0.6931472
      %v4699 = vlog2.pop %v4636
      %v4700 = vmul.f32 %v4699, 0.6931472
      %v4701 = vlog2.pop %v4638
      %v4702 = vmul.f32 %v4701, 0.6931472
      %v4703 = vlog2.pop %v4640
      %v4704 = vmul.f32 %v4703, 0.6931472
      %v4705 = vlog2.pop %v4642
      %v4706 = vmul.f32 %v4705, 0.6931472
      %v4707 = vlog2.pop %v4644
      %v4708 = vmul.f32 %v4707, 0.6931472
      %v4709 = vlog2.pop %v4646
      %v4710 = vmul.f32 %v4709, 0.6931472
      %v4711 = vadd.f32 %v4424, %v4648
      %v4712 = vadd.f32 %v4426, %v4650
      %v4713 = vadd.f32 %v4428, %v4652
      %v4714 = vadd.f32 %v4430, %v4654
      %v4715 = vadd.f32 %v4432, %v4656
      %v4716 = vadd.f32 %v4434, %v4658
      %v4717 = vadd.f32 %v4436, %v4660
      %v4718 = vadd.f32 %v4438, %v4662
      %v4719 = vadd.f32 %v4440, %v4664
      %v4720 = vadd.f32 %v4442, %v4666
      %v4721 = vadd.f32 %v4444, %v4668
      %v4722 = vadd.f32 %v4446, %v4670
      %v4723 = vadd.f32 %v4448, %v4672
      %v4724 = vadd.f32 %v4450, %v4674
      %v4725 = vadd.f32 %v4452, %v4676
      %v4726 = vadd.f32 %v4454, %v4678
      %v4727 = vadd.f32 %v4456, %v4680
      %v4728 = vadd.f32 %v4458, %v4682
      %v4729 = vadd.f32 %v4460, %v4684
      %v4730 = vadd.f32 %v4462, %v4686
      %v4731 = vadd.f32 %v4464, %v4688
      %v4732 = vadd.f32 %v4466, %v4690
      %v4733 = vadd.f32 %v4468, %v4692
      %v4734 = vadd.f32 %v4470, %v4694
      %v4735 = vadd.f32 %v4472, %v4696
      %v4736 = vadd.f32 %v4474, %v4698
      %v4737 = vadd.f32 %v4476, %v4700
      %v4738 = vadd.f32 %v4478, %v4702
      %v4739 = vadd.f32 %v4480, %v4704
      %v4740 = vadd.f32 %v4482, %v4706
      %v4741 = vadd.f32 %v4484, %v4708
      %v4742 = vadd.f32 %v4486, %v4710
      %v4743 = vsub.f32 %v4359, %v4711
      %v4744 = vsub.f32 %v4360, %v4712
      %v4745 = vsub.f32 %v4361, %v4713
      %v4746 = vsub.f32 %v4362, %v4714
      %v4747 = vsub.f32 %v4363, %v4715
      %v4748 = vsub.f32 %v4364, %v4716
      %v4749 = vsub.f32 %v4365, %v4717
      %v4750 = vsub.f32 %v4366, %v4718
      %v4751 = vsub.f32 %v4367, %v4719
      %v4752 = vsub.f32 %v4368, %v4720
      %v4753 = vsub.f32 %v4369, %v4721
      %v4754 = vsub.f32 %v4370, %v4722
      %v4755 = vsub.f32 %v4371, %v4723
      %v4756 = vsub.f32 %v4372, %v4724
      %v4757 = vsub.f32 %v4373, %v4725
      %v4758 = vsub.f32 %v4374, %v4726
      %v4759 = vsub.f32 %v4375, %v4727
      %v4760 = vsub.f32 %v4376, %v4728
      %v4761 = vsub.f32 %v4377, %v4729
      %v4762 = vsub.f32 %v4378, %v4730
      %v4763 = vsub.f32 %v4379, %v4731
      %v4764 = vsub.f32 %v4380, %v4732
      %v4765 = vsub.f32 %v4381, %v4733
      %v4766 = vsub.f32 %v4382, %v4734
      %v4767 = vsub.f32 %v4383, %v4735
      %v4768 = vsub.f32 %v4384, %v4736
      %v4769 = vsub.f32 %v4385, %v4737
      %v4770 = vsub.f32 %v4386, %v4738
      %v4771 = vsub.f32 %v4387, %v4739
      %v4772 = vsub.f32 %v4388, %v4740
      %v4773 = vsub.f32 %v4389, %v4741
      %v4774 = vsub.f32 %v4390, %v4742
      %v4775 = vsel %vm4294, %v4743, %v4359
      %v4776 = vsel %vm4294, %v4744, %v4360
      %v4777 = vsel %vm4294, %v4745, %v4361
      %v4778 = vsel %vm4294, %v4746, %v4362
      %v4779 = vsel %vm4294, %v4747, %v4363
      %v4780 = vsel %vm4294, %v4748, %v4364
      %v4781 = vsel %vm4294, %v4749, %v4365
      %v4782 = vsel %vm4294, %v4750, %v4366
      %v4783 = vsel %vm4294, %v4751, %v4367
      %v4784 = vsel %vm4294, %v4752, %v4368
      %v4785 = vsel %vm4294, %v4753, %v4369
      %v4786 = vsel %vm4294, %v4754, %v4370
      %v4787 = vsel %vm4294, %v4755, %v4371
      %v4788 = vsel %vm4294, %v4756, %v4372
      %v4789 = vsel %vm4294, %v4757, %v4373
      %v4790 = vsel %vm4294, %v4758, %v4374
      %v4791 = vsel %vm4294, %v4759, %v4375
      %v4792 = vsel %vm4294, %v4760, %v4376
      %v4793 = vsel %vm4294, %v4761, %v4377
      %v4794 = vsel %vm4294, %v4762, %v4378
      %v4795 = vsel %vm4294, %v4763, %v4379
      %v4796 = vsel %vm4294, %v4764, %v4380
      %v4797 = vsel %vm4294, %v4765, %v4381
      %v4798 = vsel %vm4294, %v4766, %v4382
      %v4799 = vsel %vm4294, %v4767, %v4383
      %v4800 = vsel %vm4294, %v4768, %v4384
      %v4801 = vsel %vm4294, %v4769, %v4385
      %v4802 = vsel %vm4294, %v4770, %v4386
      %v4803 = vsel %vm4294, %v4771, %v4387
      %v4804 = vsel %vm4294, %v4772, %v4388
      %v4805 = vsel %vm4294, %v4773, %v4389
      %v4806 = vsel %vm4294, %v4774, %v4390
      %4807 = vst [vmem:[%s496] sm:$0xff] %v4775
      %4808 = vst [vmem:[%s496 + $0x8] sm:$0xff] %v4776
      %4809 = vst [vmem:[%s496 + $0x10] sm:$0xff] %v4777
      %4810 = vst [vmem:[%s496 + $0x18] sm:$0xff] %v4778
      %4811 = vst [vmem:[%s496 + $0x20] sm:$0xff] %v4779
      %4812 = vst [vmem:[%s496 + $0x28] sm:$0xff] %v4780
      %4813 = vst [vmem:[%s496 + $0x30] sm:$0xff] %v4781
      %4814 = vst [vmem:[%s496 + $0x38] sm:$0xff] %v4782
      %4815 = vst [vmem:[%s496 + $0x40] sm:$0xff] %v4783
      %4816 = vst [vmem:[%s496 + $0x48] sm:$0xff] %v4784
      %4817 = vst [vmem:[%s496 + $0x50] sm:$0xff] %v4785
      %4818 = vst [vmem:[%s496 + $0x58] sm:$0xff] %v4786
      %4819 = vst [vmem:[%s496 + $0x60] sm:$0xff] %v4787
      %4820 = vst [vmem:[%s496 + $0x68] sm:$0xff] %v4788
      %4821 = vst [vmem:[%s496 + $0x70] sm:$0xff] %v4789
      %4822 = vst [vmem:[%s496 + $0x78] sm:$0xff] %v4790
      %4823 = vst [vmem:[%s496 + $0x80] sm:$0xff] %v4791
      %4824 = vst [vmem:[%s496 + $0x88] sm:$0xff] %v4792
      %4825 = vst [vmem:[%s496 + $0x90] sm:$0xff] %v4793
      %4826 = vst [vmem:[%s496 + $0x98] sm:$0xff] %v4794
      %4827 = vst [vmem:[%s496 + $0xa0] sm:$0xff] %v4795
      %4828 = vst [vmem:[%s496 + $0xa8] sm:$0xff] %v4796
      %4829 = vst [vmem:[%s496 + $0xb0] sm:$0xff] %v4797
      %4830 = vst [vmem:[%s496 + $0xb8] sm:$0xff] %v4798
      %4831 = vst [vmem:[%s496 + $0xc0] sm:$0xff] %v4799
      %4832 = vst [vmem:[%s496 + $0xc8] sm:$0xff] %v4800
      %4833 = vst [vmem:[%s496 + $0xd0] sm:$0xff] %v4801
      %4834 = vst [vmem:[%s496 + $0xd8] sm:$0xff] %v4802
      %4835 = vst [vmem:[%s496 + $0xe0] sm:$0xff] %v4803
      %4836 = vst [vmem:[%s496 + $0xe8] sm:$0xff] %v4804
      %4837 = vst [vmem:[%s496 + $0xf0] sm:$0xff] %v4805
      %4838 = vst [vmem:[%s496 + $0xf8] sm:$0xff] %v4806
      %s4839 = smul.u32 32, %s26
      %p4840 = scmp.lt.s32.totalorder %s4839, 63
      %s4841 = scalar_select %p4840, %s4839, 63
      %s4842 = smul.addr %s4841, 8
      %s4843 = scalar_lea.vmem %s15, %s4842
      // Predicated region
      $region81: #{_lambda_.1} parent=79 // pred_check
        %p4844 = pneg %p364
      $region82: #{_lambda_.1} parent=79 // pred_check_branch
        %4846 = sbr.rel (%p4844) target = $region84
      $region83: #{_lambda_.1} parent=79 // pred_region
        %s4847 = smul.u32 32, %s26
      $region84: #{_lambda_.1} parent=79 // pred_fallthru
        _
    $region80: #{_lambda_.1} parent=5 // pred_fallthru
      _
    %p4848 = scmp.le.s32.totalorder 2, %s21
    // Predicated region
    $region85: #{_lambda_.1} parent=5 // pred_check
      %p4849 = pneg %p4848
    $region86: #{_lambda_.1} parent=5 // pred_check_branch
      %4851 = sbr.rel (%p4849) target = $region88
    $region87: #{_lambda_.1} parent=5 // pred_region
      %s4852 = ssub.s32 %s21, 2
      // Predicated region
      $region89: #{_lambda_.1} parent=87 // pred_check
        %p4853 = pneg %p370
      $region90: #{_lambda_.1} parent=87 // pred_check_branch
        %4855 = sbr.rel (%p4853) target = $region92
      $region91: #{_lambda_.1} parent=87 // pred_region
        %s4856 = smul.u32 32, %s27
        %p4857 = scmp.lt.s32.totalorder %s4856, 63
        %s4858 = scalar_select %p4857, %s4856, 63
        %s4859 = smul.addr %s4858, 8
        %s4860 = scalar_lea.vmem %s15, %s4859
      $region92: #{_lambda_.1} parent=87 // pred_fallthru
        _
    $region88: #{_lambda_.1} parent=5 // pred_fallthru
      _
  $region6: #{_lambda_.1} parent=0 // loop_footer
    %s25 = sadd.s32 1, %s21
  $region7: #{_lambda_.1} parent=0 // loop_footer_branch
    %20 = sbr.rel target = $region3
  $region8: #{_lambda_.1} parent=0 // loop_exit
    _

</llo_original>
